<compile_context>
chip_gen: v5e
topology: v5e:2x2
jax: 0.10.0
libtpu: 0.0.40
codegen_flags: <defaults>
</compile_context>

<pallas_src>
import jax
import jax.numpy as jnp
from jax import lax
from jax.experimental import pallas as pl
from jax.experimental.pallas import tpu as pltpu


# ------------------------------- fused kernel ------------------------------ #

def _ru_kernel(x_ref, w1_ref, w2_ref, s1_ref, b1_ref, s2_ref, b2_ref,
               o_ref, xp_ref):
    """One batch element per grid step (fully fused RU block).

    x_ref  : (H, W, C)      input tile (VMEM)
    w*_ref : (3, 3, C, C)   conv weights, HWIO
    s*_ref : (1, C)         folded scale  gamma / sqrt(var + eps)
    b*_ref : (1, C)         folded bias   beta + scale * (conv_bias - mean)
    o_ref  : (H, W, C)      output tile
    xp_ref : (H+2, W+2, C)  zero-padded VMEM scratch, reused by both convs
    """
    H, W, C = o_ref.shape

    def conv3x3(w_ref):
        # 9 tall per-tap matmuls over (H*W, Cin) shifted slabs of the padded tile.
        xpv = xp_ref[...]
        wv = w_ref[...].astype(jnp.float32)
        acc = jnp.zeros((H * W, C), jnp.float32)
        for ky in range(3):
            for kx in range(3):
                slab = xpv[ky:ky + H, kx:kx + W, :].reshape(H * W, C)
                acc = acc + jnp.dot(slab, wv[ky, kx],
                                    preferred_element_type=jnp.float32)
        return acc

    xv = x_ref[...].astype(jnp.float32)

    # Build the halo in VMEM: zero the scratch, copy the tile into the interior.
    xp_ref[...] = jnp.zeros_like(xp_ref)
    xp_ref[pl.ds(1, H), pl.ds(1, W), :] = xv

    # Stage 1: conv3x3 + folded(BN, conv-bias) + ReLU      (conv2DBatchNormRelu)
    y1 = conv3x3(w1_ref) * s1_ref[...] + b1_ref[...]
    y1 = jnp.maximum(y1, 0.0)

    # Intermediate stays in VMEM: overwrite scratch interior (border stays 0).
    xp_ref[pl.ds(1, H), pl.ds(1, W), :] = y1.reshape(H, W, C)

    # Stage 2: conv3x3 + folded(BN, conv-bias), then residual add (no ReLU).
    y2 = conv3x3(w2_ref) * s2_ref[...] + b2_ref[...]
    out = y2.reshape(H, W, C) + xv                      # RU: x + incoming
    o_ref[...] = out.astype(o_ref.dtype)


# ---------------------------------- wrapper --------------------------------- #

def _fold_bn(gamma, beta, mean, var, conv_bias, eps=1e-5):
    scale = gamma / jnp.sqrt(var + eps)
    bias = beta + scale * (conv_bias - mean)
    return scale, bias


def ru_forward(x_nchw, params):
    """RU.forward (stride=1, k=3, pad=1).  NCHW in / NCHW out."""
    N, C, H, W = x_nchw.shape
    x = jnp.transpose(x_nchw, (0, 2, 3, 1))             # NCHW -> NHWC (glue)

    s1, b1 = _fold_bn(params["bn1_gamma"], params["bn1_beta"],
                      params["bn1_mean"], params["bn1_var"], params["cb1"])
    s2, b2 = _fold_bn(params["bn2_gamma"], params["bn2_beta"],
                      params["bn2_mean"], params["bn2_var"], params["cb2"])
    s1 = s1.reshape(1, C).astype(jnp.float32)
    b1 = b1.reshape(1, C).astype(jnp.float32)
    s2 = s2.reshape(1, C).astype(jnp.float32)
    b2 = b2.reshape(1, C).astype(jnp.float32)

    flops = 2 * N * (2 * H * W * 9 * C * C)              # two 3x3 convs
    bytes_accessed = 4 * (2 * N * H * W * C + 2 * 9 * C * C + 4 * C)
    cost = pl.CostEstimate(flops=flops, transcendentals=0,
                           bytes_accessed=bytes_accessed)

    out = pl.pallas_call(
        _ru_kernel,
        out_shape=jax.ShapeDtypeStruct((N, H, W, C), x.dtype),
        grid=(N,),
        in_specs=[
            pl.BlockSpec((None, H, W, C), lambda n: (n, 0, 0, 0)),   # x
            pl.BlockSpec((3, 3, C, C), lambda n: (0, 0, 0, 0)),      # w1
            pl.BlockSpec((3, 3, C, C), lambda n: (0, 0, 0, 0)),      # w2
            pl.BlockSpec((1, C), lambda n: (0, 0)),                  # s1
            pl.BlockSpec((1, C), lambda n: (0, 0)),                  # b1
            pl.BlockSpec((1, C), lambda n: (0, 0)),                  # s2
            pl.BlockSpec((1, C), lambda n: (0, 0)),                  # b2
        ],
        out_specs=pl.BlockSpec((None, H, W, C), lambda n: (n, 0, 0, 0)),
        scratch_shapes=[pltpu.VMEM((H + 2, W + 2, C), jnp.float32)],
        compiler_params=pltpu.CompilerParams(dimension_semantics=("parallel",)),
        cost_estimate=cost,
    )(x, params["w1"], params["w2"], s1, b1, s2, b2)

    return jnp.transpose(out, (0, 3, 1, 2))              # NHWC -> NCHW


# ----------------------------- pure-JAX reference --------------------------- #

def _reference(x_nchw, params):
    eps = 1e-5
    x = jnp.transpose(x_nchw, (0, 2, 3, 1))
    dn = lax.conv_dimension_numbers(x.shape, params["w1"].shape,
                                    ("NHWC", "HWIO", "NHWC"))

    def conv(inp, w, b):
        return lax.conv_general_dilated(inp, w, (1, 1), ((1, 1), (1, 1)),
                                        dimension_numbers=dn) + b

    def bn(inp, g, be, m, v):
        return (inp - m) / jnp.sqrt(v + eps) * g + be

    h = conv(x, params["w1"], params["cb1"])
    h = jnp.maximum(bn(h, params["bn1_gamma"], params["bn1_beta"],
                       params["bn1_mean"], params["bn1_var"]), 0.0)
    h = conv(h, params["w2"], params["cb2"])
    h = bn(h, params["bn2_gamma"], params["bn2_beta"],
           params["bn2_mean"], params["bn2_var"])
    out = h + x                                           # no final ReLU
    return jnp.transpose(out, (0, 3, 1, 2))


# ---------------------------------- main ------------------------------------ #

if __name__ == "__main__":
    N, C, H, W = 2, 4, 16, 16          # channels=4, stride=1, kernel=3
    key = jax.random.PRNGKey(0)
    kx, k1, k2, kb1, kb2 = jax.random.split(key, 5)

    x = jax.random.normal(kx, (N, C, H, W), jnp.float32)   # NCHW like PyTorch

    c = jnp.arange(C, dtype=jnp.float32)
    params = {
        # conv weights (HWIO) and conv biases (bias=True in the PyTorch module)
        "w1": 0.1 * jax.random.normal(k1, (3, 3, C, C), jnp.float32),
        "w2": 0.1 * jax.random.normal(k2, (3, 3, C, C), jnp.float32),
        "cb1": 0.05 * jax.random.normal(kb1, (C,), jnp.float32),
        "cb2": 0.05 * jax.random.normal(kb2, (C,), jnp.float32),
        # BN1 (eval-mode running stats)
        "bn1_gamma": 1.0 + 0.10 * c, "bn1_beta": 0.05 * c,
        "bn1_mean": 0.01 * c,        "bn1_var": 1.0 + 0.02 * c,
        # BN2
        "bn2_gamma": 1.0 - 0.05 * c, "bn2_beta": -0.03 * c,
        "bn2_mean": -0.02 * c,       "bn2_var": 1.0 + 0.03 * c,
    }

    out = jax.block_until_ready(ru_forward(x, params))
    ref = jax.block_until_ready(_reference(x, params))

    assert out.shape == (N, C, H, W), out.shape
    err = float(jnp.max(jnp.abs(out - ref)))
    assert err < 1e-4, err
    print("KERNEL_OK")
</pallas_src>

<mosaic_0001>
module attributes {stable_mosaic.version = 11 : i64} {
  func.func @_ru_kernel(%arg0: i32, %arg1: memref<1x16x16x4xf32, #tpu.memory_space<vmem>>, %arg2: memref<3x3x4x4xf32, #tpu.memory_space<vmem>>, %arg3: memref<3x3x4x4xf32, #tpu.memory_space<vmem>>, %arg4: memref<1x4xf32, #tpu.memory_space<vmem>>, %arg5: memref<1x4xf32, #tpu.memory_space<vmem>>, %arg6: memref<1x4xf32, #tpu.memory_space<vmem>>, %arg7: memref<1x4xf32, #tpu.memory_space<vmem>>, %arg8: memref<1x16x16x4xf32, #tpu.memory_space<vmem>>, %arg9: memref<18x18x4xf32, #tpu.memory_space<vmem>>) attributes {dimension_semantics = [#tpu.dimension_semantics<parallel>], iteration_bounds = array<i64: 2>, scalar_prefetch = 0 : i64, scratch_operands = 1 : i64, tpu.core_type = #tpu.core_type<tc>, window_params = [{transform_indices = @transform_0, window_bounds = array<i64: 1, 16, 16, 4>}, {pipeline_mode = #tpu.pipeline_mode<synchronous>, transform_indices = @transform_1, window_bounds = array<i64: 3, 3, 4, 4>}, {pipeline_mode = #tpu.pipeline_mode<synchronous>, transform_indices = @transform_2, window_bounds = array<i64: 3, 3, 4, 4>}, {pipeline_mode = #tpu.pipeline_mode<synchronous>, transform_indices = @transform_3, window_bounds = array<i64: 1, 4>}, {pipeline_mode = #tpu.pipeline_mode<synchronous>, transform_indices = @transform_4, window_bounds = array<i64: 1, 4>}, {pipeline_mode = #tpu.pipeline_mode<synchronous>, transform_indices = @transform_5, window_bounds = array<i64: 1, 4>}, {pipeline_mode = #tpu.pipeline_mode<synchronous>, transform_indices = @transform_6, window_bounds = array<i64: 1, 4>}, {transform_indices = @transform_7, window_bounds = array<i64: 1, 16, 16, 4>}]} {
    %c0 = arith.constant 0 : index
    %c0_0 = arith.constant 0 : index
    %c0_1 = arith.constant 0 : index
    %c0_2 = arith.constant 0 : index
    %0 = vector.load %arg1[%c0, %c0_0, %c0_1, %c0_2] : memref<1x16x16x4xf32, #tpu.memory_space<vmem>>, vector<1x16x16x4xf32>
    %1 = vector.shape_cast %0 : vector<1x16x16x4xf32> to vector<16x16x4xf32>
    %cst = arith.constant 0.000000e+00 : f32
    %2 = vector.broadcast %cst : f32 to vector<18x18x4xf32>
    %c0_3 = arith.constant 0 : index
    %c0_4 = arith.constant 0 : index
    %c0_5 = arith.constant 0 : index
    %3 = vector.load %arg9[%c0_3, %c0_4, %c0_5] : memref<18x18x4xf32, #tpu.memory_space<vmem>>, vector<18x18x4xf32>
    tpu.vector_store %arg9[%c0_3, %c0_4, %c0_5], %2 {strides = array<i32>} : memref<18x18x4xf32, #tpu.memory_space<vmem>>, vector<18x18x4xf32>,
    %c1 = arith.constant 1 : index
    %c1_6 = arith.constant 1 : index
    %c0_7 = arith.constant 0 : index
    %4 = vector.load %arg9[%c1, %c1_6, %c0_7] : memref<18x18x4xf32, #tpu.memory_space<vmem>>, vector<16x16x4xf32>
    tpu.vector_store %arg9[%c1, %c1_6, %c0_7], %1 {strides = array<i32>} : memref<18x18x4xf32, #tpu.memory_space<vmem>>, vector<16x16x4xf32>,
    %c0_8 = arith.constant 0 : index
    %c0_9 = arith.constant 0 : index
    %c0_10 = arith.constant 0 : index
    %5 = vector.load %arg9[%c0_8, %c0_9, %c0_10] : memref<18x18x4xf32, #tpu.memory_space<vmem>>, vector<18x18x4xf32>
    %c0_11 = arith.constant 0 : index
    %c0_12 = arith.constant 0 : index
    %c0_13 = arith.constant 0 : index
    %c0_14 = arith.constant 0 : index
    %6 = vector.load %arg2[%c0_11, %c0_12, %c0_13, %c0_14] : memref<3x3x4x4xf32, #tpu.memory_space<vmem>>, vector<3x3x4x4xf32>
    %cst_15 = arith.constant 0.000000e+00 : f32
    %7 = vector.broadcast %cst_15 : f32 to vector<256x4xf32>
    %8 = vector.extract_strided_slice %5 {offsets = [0, 0, 0], sizes = [16, 16, 4], strides = [1, 1, 1]} : vector<18x18x4xf32> to vector<16x16x4xf32>
    %9 = vector.shape_cast %8 : vector<16x16x4xf32> to vector<256x4xf32>
    %10 = vector.extract_strided_slice %6 {offsets = [0, 0, 0, 0], sizes = [1, 1, 4, 4], strides = [1, 1, 1, 1]} : vector<3x3x4x4xf32> to vector<1x1x4x4xf32>
    %11 = vector.shape_cast %10 : vector<1x1x4x4xf32> to vector<4x4xf32>
    %cst_16 = arith.constant dense<0.000000e+00> : vector<256x4xf32>
    %12 = tpu.matmul %9, %11, %cst_16 {dimension_numbers = #tpu.dot_dimension_numbers<[1], [0], [0], [1], [0, 0, 1, 1], [], []>} : vector<256x4xf32>, vector<4x4xf32>, vector<256x4xf32> -> vector<256x4xf32>
    %13 = arith.addf %7, %12 : vector<256x4xf32>
    %14 = vector.extract_strided_slice %5 {offsets = [0, 1, 0], sizes = [16, 16, 4], strides = [1, 1, 1]} : vector<18x18x4xf32> to vector<16x16x4xf32>
    %15 = vector.shape_cast %14 : vector<16x16x4xf32> to vector<256x4xf32>
    %16 = vector.extract_strided_slice %6 {offsets = [0, 1, 0, 0], sizes = [1, 1, 4, 4], strides = [1, 1, 1, 1]} : vector<3x3x4x4xf32> to vector<1x1x4x4xf32>
    %17 = vector.shape_cast %16 : vector<1x1x4x4xf32> to vector<4x4xf32>
    %cst_17 = arith.constant dense<0.000000e+00> : vector<256x4xf32>
    %18 = tpu.matmul %15, %17, %cst_17 {dimension_numbers = #tpu.dot_dimension_numbers<[1], [0], [0], [1], [0, 0, 1, 1], [], []>} : vector<256x4xf32>, vector<4x4xf32>, vector<256x4xf32> -> vector<256x4xf32>
    %19 = arith.addf %13, %18 : vector<256x4xf32>
    %20 = vector.extract_strided_slice %5 {offsets = [0, 2, 0], sizes = [16, 16, 4], strides = [1, 1, 1]} : vector<18x18x4xf32> to vector<16x16x4xf32>
    %21 = vector.shape_cast %20 : vector<16x16x4xf32> to vector<256x4xf32>
    %22 = vector.extract_strided_slice %6 {offsets = [0, 2, 0, 0], sizes = [1, 1, 4, 4], strides = [1, 1, 1, 1]} : vector<3x3x4x4xf32> to vector<1x1x4x4xf32>
    %23 = vector.shape_cast %22 : vector<1x1x4x4xf32> to vector<4x4xf32>
    %cst_18 = arith.constant dense<0.000000e+00> : vector<256x4xf32>
    %24 = tpu.matmul %21, %23, %cst_18 {dimension_numbers = #tpu.dot_dimension_numbers<[1], [0], [0], [1], [0, 0, 1, 1], [], []>} : vector<256x4xf32>, vector<4x4xf32>, vector<256x4xf32> -> vector<256x4xf32>
    %25 = arith.addf %19, %24 : vector<256x4xf32>
    %26 = vector.extract_strided_slice %5 {offsets = [1, 0, 0], sizes = [16, 16, 4], strides = [1, 1, 1]} : vector<18x18x4xf32> to vector<16x16x4xf32>
    %27 = vector.shape_cast %26 : vector<16x16x4xf32> to vector<256x4xf32>
    %28 = vector.extract_strided_slice %6 {offsets = [1, 0, 0, 0], sizes = [1, 1, 4, 4], strides = [1, 1, 1, 1]} : vector<3x3x4x4xf32> to vector<1x1x4x4xf32>
    %29 = vector.shape_cast %28 : vector<1x1x4x4xf32> to vector<4x4xf32>
    %cst_19 = arith.constant dense<0.000000e+00> : vector<256x4xf32>
    %30 = tpu.matmul %27, %29, %cst_19 {dimension_numbers = #tpu.dot_dimension_numbers<[1], [0], [0], [1], [0, 0, 1, 1], [], []>} : vector<256x4xf32>, vector<4x4xf32>, vector<256x4xf32> -> vector<256x4xf32>
    %31 = arith.addf %25, %30 : vector<256x4xf32>
    %32 = vector.extract_strided_slice %5 {offsets = [1, 1, 0], sizes = [16, 16, 4], strides = [1, 1, 1]} : vector<18x18x4xf32> to vector<16x16x4xf32>
    %33 = vector.shape_cast %32 : vector<16x16x4xf32> to vector<256x4xf32>
    %34 = vector.extract_strided_slice %6 {offsets = [1, 1, 0, 0], sizes = [1, 1, 4, 4], strides = [1, 1, 1, 1]} : vector<3x3x4x4xf32> to vector<1x1x4x4xf32>
    %35 = vector.shape_cast %34 : vector<1x1x4x4xf32> to vector<4x4xf32>
    %cst_20 = arith.constant dense<0.000000e+00> : vector<256x4xf32>
    %36 = tpu.matmul %33, %35, %cst_20 {dimension_numbers = #tpu.dot_dimension_numbers<[1], [0], [0], [1], [0, 0, 1, 1], [], []>} : vector<256x4xf32>, vector<4x4xf32>, vector<256x4xf32> -> vector<256x4xf32>
    %37 = arith.addf %31, %36 : vector<256x4xf32>
    %38 = vector.extract_strided_slice %5 {offsets = [1, 2, 0], sizes = [16, 16, 4], strides = [1, 1, 1]} : vector<18x18x4xf32> to vector<16x16x4xf32>
    %39 = vector.shape_cast %38 : vector<16x16x4xf32> to vector<256x4xf32>
    %40 = vector.extract_strided_slice %6 {offsets = [1, 2, 0, 0], sizes = [1, 1, 4, 4], strides = [1, 1, 1, 1]} : vector<3x3x4x4xf32> to vector<1x1x4x4xf32>
    %41 = vector.shape_cast %40 : vector<1x1x4x4xf32> to vector<4x4xf32>
    %cst_21 = arith.constant dense<0.000000e+00> : vector<256x4xf32>
    %42 = tpu.matmul %39, %41, %cst_21 {dimension_numbers = #tpu.dot_dimension_numbers<[1], [0], [0], [1], [0, 0, 1, 1], [], []>} : vector<256x4xf32>, vector<4x4xf32>, vector<256x4xf32> -> vector<256x4xf32>
    %43 = arith.addf %37, %42 : vector<256x4xf32>
    %44 = vector.extract_strided_slice %5 {offsets = [2, 0, 0], sizes = [16, 16, 4], strides = [1, 1, 1]} : vector<18x18x4xf32> to vector<16x16x4xf32>
    %45 = vector.shape_cast %44 : vector<16x16x4xf32> to vector<256x4xf32>
    %46 = vector.extract_strided_slice %6 {offsets = [2, 0, 0, 0], sizes = [1, 1, 4, 4], strides = [1, 1, 1, 1]} : vector<3x3x4x4xf32> to vector<1x1x4x4xf32>
    %47 = vector.shape_cast %46 : vector<1x1x4x4xf32> to vector<4x4xf32>
    %cst_22 = arith.constant dense<0.000000e+00> : vector<256x4xf32>
    %48 = tpu.matmul %45, %47, %cst_22 {dimension_numbers = #tpu.dot_dimension_numbers<[1], [0], [0], [1], [0, 0, 1, 1], [], []>} : vector<256x4xf32>, vector<4x4xf32>, vector<256x4xf32> -> vector<256x4xf32>
    %49 = arith.addf %43, %48 : vector<256x4xf32>
    %50 = vector.extract_strided_slice %5 {offsets = [2, 1, 0], sizes = [16, 16, 4], strides = [1, 1, 1]} : vector<18x18x4xf32> to vector<16x16x4xf32>
    %51 = vector.shape_cast %50 : vector<16x16x4xf32> to vector<256x4xf32>
    %52 = vector.extract_strided_slice %6 {offsets = [2, 1, 0, 0], sizes = [1, 1, 4, 4], strides = [1, 1, 1, 1]} : vector<3x3x4x4xf32> to vector<1x1x4x4xf32>
    %53 = vector.shape_cast %52 : vector<1x1x4x4xf32> to vector<4x4xf32>
    %cst_23 = arith.constant dense<0.000000e+00> : vector<256x4xf32>
    %54 = tpu.matmul %51, %53, %cst_23 {dimension_numbers = #tpu.dot_dimension_numbers<[1], [0], [0], [1], [0, 0, 1, 1], [], []>} : vector<256x4xf32>, vector<4x4xf32>, vector<256x4xf32> -> vector<256x4xf32>
    %55 = arith.addf %49, %54 : vector<256x4xf32>
    %56 = vector.extract_strided_slice %5 {offsets = [2, 2, 0], sizes = [16, 16, 4], strides = [1, 1, 1]} : vector<18x18x4xf32> to vector<16x16x4xf32>
    %57 = vector.shape_cast %56 : vector<16x16x4xf32> to vector<256x4xf32>
    %58 = vector.extract_strided_slice %6 {offsets = [2, 2, 0, 0], sizes = [1, 1, 4, 4], strides = [1, 1, 1, 1]} : vector<3x3x4x4xf32> to vector<1x1x4x4xf32>
    %59 = vector.shape_cast %58 : vector<1x1x4x4xf32> to vector<4x4xf32>
    %cst_24 = arith.constant dense<0.000000e+00> : vector<256x4xf32>
    %60 = tpu.matmul %57, %59, %cst_24 {dimension_numbers = #tpu.dot_dimension_numbers<[1], [0], [0], [1], [0, 0, 1, 1], [], []>} : vector<256x4xf32>, vector<4x4xf32>, vector<256x4xf32> -> vector<256x4xf32>
    %61 = arith.addf %55, %60 : vector<256x4xf32>
    %c0_25 = arith.constant 0 : index
    %c0_26 = arith.constant 0 : index
    %62 = vector.load %arg4[%c0_25, %c0_26] : memref<1x4xf32, #tpu.memory_space<vmem>>, vector<1x4xf32>
    %63 = vector.broadcast %62 : vector<1x4xf32> to vector<256x4xf32>
    %64 = arith.mulf %61, %63 : vector<256x4xf32>
    %c0_27 = arith.constant 0 : index
    %c0_28 = arith.constant 0 : index
    %65 = vector.load %arg5[%c0_27, %c0_28] : memref<1x4xf32, #tpu.memory_space<vmem>>, vector<1x4xf32>
    %66 = vector.broadcast %65 : vector<1x4xf32> to vector<256x4xf32>
    %67 = arith.addf %64, %66 : vector<256x4xf32>
    %cst_29 = arith.constant 0.000000e+00 : f32
    %68 = vector.broadcast %cst_29 : f32 to vector<256x4xf32>
    %69 = arith.maximumf %67, %68 : vector<256x4xf32>
    %70 = vector.shape_cast %69 : vector<256x4xf32> to vector<16x16x4xf32>
    %c1_30 = arith.constant 1 : index
    %c1_31 = arith.constant 1 : index
    %c0_32 = arith.constant 0 : index
    %71 = vector.load %arg9[%c1_30, %c1_31, %c0_32] : memref<18x18x4xf32, #tpu.memory_space<vmem>>, vector<16x16x4xf32>
    tpu.vector_store %arg9[%c1_30, %c1_31, %c0_32], %70 {strides = array<i32>} : memref<18x18x4xf32, #tpu.memory_space<vmem>>, vector<16x16x4xf32>,
    %c0_33 = arith.constant 0 : index
    %c0_34 = arith.constant 0 : index
    %c0_35 = arith.constant 0 : index
    %72 = vector.load %arg9[%c0_33, %c0_34, %c0_35] : memref<18x18x4xf32, #tpu.memory_space<vmem>>, vector<18x18x4xf32>
    %c0_36 = arith.constant 0 : index
    %c0_37 = arith.constant 0 : index
    %c0_38 = arith.constant 0 : index
    %c0_39 = arith.constant 0 : index
    %73 = vector.load %arg3[%c0_36, %c0_37, %c0_38, %c0_39] : memref<3x3x4x4xf32, #tpu.memory_space<vmem>>, vector<3x3x4x4xf32>
    %cst_40 = arith.constant 0.000000e+00 : f32
    %74 = vector.broadcast %cst_40 : f32 to vector<256x4xf32>
    %75 = vector.extract_strided_slice %72 {offsets = [0, 0, 0], sizes = [16, 16, 4], strides = [1, 1, 1]} : vector<18x18x4xf32> to vector<16x16x4xf32>
    %76 = vector.shape_cast %75 : vector<16x16x4xf32> to vector<256x4xf32>
    %77 = vector.extract_strided_slice %73 {offsets = [0, 0, 0, 0], sizes = [1, 1, 4, 4], strides = [1, 1, 1, 1]} : vector<3x3x4x4xf32> to vector<1x1x4x4xf32>
    %78 = vector.shape_cast %77 : vector<1x1x4x4xf32> to vector<4x4xf32>
    %cst_41 = arith.constant dense<0.000000e+00> : vector<256x4xf32>
    %79 = tpu.matmul %76, %78, %cst_41 {dimension_numbers = #tpu.dot_dimension_numbers<[1], [0], [0], [1], [0, 0, 1, 1], [], []>} : vector<256x4xf32>, vector<4x4xf32>, vector<256x4xf32> -> vector<256x4xf32>
    %80 = arith.addf %74, %79 : vector<256x4xf32>
    %81 = vector.extract_strided_slice %72 {offsets = [0, 1, 0], sizes = [16, 16, 4], strides = [1, 1, 1]} : vector<18x18x4xf32> to vector<16x16x4xf32>
    %82 = vector.shape_cast %81 : vector<16x16x4xf32> to vector<256x4xf32>
    %83 = vector.extract_strided_slice %73 {offsets = [0, 1, 0, 0], sizes = [1, 1, 4, 4], strides = [1, 1, 1, 1]} : vector<3x3x4x4xf32> to vector<1x1x4x4xf32>
    %84 = vector.shape_cast %83 : vector<1x1x4x4xf32> to vector<4x4xf32>
    %cst_42 = arith.constant dense<0.000000e+00> : vector<256x4xf32>
    %85 = tpu.matmul %82, %84, %cst_42 {dimension_numbers = #tpu.dot_dimension_numbers<[1], [0], [0], [1], [0, 0, 1, 1], [], []>} : vector<256x4xf32>, vector<4x4xf32>, vector<256x4xf32> -> vector<256x4xf32>
    %86 = arith.addf %80, %85 : vector<256x4xf32>
    %87 = vector.extract_strided_slice %72 {offsets = [0, 2, 0], sizes = [16, 16, 4], strides = [1, 1, 1]} : vector<18x18x4xf32> to vector<16x16x4xf32>
    %88 = vector.shape_cast %87 : vector<16x16x4xf32> to vector<256x4xf32>
    %89 = vector.extract_strided_slice %73 {offsets = [0, 2, 0, 0], sizes = [1, 1, 4, 4], strides = [1, 1, 1, 1]} : vector<3x3x4x4xf32> to vector<1x1x4x4xf32>
    %90 = vector.shape_cast %89 : vector<1x1x4x4xf32> to vector<4x4xf32>
    %cst_43 = arith.constant dense<0.000000e+00> : vector<256x4xf32>
    %91 = tpu.matmul %88, %90, %cst_43 {dimension_numbers = #tpu.dot_dimension_numbers<[1], [0], [0], [1], [0, 0, 1, 1], [], []>} : vector<256x4xf32>, vector<4x4xf32>, vector<256x4xf32> -> vector<256x4xf32>
    %92 = arith.addf %86, %91 : vector<256x4xf32>
    %93 = vector.extract_strided_slice %72 {offsets = [1, 0, 0], sizes = [16, 16, 4], strides = [1, 1, 1]} : vector<18x18x4xf32> to vector<16x16x4xf32>
    %94 = vector.shape_cast %93 : vector<16x16x4xf32> to vector<256x4xf32>
    %95 = vector.extract_strided_slice %73 {offsets = [1, 0, 0, 0], sizes = [1, 1, 4, 4], strides = [1, 1, 1, 1]} : vector<3x3x4x4xf32> to vector<1x1x4x4xf32>
    %96 = vector.shape_cast %95 : vector<1x1x4x4xf32> to vector<4x4xf32>
    %cst_44 = arith.constant dense<0.000000e+00> : vector<256x4xf32>
    %97 = tpu.matmul %94, %96, %cst_44 {dimension_numbers = #tpu.dot_dimension_numbers<[1], [0], [0], [1], [0, 0, 1, 1], [], []>} : vector<256x4xf32>, vector<4x4xf32>, vector<256x4xf32> -> vector<256x4xf32>
    %98 = arith.addf %92, %97 : vector<256x4xf32>
    %99 = vector.extract_strided_slice %72 {offsets = [1, 1, 0], sizes = [16, 16, 4], strides = [1, 1, 1]} : vector<18x18x4xf32> to vector<16x16x4xf32>
    %100 = vector.shape_cast %99 : vector<16x16x4xf32> to vector<256x4xf32>
    %101 = vector.extract_strided_slice %73 {offsets = [1, 1, 0, 0], sizes = [1, 1, 4, 4], strides = [1, 1, 1, 1]} : vector<3x3x4x4xf32> to vector<1x1x4x4xf32>
    %102 = vector.shape_cast %101 : vector<1x1x4x4xf32> to vector<4x4xf32>
    %cst_45 = arith.constant dense<0.000000e+00> : vector<256x4xf32>
    %103 = tpu.matmul %100, %102, %cst_45 {dimension_numbers = #tpu.dot_dimension_numbers<[1], [0], [0], [1], [0, 0, 1, 1], [], []>} : vector<256x4xf32>, vector<4x4xf32>, vector<256x4xf32> -> vector<256x4xf32>
    %104 = arith.addf %98, %103 : vector<256x4xf32>
    %105 = vector.extract_strided_slice %72 {offsets = [1, 2, 0], sizes = [16, 16, 4], strides = [1, 1, 1]} : vector<18x18x4xf32> to vector<16x16x4xf32>
    %106 = vector.shape_cast %105 : vector<16x16x4xf32> to vector<256x4xf32>
    %107 = vector.extract_strided_slice %73 {offsets = [1, 2, 0, 0], sizes = [1, 1, 4, 4], strides = [1, 1, 1, 1]} : vector<3x3x4x4xf32> to vector<1x1x4x4xf32>
    %108 = vector.shape_cast %107 : vector<1x1x4x4xf32> to vector<4x4xf32>
    %cst_46 = arith.constant dense<0.000000e+00> : vector<256x4xf32>
    %109 = tpu.matmul %106, %108, %cst_46 {dimension_numbers = #tpu.dot_dimension_numbers<[1], [0], [0], [1], [0, 0, 1, 1], [], []>} : vector<256x4xf32>, vector<4x4xf32>, vector<256x4xf32> -> vector<256x4xf32>
    %110 = arith.addf %104, %109 : vector<256x4xf32>
    %111 = vector.extract_strided_slice %72 {offsets = [2, 0, 0], sizes = [16, 16, 4], strides = [1, 1, 1]} : vector<18x18x4xf32> to vector<16x16x4xf32>
    %112 = vector.shape_cast %111 : vector<16x16x4xf32> to vector<256x4xf32>
    %113 = vector.extract_strided_slice %73 {offsets = [2, 0, 0, 0], sizes = [1, 1, 4, 4], strides = [1, 1, 1, 1]} : vector<3x3x4x4xf32> to vector<1x1x4x4xf32>
    %114 = vector.shape_cast %113 : vector<1x1x4x4xf32> to vector<4x4xf32>
    %cst_47 = arith.constant dense<0.000000e+00> : vector<256x4xf32>
    %115 = tpu.matmul %112, %114, %cst_47 {dimension_numbers = #tpu.dot_dimension_numbers<[1], [0], [0], [1], [0, 0, 1, 1], [], []>} : vector<256x4xf32>, vector<4x4xf32>, vector<256x4xf32> -> vector<256x4xf32>
    %116 = arith.addf %110, %115 : vector<256x4xf32>
    %117 = vector.extract_strided_slice %72 {offsets = [2, 1, 0], sizes = [16, 16, 4], strides = [1, 1, 1]} : vector<18x18x4xf32> to vector<16x16x4xf32>
    %118 = vector.shape_cast %117 : vector<16x16x4xf32> to vector<256x4xf32>
    %119 = vector.extract_strided_slice %73 {offsets = [2, 1, 0, 0], sizes = [1, 1, 4, 4], strides = [1, 1, 1, 1]} : vector<3x3x4x4xf32> to vector<1x1x4x4xf32>
    %120 = vector.shape_cast %119 : vector<1x1x4x4xf32> to vector<4x4xf32>
    %cst_48 = arith.constant dense<0.000000e+00> : vector<256x4xf32>
    %121 = tpu.matmul %118, %120, %cst_48 {dimension_numbers = #tpu.dot_dimension_numbers<[1], [0], [0], [1], [0, 0, 1, 1], [], []>} : vector<256x4xf32>, vector<4x4xf32>, vector<256x4xf32> -> vector<256x4xf32>
    %122 = arith.addf %116, %121 : vector<256x4xf32>
    %123 = vector.extract_strided_slice %72 {offsets = [2, 2, 0], sizes = [16, 16, 4], strides = [1, 1, 1]} : vector<18x18x4xf32> to vector<16x16x4xf32>
    %124 = vector.shape_cast %123 : vector<16x16x4xf32> to vector<256x4xf32>
    %125 = vector.extract_strided_slice %73 {offsets = [2, 2, 0, 0], sizes = [1, 1, 4, 4], strides = [1, 1, 1, 1]} : vector<3x3x4x4xf32> to vector<1x1x4x4xf32>
    %126 = vector.shape_cast %125 : vector<1x1x4x4xf32> to vector<4x4xf32>
    %cst_49 = arith.constant dense<0.000000e+00> : vector<256x4xf32>
    %127 = tpu.matmul %124, %126, %cst_49 {dimension_numbers = #tpu.dot_dimension_numbers<[1], [0], [0], [1], [0, 0, 1, 1], [], []>} : vector<256x4xf32>, vector<4x4xf32>, vector<256x4xf32> -> vector<256x4xf32>
    %128 = arith.addf %122, %127 : vector<256x4xf32>
    %c0_50 = arith.constant 0 : index
    %c0_51 = arith.constant 0 : index
    %129 = vector.load %arg6[%c0_50, %c0_51] : memref<1x4xf32, #tpu.memory_space<vmem>>, vector<1x4xf32>
    %130 = vector.broadcast %129 : vector<1x4xf32> to vector<256x4xf32>
    %131 = arith.mulf %128, %130 : vector<256x4xf32>
    %c0_52 = arith.constant 0 : index
    %c0_53 = arith.constant 0 : index
    %132 = vector.load %arg7[%c0_52, %c0_53] : memref<1x4xf32, #tpu.memory_space<vmem>>, vector<1x4xf32>
    %133 = vector.broadcast %132 : vector<1x4xf32> to vector<256x4xf32>
    %134 = arith.addf %131, %133 : vector<256x4xf32>
    %135 = vector.shape_cast %134 : vector<256x4xf32> to vector<16x16x4xf32>
    %136 = arith.addf %135, %1 : vector<16x16x4xf32>
    %c0_54 = arith.constant 0 : index
    %c0_55 = arith.constant 0 : index
    %c0_56 = arith.constant 0 : index
    %c0_57 = arith.constant 0 : index
    %137 = vector.load %arg8[%c0_54, %c0_55, %c0_56, %c0_57] : memref<1x16x16x4xf32, #tpu.memory_space<vmem>>, vector<1x16x16x4xf32>
    %138 = vector.shape_cast %137 : vector<1x16x16x4xf32> to vector<16x16x4xf32>
    %139 = vector.shape_cast %136 : vector<16x16x4xf32> to vector<1x16x16x4xf32>
    tpu.vector_store %arg8[%c0_54, %c0_55, %c0_56, %c0_57], %139 {strides = array<i32>} : memref<1x16x16x4xf32, #tpu.memory_space<vmem>>, vector<1x16x16x4xf32>,
    return
  }
  func.func @transform_0(%arg0: i32) -> (i32, i32, i32, i32) {
    %c0_i32 = arith.constant 0 : i32
    %c0_i32_0 = arith.constant 0 : i32
    %c0_i32_1 = arith.constant 0 : i32
    %c0_i32_2 = arith.constant 0 : i32
    return %arg0, %c0_i32, %c0_i32_0, %c0_i32_1 : i32, i32, i32, i32
  }
  func.func @transform_1(%arg0: i32) -> (i32, i32, i32, i32) {
    %c0_i32 = arith.constant 0 : i32
    %c0_i32_0 = arith.constant 0 : i32
    %c0_i32_1 = arith.constant 0 : i32
    %c0_i32_2 = arith.constant 0 : i32
    %c0_i32_3 = arith.constant 0 : i32
    return %c0_i32, %c0_i32_0, %c0_i32_1, %c0_i32_2 : i32, i32, i32, i32
  }
  func.func @transform_2(%arg0: i32) -> (i32, i32, i32, i32) {
    %c0_i32 = arith.constant 0 : i32
    %c0_i32_0 = arith.constant 0 : i32
    %c0_i32_1 = arith.constant 0 : i32
    %c0_i32_2 = arith.constant 0 : i32
    %c0_i32_3 = arith.constant 0 : i32
    return %c0_i32, %c0_i32_0, %c0_i32_1, %c0_i32_2 : i32, i32, i32, i32
  }
  func.func @transform_3(%arg0: i32) -> (i32, i32) {
    %c0_i32 = arith.constant 0 : i32
    %c0_i32_0 = arith.constant 0 : i32
    %c0_i32_1 = arith.constant 0 : i32
    return %c0_i32, %c0_i32_0 : i32, i32
  }
  func.func @transform_4(%arg0: i32) -> (i32, i32) {
    %c0_i32 = arith.constant 0 : i32
    %c0_i32_0 = arith.constant 0 : i32
    %c0_i32_1 = arith.constant 0 : i32
    return %c0_i32, %c0_i32_0 : i32, i32
  }
  func.func @transform_5(%arg0: i32) -> (i32, i32) {
    %c0_i32 = arith.constant 0 : i32
    %c0_i32_0 = arith.constant 0 : i32
    %c0_i32_1 = arith.constant 0 : i32
    return %c0_i32, %c0_i32_0 : i32, i32
  }
  func.func @transform_6(%arg0: i32) -> (i32, i32) {
    %c0_i32 = arith.constant 0 : i32
    %c0_i32_0 = arith.constant 0 : i32
    %c0_i32_1 = arith.constant 0 : i32
    return %c0_i32, %c0_i32_0 : i32, i32
  }
  func.func @transform_7(%arg0: i32) -> (i32, i32, i32, i32) {
    %c0_i32 = arith.constant 0 : i32
    %c0_i32_0 = arith.constant 0 : i32
    %c0_i32_1 = arith.constant 0 : i32
    %c0_i32_2 = arith.constant 0 : i32
    return %arg0, %c0_i32, %c0_i32_0, %c0_i32_1 : i32, i32, i32, i32
  }
}

</mosaic_0001>

<llo_original>
// kernel: tpu_custom_call.1
$region0: #{tpu_custom_call.1}
  #allocation0 [shape = 'u32[]', space=smem, size = 0x4, offset = 0x4, fixed_abs, tag = 'smem constant byte address 0x4 - core index']
  #allocation1 [shape = 'u32[72,128]{1,0:T(1,128)}', space=vmem, size = 0x9000, scoped, tag = 'internal scratch']
  #allocation2 [shape = 'f32[18,18,4]{2,1,0:T(8,128)}', space=vmem, size = 0x36000, scoped, tag = 'scratch operand']
  %s0 = inlined_call_operand.vmem [shape: f32[2,16,16,4], index: 0, kind: input, shape index: {}]
  %s1 = inlined_call_operand.vmem [shape: f32[3,3,4,4], index: 1, kind: input, shape index: {}]
  %s2 = inlined_call_operand.vmem [shape: f32[3,3,4,4], index: 2, kind: input, shape index: {}]
  %s3 = inlined_call_operand.vmem [shape: f32[1,4], index: 3, kind: input, shape index: {}]
  %s4 = inlined_call_operand.vmem [shape: f32[1,4], index: 4, kind: input, shape index: {}]
  %s5 = inlined_call_operand.vmem [shape: f32[1,4], index: 5, kind: input, shape index: {}]
  %s6 = inlined_call_operand.vmem [shape: f32[1,4], index: 6, kind: input, shape index: {}]
  %s7 = inlined_call_operand.vmem [shape: f32[2,16,16,4], index: 7, kind: output, shape index: {}]
  %s8 = sld [smem:[#allocation0]]
  $region61: #{tpu_custom_call.1} parent=0
    _
  %s10 = ssub.s32 1, %s8
  %s11 = scalar_select 0, %s10, %s8
  loop: start=0, step=1, limit=4
  $region2: #{tpu_custom_call.1} parent=0 // loop_pre_header
    _
  $region3: #{tpu_custom_call.1} parent=0 // loop_header
    %s13 = sphi 0, %s17
    %p14 = scmp.ge.s32.totalorder %s13, 4
    %s23 = sphi 0, %s25
    %s26 = sphi 0, %s23
    %s27 = sphi 0, %s26
    %s43 = sphi 0, %s27
    %s47 = sphi 0, %s47
    %s49 = sphi 0, %s47
    %s50 = sphi 0, %s49
    %s64 = sphi 0, %s50
    %s68 = sphi 0, %s68
    %s70 = sphi 0, %s68
    %s71 = sphi 0, %s70
    %s85 = sphi 0, %s71
    %s89 = sphi 0, %s89
    %s91 = sphi 0, %s89
    %s92 = sphi 0, %s91
    %s106 = sphi 0, %s92
    %s110 = sphi 0, %s110
    %s112 = sphi 0, %s110
    %s113 = sphi 0, %s112
    %s127 = sphi 0, %s113
    %s131 = sphi 0, %s131
    %s133 = sphi 0, %s131
    %s134 = sphi 0, %s133
    %s148 = sphi 0, %s134
    %s152 = sphi 0, %s152
    %s154 = sphi 0, %s152
    %s155 = sphi 0, %s154
    %s169 = sphi 0, %s155
    %s175 = sphi 0, %s177
    %s178 = sphi 0, %s175
    %s179 = sphi 0, %s178
    %s195 = sphi 0, %s179
  $region4: #{tpu_custom_call.1} parent=0 // loop_header_branch
    %16 = sbr.rel (%p14) target = $region8
  $region5: #{tpu_custom_call.1} parent=0 // loop_body
    %s18 = ssub.s32 %s13, 1
    %s19 = ssub.s32 %s13, 2
    %s20 = sadd.s32 %s13, 1
    %s21 = ssub.s32 %s13, %s20
    %p22 = scmp.eq.s32.totalorder %s21, 0
    %s24 = sadd.s32 %s23, 1
    %s25 = scalar_select %p22, %s23, %s24
    %p28 = pneg %p22
    %p29 = scmp.eq.s32.totalorder %s13, 1
    %p30 = por %p28, %p29
    %p31 = scmp.ne.s32.totalorder %s23, %s26
    %p32 = scmp.eq.s32.totalorder %s13, 0
    %p33 = por %p31, %p32
    %p34 = scmp.ne.s32.totalorder %s23, %s26
    %p35 = scmp.eq.s32.totalorder %s18, 1
    %p36 = por %p34, %p35
    %p37 = scmp.ne.s32.totalorder %s26, %s27
    %p38 = scmp.eq.s32.totalorder %s18, 0
    %p39 = por %p37, %p38
    %p40 = scmp.ne.s32.totalorder %s26, %s27
    %p41 = scmp.eq.s32.totalorder %s19, 1
    %p42 = por %p40, %p41
    %p44 = scmp.ne.s32.totalorder %s27, %s43
    %p45 = scmp.eq.s32.totalorder %s19, 0
    %p46 = por %p44, %p45
    %s48 = sadd.s32 %s47, 1
    %p51 = scmp.eq.s32.totalorder %s13, 1
    %p52 = scmp.ne.s32.totalorder %s47, %s49
    %p53 = scmp.eq.s32.totalorder %s13, 0
    %p54 = por %p52, %p53
    %p55 = scmp.ne.s32.totalorder %s47, %s49
    %p56 = scmp.eq.s32.totalorder %s18, 1
    %p57 = por %p55, %p56
    %p58 = scmp.ne.s32.totalorder %s49, %s50
    %p59 = scmp.eq.s32.totalorder %s18, 0
    %p60 = por %p58, %p59
    %p61 = scmp.ne.s32.totalorder %s49, %s50
    %p62 = scmp.eq.s32.totalorder %s19, 1
    %p63 = por %p61, %p62
    %p65 = scmp.ne.s32.totalorder %s50, %s64
    %p66 = scmp.eq.s32.totalorder %s19, 0
    %p67 = por %p65, %p66
    %s69 = sadd.s32 %s68, 1
    %p72 = scmp.eq.s32.totalorder %s13, 1
    %p73 = scmp.ne.s32.totalorder %s68, %s70
    %p74 = scmp.eq.s32.totalorder %s13, 0
    %p75 = por %p73, %p74
    %p76 = scmp.ne.s32.totalorder %s68, %s70
    %p77 = scmp.eq.s32.totalorder %s18, 1
    %p78 = por %p76, %p77
    %p79 = scmp.ne.s32.totalorder %s70, %s71
    %p80 = scmp.eq.s32.totalorder %s18, 0
    %p81 = por %p79, %p80
    %p82 = scmp.ne.s32.totalorder %s70, %s71
    %p83 = scmp.eq.s32.totalorder %s19, 1
    %p84 = por %p82, %p83
    %p86 = scmp.ne.s32.totalorder %s71, %s85
    %p87 = scmp.eq.s32.totalorder %s19, 0
    %p88 = por %p86, %p87
    %s90 = sadd.s32 %s89, 1
    %p93 = scmp.eq.s32.totalorder %s13, 1
    %p94 = scmp.ne.s32.totalorder %s89, %s91
    %p95 = scmp.eq.s32.totalorder %s13, 0
    %p96 = por %p94, %p95
    %p97 = scmp.ne.s32.totalorder %s89, %s91
    %p98 = scmp.eq.s32.totalorder %s18, 1
    %p99 = por %p97, %p98
    %p100 = scmp.ne.s32.totalorder %s91, %s92
    %p101 = scmp.eq.s32.totalorder %s18, 0
    %p102 = por %p100, %p101
    %p103 = scmp.ne.s32.totalorder %s91, %s92
    %p104 = scmp.eq.s32.totalorder %s19, 1
    %p105 = por %p103, %p104
    %p107 = scmp.ne.s32.totalorder %s92, %s106
    %p108 = scmp.eq.s32.totalorder %s19, 0
    %p109 = por %p107, %p108
    %s111 = sadd.s32 %s110, 1
    %p114 = scmp.eq.s32.totalorder %s13, 1
    %p115 = scmp.ne.s32.totalorder %s110, %s112
    %p116 = scmp.eq.s32.totalorder %s13, 0
    %p117 = por %p115, %p116
    %p118 = scmp.ne.s32.totalorder %s110, %s112
    %p119 = scmp.eq.s32.totalorder %s18, 1
    %p120 = por %p118, %p119
    %p121 = scmp.ne.s32.totalorder %s112, %s113
    %p122 = scmp.eq.s32.totalorder %s18, 0
    %p123 = por %p121, %p122
    %p124 = scmp.ne.s32.totalorder %s112, %s113
    %p125 = scmp.eq.s32.totalorder %s19, 1
    %p126 = por %p124, %p125
    %p128 = scmp.ne.s32.totalorder %s113, %s127
    %p129 = scmp.eq.s32.totalorder %s19, 0
    %p130 = por %p128, %p129
    %s132 = sadd.s32 %s131, 1
    %p135 = scmp.eq.s32.totalorder %s13, 1
    %p136 = scmp.ne.s32.totalorder %s131, %s133
    %p137 = scmp.eq.s32.totalorder %s13, 0
    %p138 = por %p136, %p137
    %p139 = scmp.ne.s32.totalorder %s131, %s133
    %p140 = scmp.eq.s32.totalorder %s18, 1
    %p141 = por %p139, %p140
    %p142 = scmp.ne.s32.totalorder %s133, %s134
    %p143 = scmp.eq.s32.totalorder %s18, 0
    %p144 = por %p142, %p143
    %p145 = scmp.ne.s32.totalorder %s133, %s134
    %p146 = scmp.eq.s32.totalorder %s19, 1
    %p147 = por %p145, %p146
    %p149 = scmp.ne.s32.totalorder %s134, %s148
    %p150 = scmp.eq.s32.totalorder %s19, 0
    %p151 = por %p149, %p150
    %s153 = sadd.s32 %s152, 1
    %p156 = scmp.eq.s32.totalorder %s13, 1
    %p157 = scmp.ne.s32.totalorder %s152, %s154
    %p158 = scmp.eq.s32.totalorder %s13, 0
    %p159 = por %p157, %p158
    %p160 = scmp.ne.s32.totalorder %s152, %s154
    %p161 = scmp.eq.s32.totalorder %s18, 1
    %p162 = por %p160, %p161
    %p163 = scmp.ne.s32.totalorder %s154, %s155
    %p164 = scmp.eq.s32.totalorder %s18, 0
    %p165 = por %p163, %p164
    %p166 = scmp.ne.s32.totalorder %s154, %s155
    %p167 = scmp.eq.s32.totalorder %s19, 1
    %p168 = por %p166, %p167
    %p170 = scmp.ne.s32.totalorder %s155, %s169
    %p171 = scmp.eq.s32.totalorder %s19, 0
    %p172 = por %p170, %p171
    %s173 = ssub.s32 %s13, %s20
    %p174 = scmp.eq.s32.totalorder %s173, 0
    %s176 = sadd.s32 %s175, 1
    %s177 = scalar_select %p174, %s175, %s176
    %p180 = pneg %p174
    %p181 = scmp.eq.s32.totalorder %s13, 1
    %p182 = por %p180, %p181
    %p183 = scmp.ne.s32.totalorder %s175, %s178
    %p184 = scmp.eq.s32.totalorder %s13, 0
    %p185 = por %p183, %p184
    %p186 = scmp.ne.s32.totalorder %s175, %s178
    %p187 = scmp.eq.s32.totalorder %s18, 1
    %p188 = por %p186, %p187
    %p189 = scmp.ne.s32.totalorder %s178, %s179
    %p190 = scmp.eq.s32.totalorder %s18, 0
    %p191 = por %p189, %p190
    %p192 = scmp.ne.s32.totalorder %s178, %s179
    %p193 = scmp.eq.s32.totalorder %s19, 1
    %p194 = por %p192, %p193
    %p196 = scmp.ne.s32.totalorder %s179, %s195
    %p197 = scmp.eq.s32.totalorder %s19, 0
    %p198 = por %p196, %p197
    %p199 = scmp.le.s32.totalorder 1, %s13
    %p200 = scmp.lt.s32.totalorder %s13, 3
    %p201 = pnand %p199, %p200
    %p202 = pneg %p201
    // Predicated region
    $region9: #{tpu_custom_call.1} parent=5 // pred_check
      _
    $region10: #{tpu_custom_call.1} parent=5 // pred_check_branch
      %204 = sbr.rel (%p201) target = $region12
    $region11: #{tpu_custom_call.1} parent=5 // pred_region
      %s205 = ssub.s32 %s13, 1
      // Predicated region
      $region13: #{tpu_custom_call.1} parent=11 // pred_check
        %p206 = pneg %p60
      $region14: #{tpu_custom_call.1} parent=11 // pred_check_branch
        %208 = sbr.rel (%p206) target = $region16
      $region15: #{tpu_custom_call.1} parent=11 // pred_region
        _
      $region16: #{tpu_custom_call.1} parent=11 // pred_fallthru
        _
      // Predicated region
      $region17: #{tpu_custom_call.1} parent=11 // pred_check
        %p209 = pneg %p81
      $region18: #{tpu_custom_call.1} parent=11 // pred_check_branch
        %211 = sbr.rel (%p209) target = $region20
      $region19: #{tpu_custom_call.1} parent=11 // pred_region
        _
      $region20: #{tpu_custom_call.1} parent=11 // pred_fallthru
        _
      // Predicated region
      $region21: #{tpu_custom_call.1} parent=11 // pred_check
        %p212 = pneg %p102
      $region22: #{tpu_custom_call.1} parent=11 // pred_check_branch
        %214 = sbr.rel (%p212) target = $region24
      $region23: #{tpu_custom_call.1} parent=11 // pred_region
        _
      $region24: #{tpu_custom_call.1} parent=11 // pred_fallthru
        _
      // Predicated region
      $region25: #{tpu_custom_call.1} parent=11 // pred_check
        %p215 = pneg %p123
      $region26: #{tpu_custom_call.1} parent=11 // pred_check_branch
        %217 = sbr.rel (%p215) target = $region28
      $region27: #{tpu_custom_call.1} parent=11 // pred_region
        _
      $region28: #{tpu_custom_call.1} parent=11 // pred_fallthru
        _
      // Predicated region
      $region29: #{tpu_custom_call.1} parent=11 // pred_check
        %p218 = pneg %p144
      $region30: #{tpu_custom_call.1} parent=11 // pred_check_branch
        %220 = sbr.rel (%p218) target = $region32
      $region31: #{tpu_custom_call.1} parent=11 // pred_region
        _
      $region32: #{tpu_custom_call.1} parent=11 // pred_fallthru
        _
      // Predicated region
      $region33: #{tpu_custom_call.1} parent=11 // pred_check
        %p221 = pneg %p165
      $region34: #{tpu_custom_call.1} parent=11 // pred_check_branch
        %223 = sbr.rel (%p221) target = $region36
      $region35: #{tpu_custom_call.1} parent=11 // pred_region
        _
      $region36: #{tpu_custom_call.1} parent=11 // pred_fallthru
        _
    $region12: #{tpu_custom_call.1} parent=5 // pred_fallthru
      _
    %p224 = scmp.lt.s32.totalorder %s13, 2
    // Predicated region
    $region37: #{tpu_custom_call.1} parent=5 // pred_check
      %p225 = pneg %p224
    $region38: #{tpu_custom_call.1} parent=5 // pred_check_branch
      %227 = sbr.rel (%p225) target = $region40
    $region39: #{tpu_custom_call.1} parent=5 // pred_region
      // Predicated region
      $region41: #{tpu_custom_call.1} parent=39 // pred_check
        %p228 = pneg %p33
      $region42: #{tpu_custom_call.1} parent=39 // pred_check_branch
        %230 = sbr.rel (%p228) target = $region44
      $region43: #{tpu_custom_call.1} parent=39 // pred_region
        %p231 = scmp.lt.s32.totalorder %s13, 1
        %s232 = scalar_select %p231, %s13, 1
        %s233 = smul.addr %s232, 32
        %s234 = smul.addr %s233, 8
        %s235 = scalar_lea.vmem %s0, %s234
      $region44: #{tpu_custom_call.1} parent=39 // pred_fallthru
        _
    $region40: #{tpu_custom_call.1} parent=5 // pred_fallthru
      _
    %p236 = scmp.le.s32.totalorder 1, %s13
    %p237 = scmp.lt.s32.totalorder %s13, 3
    %p238 = pnand %p236, %p237
    %p239 = pneg %p238
    // Predicated region
    $region45: #{tpu_custom_call.1} parent=5 // pred_check
      _
    $region46: #{tpu_custom_call.1} parent=5 // pred_check_branch
      %241 = sbr.rel (%p238) target = $region48
    $region47: #{tpu_custom_call.1} parent=5 // pred_region
      %s242 = ssub.s32 %s13, 1
      %p243 = scmp.lt.s32.totalorder %s18, 1
      %s244 = scalar_select %p243, %s18, 1
      %s245 = smul.addr %s244, 32
      %s246 = smul.addr %s245, 8
      %s247 = scalar_lea.vmem %s0, %s246
      %p248 = pneg %p39
      %p249 = pneg %p36
      %p250 = pneg %p60
      %p251 = pneg %p57
      %p252 = pneg %p81
      %p253 = pneg %p78
      %p254 = pneg %p102
      %p255 = pneg %p99
      %p256 = pneg %p123
      %p257 = pneg %p120
      %p258 = pneg %p144
      %p259 = pneg %p141
      %p260 = pneg %p165
      %p261 = pneg %p162
      %p262 = pneg %p191
      %p263 = pneg %p188
      %p264 = scmp.lt.s32.totalorder %s18, 1
      %s265 = scalar_select %p264, %s18, 1
      %s266 = smul.addr %s265, 32
      %s267 = smul.addr %s266, 8
      %s268 = scalar_lea.vmem %s7, %s267
      %p269 = scmp.lt.s32.totalorder %s18, 1
      %s270 = scalar_select %p269, %s18, 1
      %s271 = smul.addr %s270, 32
      %s272 = smul.addr %s271, 8
      %s273 = scalar_lea.vmem %s0, %s272
      %p274 = scmp.lt.s32.totalorder %s18, 1
      %s275 = scalar_select %p274, %s18, 1
      %s276 = smul.addr %s275, 32
      %s277 = smul.addr %s276, 8
      %s278 = scalar_lea.vmem %s7, %s277
      %v279 = vld [vmem:[%s273] sm:$0xff]
      %v280 = vld [vmem:[%s273 + $0x8] sm:$0xff]
      %v281 = vld [vmem:[%s273 + $0x10] sm:$0xff]
      %v282 = vld [vmem:[%s273 + $0x18] sm:$0xff]
      %v283 = vld [vmem:[%s273 + $0x20] sm:$0xff]
      %v284 = vld [vmem:[%s273 + $0x28] sm:$0xff]
      %v285 = vld [vmem:[%s273 + $0x30] sm:$0xff]
      %v286 = vld [vmem:[%s273 + $0x38] sm:$0xff]
      %v287 = vld [vmem:[%s273 + $0x40] sm:$0xff]
      %v288 = vld [vmem:[%s273 + $0x48] sm:$0xff]
      %v289 = vld [vmem:[%s273 + $0x50] sm:$0xff]
      %v290 = vld [vmem:[%s273 + $0x58] sm:$0xff]
      %v291 = vld [vmem:[%s273 + $0x60] sm:$0xff]
      %v292 = vld [vmem:[%s273 + $0x68] sm:$0xff]
      %v293 = vld [vmem:[%s273 + $0x70] sm:$0xff]
      %v294 = vld [vmem:[%s273 + $0x78] sm:$0xff]
      %v295 = vld [vmem:[%s273 + $0x80] sm:$0xff]
      %v296 = vld [vmem:[%s273 + $0x88] sm:$0xff]
      %v297 = vld [vmem:[%s273 + $0x90] sm:$0xff]
      %v298 = vld [vmem:[%s273 + $0x98] sm:$0xff]
      %v299 = vld [vmem:[%s273 + $0xa0] sm:$0xff]
      %v300 = vld [vmem:[%s273 + $0xa8] sm:$0xff]
      %v301 = vld [vmem:[%s273 + $0xb0] sm:$0xff]
      %v302 = vld [vmem:[%s273 + $0xb8] sm:$0xff]
      %v303 = vld [vmem:[%s273 + $0xc0] sm:$0xff]
      %v304 = vld [vmem:[%s273 + $0xc8] sm:$0xff]
      %v305 = vld [vmem:[%s273 + $0xd0] sm:$0xff]
      %v306 = vld [vmem:[%s273 + $0xd8] sm:$0xff]
      %v307 = vld [vmem:[%s273 + $0xe0] sm:$0xff]
      %v308 = vld [vmem:[%s273 + $0xe8] sm:$0xff]
      %v309 = vld [vmem:[%s273 + $0xf0] sm:$0xff]
      %v310 = vld [vmem:[%s273 + $0xf8] sm:$0xff]
      %vm311 = vcmask 31744
      %312 = vst.msk [vmem:[#allocation2] sm:$0xff] %vm311, 0.0
      %313 = vst.msk [vmem:[#allocation2 + $0x8] sm:$0xff] %vm311, 0.0
      %vm314 = vcmask 25600
      %315 = vst.msk [vmem:[#allocation2 + $0x10] sm:$0x3] %vm314, 0.0
      %316 = vst.msk [vmem:[#allocation2 + $0x18] sm:$0xff] %vm311, 0.0
      %317 = vst.msk [vmem:[#allocation2 + $0x20] sm:$0xff] %vm311, 0.0
      %318 = vst.msk [vmem:[#allocation2 + $0x28] sm:$0x3] %vm314, 0.0
      %319 = vst.msk [vmem:[#allocation2 + $0x30] sm:$0xff] %vm311, 0.0
      %320 = vst.msk [vmem:[#allocation2 + $0x38] sm:$0xff] %vm311, 0.0
      %321 = vst.msk [vmem:[#allocation2 + $0x40] sm:$0x3] %vm314, 0.0
      %322 = vst.msk [vmem:[#allocation2 + $0x48] sm:$0xff] %vm311, 0.0
      %323 = vst.msk [vmem:[#allocation2 + $0x50] sm:$0xff] %vm311, 0.0
      %324 = vst.msk [vmem:[#allocation2 + $0x58] sm:$0x3] %vm314, 0.0
      %325 = vst.msk [vmem:[#allocation2 + $0x60] sm:$0xff] %vm311, 0.0
      %326 = vst.msk [vmem:[#allocation2 + $0x68] sm:$0xff] %vm311, 0.0
      %327 = vst.msk [vmem:[#allocation2 + $0x70] sm:$0x3] %vm314, 0.0
      %328 = vst.msk [vmem:[#allocation2 + $0x78] sm:$0xff] %vm311, 0.0
      %329 = vst.msk [vmem:[#allocation2 + $0x80] sm:$0xff] %vm311, 0.0
      %330 = vst.msk [vmem:[#allocation2 + $0x88] sm:$0x3] %vm314, 0.0
      %331 = vst.msk [vmem:[#allocation2 + $0x90] sm:$0xff] %vm311, 0.0
      %332 = vst.msk [vmem:[#allocation2 + $0x98] sm:$0xff] %vm311, 0.0
      %333 = vst.msk [vmem:[#allocation2 + $0xa0] sm:$0x3] %vm314, 0.0
      %334 = vst.msk [vmem:[#allocation2 + $0xa8] sm:$0xff] %vm311, 0.0
      %335 = vst.msk [vmem:[#allocation2 + $0xb0] sm:$0xff] %vm311, 0.0
      %336 = vst.msk [vmem:[#allocation2 + $0xb8] sm:$0x3] %vm314, 0.0
      %337 = vst.msk [vmem:[#allocation2 + $0xc0] sm:$0xff] %vm311, 0.0
      %338 = vst.msk [vmem:[#allocation2 + $0xc8] sm:$0xff] %vm311, 0.0
      %339 = vst.msk [vmem:[#allocation2 + $0xd0] sm:$0x3] %vm314, 0.0
      %340 = vst.msk [vmem:[#allocation2 + $0xd8] sm:$0xff] %vm311, 0.0
      %341 = vst.msk [vmem:[#allocation2 + $0xe0] sm:$0xff] %vm311, 0.0
      %342 = vst.msk [vmem:[#allocation2 + $0xe8] sm:$0x3] %vm314, 0.0
      %343 = vst.msk [vmem:[#allocation2 + $0xf0] sm:$0xff] %vm311, 0.0
      %344 = vst.msk [vmem:[#allocation2 + $0xf8] sm:$0xff] %vm311, 0.0
      %345 = vst.msk [vmem:[#allocation2 + $0x100] sm:$0x3] %vm314, 0.0
      %346 = vst.msk [vmem:[#allocation2 + $0x108] sm:$0xff] %vm311, 0.0
      %347 = vst.msk [vmem:[#allocation2 + $0x110] sm:$0xff] %vm311, 0.0
      %348 = vst.msk [vmem:[#allocation2 + $0x118] sm:$0x3] %vm314, 0.0
      %349 = vst.msk [vmem:[#allocation2 + $0x120] sm:$0xff] %vm311, 0.0
      %350 = vst.msk [vmem:[#allocation2 + $0x128] sm:$0xff] %vm311, 0.0
      %351 = vst.msk [vmem:[#allocation2 + $0x130] sm:$0x3] %vm314, 0.0
      %352 = vst.msk [vmem:[#allocation2 + $0x138] sm:$0xff] %vm311, 0.0
      %353 = vst.msk [vmem:[#allocation2 + $0x140] sm:$0xff] %vm311, 0.0
      %354 = vst.msk [vmem:[#allocation2 + $0x148] sm:$0x3] %vm314, 0.0
      %355 = vst.msk [vmem:[#allocation2 + $0x150] sm:$0xff] %vm311, 0.0
      %356 = vst.msk [vmem:[#allocation2 + $0x158] sm:$0xff] %vm311, 0.0
      %357 = vst.msk [vmem:[#allocation2 + $0x160] sm:$0x3] %vm314, 0.0
      %358 = vst.msk [vmem:[#allocation2 + $0x168] sm:$0xff] %vm311, 0.0
      %359 = vst.msk [vmem:[#allocation2 + $0x170] sm:$0xff] %vm311, 0.0
      %360 = vst.msk [vmem:[#allocation2 + $0x178] sm:$0x3] %vm314, 0.0
      %361 = vst.msk [vmem:[#allocation2 + $0x180] sm:$0xff] %vm311, 0.0
      %362 = vst.msk [vmem:[#allocation2 + $0x188] sm:$0xff] %vm311, 0.0
      %363 = vst.msk [vmem:[#allocation2 + $0x190] sm:$0x3] %vm314, 0.0
      %364 = vst.msk [vmem:[#allocation2 + $0x198] sm:$0xff] %vm311, 0.0
      %365 = vst.msk [vmem:[#allocation2 + $0x1a0] sm:$0xff] %vm311, 0.0
      %366 = vst.msk [vmem:[#allocation2 + $0x1a8] sm:$0x3] %vm314, 0.0
      %s367 = scalar_lea.vmem [#allocation2], 24
      %368 = vst.msk [vmem:[%s367 + $0x1] sm:$0xff] %vm311, %v279
      %369 = vst.msk [vmem:[%s367 + $0x9] sm:$0xff] %vm311, %v280
      %370 = vst.msk [vmem:[%s367 + $0x19] sm:$0xff] %vm311, %v281
      %371 = vst.msk [vmem:[%s367 + $0x21] sm:$0xff] %vm311, %v282
      %372 = vst.msk [vmem:[%s367 + $0x31] sm:$0xff] %vm311, %v283
      %373 = vst.msk [vmem:[%s367 + $0x39] sm:$0xff] %vm311, %v284
      %374 = vst.msk [vmem:[%s367 + $0x49] sm:$0xff] %vm311, %v285
      %375 = vst.msk [vmem:[%s367 + $0x51] sm:$0xff] %vm311, %v286
      %376 = vst.msk [vmem:[%s367 + $0x61] sm:$0xff] %vm311, %v287
      %377 = vst.msk [vmem:[%s367 + $0x69] sm:$0xff] %vm311, %v288
      %378 = vst.msk [vmem:[%s367 + $0x79] sm:$0xff] %vm311, %v289
      %379 = vst.msk [vmem:[%s367 + $0x81] sm:$0xff] %vm311, %v290
      %380 = vst.msk [vmem:[%s367 + $0x91] sm:$0xff] %vm311, %v291
      %381 = vst.msk [vmem:[%s367 + $0x99] sm:$0xff] %vm311, %v292
      %382 = vst.msk [vmem:[%s367 + $0xa9] sm:$0xff] %vm311, %v293
      %383 = vst.msk [vmem:[%s367 + $0xb1] sm:$0xff] %vm311, %v294
      %384 = vst.msk [vmem:[%s367 + $0xc1] sm:$0xff] %vm311, %v295
      %385 = vst.msk [vmem:[%s367 + $0xc9] sm:$0xff] %vm311, %v296
      %386 = vst.msk [vmem:[%s367 + $0xd9] sm:$0xff] %vm311, %v297
      %387 = vst.msk [vmem:[%s367 + $0xe1] sm:$0xff] %vm311, %v298
      %388 = vst.msk [vmem:[%s367 + $0xf1] sm:$0xff] %vm311, %v299
      %389 = vst.msk [vmem:[%s367 + $0xf9] sm:$0xff] %vm311, %v300
      %390 = vst.msk [vmem:[%s367 + $0x109] sm:$0xff] %vm311, %v301
      %391 = vst.msk [vmem:[%s367 + $0x111] sm:$0xff] %vm311, %v302
      %392 = vst.msk [vmem:[%s367 + $0x121] sm:$0xff] %vm311, %v303
      %393 = vst.msk [vmem:[%s367 + $0x129] sm:$0xff] %vm311, %v304
      %394 = vst.msk [vmem:[%s367 + $0x139] sm:$0xff] %vm311, %v305
      %395 = vst.msk [vmem:[%s367 + $0x141] sm:$0xff] %vm311, %v306
      %396 = vst.msk [vmem:[%s367 + $0x151] sm:$0xff] %vm311, %v307
      %397 = vst.msk [vmem:[%s367 + $0x159] sm:$0xff] %vm311, %v308
      %398 = vst.msk [vmem:[%s367 + $0x169] sm:$0xff] %vm311, %v309
      %399 = vst.msk [vmem:[%s367 + $0x171] sm:$0xff] %vm311, %v310
      %v400 = vld [vmem:[#allocation2] sm:$0xff]
      %v401 = vld [vmem:[#allocation2 + $0x8] sm:$0xff]
      %v402 = vld [vmem:[#allocation2 + $0x10] sm:$0x3]
      %v403 = vld [vmem:[#allocation2 + $0x18] sm:$0xff]
      %v404 = vld [vmem:[#allocation2 + $0x20] sm:$0xff]
      %v405 = vld [vmem:[#allocation2 + $0x28] sm:$0x3]
      %v406 = vld [vmem:[#allocation2 + $0x30] sm:$0xff]
      %v407 = vld [vmem:[#allocation2 + $0x38] sm:$0xff]
      %v408 = vld [vmem:[#allocation2 + $0x40] sm:$0x3]
      %v409 = vld [vmem:[#allocation2 + $0x48] sm:$0xff]
      %v410 = vld [vmem:[#allocation2 + $0x50] sm:$0xff]
      %v411 = vld [vmem:[#allocation2 + $0x58] sm:$0x3]
      %v412 = vld [vmem:[#allocation2 + $0x60] sm:$0xff]
      %v413 = vld [vmem:[#allocation2 + $0x68] sm:$0xff]
      %v414 = vld [vmem:[#allocation2 + $0x70] sm:$0x3]
      %v415 = vld [vmem:[#allocation2 + $0x78] sm:$0xff]
      %v416 = vld [vmem:[#allocation2 + $0x80] sm:$0xff]
      %v417 = vld [vmem:[#allocation2 + $0x88] sm:$0x3]
      %v418 = vld [vmem:[#allocation2 + $0x90] sm:$0xff]
      %v419 = vld [vmem:[#allocation2 + $0x98] sm:$0xff]
      %v420 = vld [vmem:[#allocation2 + $0xa0] sm:$0x3]
      %v421 = vld [vmem:[#allocation2 + $0xa8] sm:$0xff]
      %v422 = vld [vmem:[#allocation2 + $0xb0] sm:$0xff]
      %v423 = vld [vmem:[#allocation2 + $0xb8] sm:$0x3]
      %v424 = vld [vmem:[#allocation2 + $0xc0] sm:$0xff]
      %v425 = vld [vmem:[#allocation2 + $0xc8] sm:$0xff]
      %v426 = vld [vmem:[#allocation2 + $0xd0] sm:$0x3]
      %v427 = vld [vmem:[#allocation2 + $0xd8] sm:$0xff]
      %v428 = vld [vmem:[#allocation2 + $0xe0] sm:$0xff]
      %v429 = vld [vmem:[#allocation2 + $0xe8] sm:$0x3]
      %v430 = vld [vmem:[#allocation2 + $0xf0] sm:$0xff]
      %v431 = vld [vmem:[#allocation2 + $0xf8] sm:$0xff]
      %v432 = vld [vmem:[#allocation2 + $0x100] sm:$0x3]
      %v433 = vld [vmem:[#allocation2 + $0x108] sm:$0xff]
      %v434 = vld [vmem:[#allocation2 + $0x110] sm:$0xff]
      %v435 = vld [vmem:[#allocation2 + $0x118] sm:$0x3]
      %v436 = vld [vmem:[#allocation2 + $0x120] sm:$0xff]
      %v437 = vld [vmem:[#allocation2 + $0x128] sm:$0xff]
      %v438 = vld [vmem:[#allocation2 + $0x130] sm:$0x3]
      %v439 = vld [vmem:[#allocation2 + $0x138] sm:$0xff]
      %v440 = vld [vmem:[#allocation2 + $0x140] sm:$0xff]
      %v441 = vld [vmem:[#allocation2 + $0x148] sm:$0x3]
      %v442 = vld [vmem:[#allocation2 + $0x150] sm:$0xff]
      %v443 = vld [vmem:[#allocation2 + $0x158] sm:$0xff]
      %v444 = vld [vmem:[#allocation2 + $0x160] sm:$0x3]
      %v445 = vld [vmem:[#allocation2 + $0x168] sm:$0xff]
      %v446 = vld [vmem:[#allocation2 + $0x170] sm:$0xff]
      %v447 = vld [vmem:[#allocation2 + $0x178] sm:$0x3]
      %v448 = vld [vmem:[#allocation2 + $0x180] sm:$0xff]
      %v449 = vld [vmem:[#allocation2 + $0x188] sm:$0xff]
      %v450 = vld [vmem:[#allocation2 + $0x190] sm:$0x3]
      %v451 = vld [vmem:[#allocation2 + $0x198] sm:$0xff]
      %v452 = vld [vmem:[#allocation2 + $0x1a0] sm:$0xff]
      %v453 = vld [vmem:[#allocation2 + $0x1a8] sm:$0x3]
      %v454 = vld [vmem:[%s1] sm:$0xf]
      %v455 = vld [vmem:[%s1 + $0x4] sm:$0xf]
      %v456 = vld [vmem:[%s1 + $0x8] sm:$0xf]
      %v457 = vld [vmem:[%s1 + $0xc] sm:$0xf]
      %v458 = vld [vmem:[%s1 + $0x10] sm:$0xf]
      %v459 = vld [vmem:[%s1 + $0x14] sm:$0xf]
      %v460 = vld [vmem:[%s1 + $0x18] sm:$0xf]
      %v461 = vld [vmem:[%s1 + $0x1c] sm:$0xf]
      %v462 = vld [vmem:[%s1 + $0x20] sm:$0xf]
      %vm511 = vcmask 1046528
      %v512 = vrot.slane %v400, 1
      %v513 = vrot.slane %v401, 1
      %v514 = vsel %vm511, %v512, %v513
      %v515 = vrot.slane %v402, 1
      %v516 = vsel %vm511, %v513, %v515
      %v517 = vrot.slane %v403, 1
      %v518 = vrot.slane %v404, 1
      %v519 = vsel %vm511, %v517, %v518
      %v520 = vrot.slane %v405, 1
      %v521 = vsel %vm511, %v518, %v520
      %v522 = vrot.slane %v406, 1
      %v523 = vrot.slane %v407, 1
      %v524 = vsel %vm511, %v522, %v523
      %v525 = vrot.slane %v408, 1
      %v526 = vsel %vm511, %v523, %v525
      %v527 = vrot.slane %v409, 1
      %v528 = vrot.slane %v410, 1
      %v529 = vsel %vm511, %v527, %v528
      %v530 = vrot.slane %v411, 1
      %v531 = vsel %vm511, %v528, %v530
      %v532 = vrot.slane %v412, 1
      %v533 = vrot.slane %v413, 1
      %v534 = vsel %vm511, %v532, %v533
      %v535 = vrot.slane %v414, 1
      %v536 = vsel %vm511, %v533, %v535
      %v537 = vrot.slane %v415, 1
      %v538 = vrot.slane %v416, 1
      %v539 = vsel %vm511, %v537, %v538
      %v540 = vrot.slane %v417, 1
      %v541 = vsel %vm511, %v538, %v540
      %v542 = vrot.slane %v418, 1
      %v543 = vrot.slane %v419, 1
      %v544 = vsel %vm511, %v542, %v543
      %v545 = vrot.slane %v420, 1
      %v546 = vsel %vm511, %v543, %v545
      %v547 = vrot.slane %v421, 1
      %v548 = vrot.slane %v422, 1
      %v549 = vsel %vm511, %v547, %v548
      %v550 = vrot.slane %v423, 1
      %v551 = vsel %vm511, %v548, %v550
      %v552 = vrot.slane %v424, 1
      %v553 = vrot.slane %v425, 1
      %v554 = vsel %vm511, %v552, %v553
      %v555 = vrot.slane %v426, 1
      %v556 = vsel %vm511, %v553, %v555
      %v557 = vrot.slane %v427, 1
      %v558 = vrot.slane %v428, 1
      %v559 = vsel %vm511, %v557, %v558
      %v560 = vrot.slane %v429, 1
      %v561 = vsel %vm511, %v558, %v560
      %v562 = vrot.slane %v430, 1
      %v563 = vrot.slane %v431, 1
      %v564 = vsel %vm511, %v562, %v563
      %v565 = vrot.slane %v432, 1
      %v566 = vsel %vm511, %v563, %v565
      %v567 = vrot.slane %v433, 1
      %v568 = vrot.slane %v434, 1
      %v569 = vsel %vm511, %v567, %v568
      %v570 = vrot.slane %v435, 1
      %v571 = vsel %vm511, %v568, %v570
      %v572 = vrot.slane %v436, 1
      %v573 = vrot.slane %v437, 1
      %v574 = vsel %vm511, %v572, %v573
      %v575 = vrot.slane %v438, 1
      %v576 = vsel %vm511, %v573, %v575
      %v577 = vrot.slane %v439, 1
      %v578 = vrot.slane %v440, 1
      %v579 = vsel %vm511, %v577, %v578
      %v580 = vrot.slane %v441, 1
      %v581 = vsel %vm511, %v578, %v580
      %v582 = vrot.slane %v442, 1
      %v583 = vrot.slane %v443, 1
      %v584 = vsel %vm511, %v582, %v583
      %v585 = vrot.slane %v444, 1
      %v586 = vsel %vm511, %v583, %v585
      %v587 = vrot.slane %v445, 1
      %v588 = vrot.slane %v446, 1
      %v589 = vsel %vm511, %v587, %v588
      %v590 = vrot.slane %v447, 1
      %v591 = vsel %vm511, %v588, %v590
      %v592 = vsel %vm311, %v514, 0
      %v594 = vsel %vm311, %v516, 0
      %v596 = vsel %vm311, %v519, 0
      %v598 = vsel %vm311, %v521, 0
      %v600 = vsel %vm311, %v524, 0
      %v602 = vsel %vm311, %v526, 0
      %v604 = vsel %vm311, %v529, 0
      %v606 = vsel %vm311, %v531, 0
      %v608 = vsel %vm311, %v534, 0
      %v610 = vsel %vm311, %v536, 0
      %v612 = vsel %vm311, %v539, 0
      %v614 = vsel %vm311, %v541, 0
      %v616 = vsel %vm311, %v544, 0
      %v618 = vsel %vm311, %v546, 0
      %v620 = vsel %vm311, %v549, 0
      %v622 = vsel %vm311, %v551, 0
      %v624 = vsel %vm311, %v554, 0
      %v626 = vsel %vm311, %v556, 0
      %v628 = vsel %vm311, %v559, 0
      %v630 = vsel %vm311, %v561, 0
      %v632 = vsel %vm311, %v564, 0
      %v634 = vsel %vm311, %v566, 0
      %v636 = vsel %vm311, %v569, 0
      %v638 = vsel %vm311, %v571, 0
      %v640 = vsel %vm311, %v574, 0
      %v642 = vsel %vm311, %v576, 0
      %v644 = vsel %vm311, %v579, 0
      %v646 = vsel %vm311, %v581, 0
      %v648 = vsel %vm311, %v584, 0
      %v650 = vsel %vm311, %v586, 0
      %v652 = vsel %vm311, %v589, 0
      %v654 = vsel %vm311, %v591, 0
      %vm656 = vcmask 1043456
      %v658 = vsel %vm656, %v455, 0
      %660 = vmatpush.msra.mxu0 0.0
      %661 = vmatpush.msra.mxu0 0.0
      %662 = vmatpush.msra.mxu0 0.0
      %663 = vmatpush.msra.mxu0 0.0
      %664 = vmatpush.msra.mxu0 0.0
      %665 = vmatpush.msra.mxu0 0.0
      %666 = vmatpush.msra.mxu0 0.0
      %667 = vmatpush.msra.mxu0 0.0
      %668 = vmatpush.msra.mxu0 0.0
      %669 = vmatpush.msra.mxu0 0.0
      %670 = vmatpush.msra.mxu0 0.0
      %671 = vmatpush.msra.mxu0 0.0
      %672 = vmatpush.msra.mxu0 0.0
      %673 = vmatpush.msra.mxu0 0.0
      %674 = vmatpush.msra.mxu0 0.0
      %675 = vmatpush.msra.mxu0 %v658
      %676 = vmatmul.f32.gmra.mxu0 %v592
      %v677 = vpop.f32.mrf.mxu0
      %v678 = vadd.f32 0.0, %v677
      %679 = vmatmul.f32.gmra.mxu0 %v594
      %v680 = vpop.f32.mrf.mxu0
      %v681 = vadd.f32 0.0, %v680
      %682 = vmatmul.f32.gmra.mxu0 %v596
      %v683 = vpop.f32.mrf.mxu0
      %v684 = vadd.f32 0.0, %v683
      %685 = vmatmul.f32.gmra.mxu0 %v598
      %v686 = vpop.f32.mrf.mxu0
      %v687 = vadd.f32 0.0, %v686
      %688 = vmatmul.f32.gmra.mxu0 %v600
      %v689 = vpop.f32.mrf.mxu0
      %v690 = vadd.f32 0.0, %v689
      %691 = vmatmul.f32.gmra.mxu0 %v602
      %v692 = vpop.f32.mrf.mxu0
      %v693 = vadd.f32 0.0, %v692
      %694 = vmatmul.f32.gmra.mxu0 %v604
      %v695 = vpop.f32.mrf.mxu0
      %v696 = vadd.f32 0.0, %v695
      %697 = vmatmul.f32.gmra.mxu0 %v606
      %v698 = vpop.f32.mrf.mxu0
      %v699 = vadd.f32 0.0, %v698
      %700 = vmatmul.f32.gmra.mxu0 %v608
      %v701 = vpop.f32.mrf.mxu0
      %v702 = vadd.f32 0.0, %v701
      %703 = vmatmul.f32.gmra.mxu0 %v610
      %v704 = vpop.f32.mrf.mxu0
      %v705 = vadd.f32 0.0, %v704
      %706 = vmatmul.f32.gmra.mxu0 %v612
      %v707 = vpop.f32.mrf.mxu0
      %v708 = vadd.f32 0.0, %v707
      %709 = vmatmul.f32.gmra.mxu0 %v614
      %v710 = vpop.f32.mrf.mxu0
      %v711 = vadd.f32 0.0, %v710
      %712 = vmatmul.f32.gmra.mxu0 %v616
      %v713 = vpop.f32.mrf.mxu0
      %v714 = vadd.f32 0.0, %v713
      %715 = vmatmul.f32.gmra.mxu0 %v618
      %v716 = vpop.f32.mrf.mxu0
      %v717 = vadd.f32 0.0, %v716
      %718 = vmatmul.f32.gmra.mxu0 %v620
      %v719 = vpop.f32.mrf.mxu0
      %v720 = vadd.f32 0.0, %v719
      %721 = vmatmul.f32.gmra.mxu0 %v622
      %v722 = vpop.f32.mrf.mxu0
      %v723 = vadd.f32 0.0, %v722
      %724 = vmatmul.f32.gmra.mxu0 %v624
      %v725 = vpop.f32.mrf.mxu0
      %v726 = vadd.f32 0.0, %v725
      %727 = vmatmul.f32.gmra.mxu0 %v626
      %v728 = vpop.f32.mrf.mxu0
      %v729 = vadd.f32 0.0, %v728
      %730 = vmatmul.f32.gmra.mxu0 %v628
      %v731 = vpop.f32.mrf.mxu0
      %v732 = vadd.f32 0.0, %v731
      %733 = vmatmul.f32.gmra.mxu0 %v630
      %v734 = vpop.f32.mrf.mxu0
      %v735 = vadd.f32 0.0, %v734
      %736 = vmatmul.f32.gmra.mxu0 %v632
      %v737 = vpop.f32.mrf.mxu0
      %v738 = vadd.f32 0.0, %v737
      %739 = vmatmul.f32.gmra.mxu0 %v634
      %v740 = vpop.f32.mrf.mxu0
      %v741 = vadd.f32 0.0, %v740
      %742 = vmatmul.f32.gmra.mxu0 %v636
      %v743 = vpop.f32.mrf.mxu0
      %v744 = vadd.f32 0.0, %v743
      %745 = vmatmul.f32.gmra.mxu0 %v638
      %v746 = vpop.f32.mrf.mxu0
      %v747 = vadd.f32 0.0, %v746
      %748 = vmatmul.f32.gmra.mxu0 %v640
      %v749 = vpop.f32.mrf.mxu0
      %v750 = vadd.f32 0.0, %v749
      %751 = vmatmul.f32.gmra.mxu0 %v642
      %v752 = vpop.f32.mrf.mxu0
      %v753 = vadd.f32 0.0, %v752
      %754 = vmatmul.f32.gmra.mxu0 %v644
      %v755 = vpop.f32.mrf.mxu0
      %v756 = vadd.f32 0.0, %v755
      %757 = vmatmul.f32.gmra.mxu0 %v646
      %v758 = vpop.f32.mrf.mxu0
      %v759 = vadd.f32 0.0, %v758
      %760 = vmatmul.f32.gmra.mxu0 %v648
      %v761 = vpop.f32.mrf.mxu0
      %v762 = vadd.f32 0.0, %v761
      %763 = vmatmul.f32.gmra.mxu0 %v650
      %v764 = vpop.f32.mrf.mxu0
      %v765 = vadd.f32 0.0, %v764
      %766 = vmatmul.f32.gmra.mxu0 %v652
      %v767 = vpop.f32.mrf.mxu0
      %v768 = vadd.f32 0.0, %v767
      %769 = vmatmul.f32.gmra.mxu0 %v654
      %v770 = vpop.f32.mrf.mxu0
      %v771 = vadd.f32 0.0, %v770
      %772 = vdwg.mxu0
      %v773 = vsel %vm311, %v400, 0
      %v775 = vsel %vm311, %v401, 0
      %v777 = vsel %vm311, %v403, 0
      %v779 = vsel %vm311, %v404, 0
      %v781 = vsel %vm311, %v406, 0
      %v783 = vsel %vm311, %v407, 0
      %v785 = vsel %vm311, %v409, 0
      %v787 = vsel %vm311, %v410, 0
      %v789 = vsel %vm311, %v412, 0
      %v791 = vsel %vm311, %v413, 0
      %v793 = vsel %vm311, %v415, 0
      %v795 = vsel %vm311, %v416, 0
      %v797 = vsel %vm311, %v418, 0
      %v799 = vsel %vm311, %v419, 0
      %v801 = vsel %vm311, %v421, 0
      %v803 = vsel %vm311, %v422, 0
      %v805 = vsel %vm311, %v424, 0
      %v807 = vsel %vm311, %v425, 0
      %v809 = vsel %vm311, %v427, 0
      %v811 = vsel %vm311, %v428, 0
      %v813 = vsel %vm311, %v430, 0
      %v815 = vsel %vm311, %v431, 0
      %v817 = vsel %vm311, %v433, 0
      %v819 = vsel %vm311, %v434, 0
      %v821 = vsel %vm311, %v436, 0
      %v823 = vsel %vm311, %v437, 0
      %v825 = vsel %vm311, %v439, 0
      %v827 = vsel %vm311, %v440, 0
      %v829 = vsel %vm311, %v442, 0
      %v831 = vsel %vm311, %v443, 0
      %v833 = vsel %vm311, %v445, 0
      %v835 = vsel %vm311, %v446, 0
      %v838 = vsel %vm656, %v454, 0
      %840 = vmatpush.msra.mxu0 0.0
      %841 = vmatpush.msra.mxu0 0.0
      %842 = vmatpush.msra.mxu0 0.0
      %843 = vmatpush.msra.mxu0 0.0
      %844 = vmatpush.msra.mxu0 0.0
      %845 = vmatpush.msra.mxu0 0.0
      %846 = vmatpush.msra.mxu0 0.0
      %847 = vmatpush.msra.mxu0 0.0
      %848 = vmatpush.msra.mxu0 0.0
      %849 = vmatpush.msra.mxu0 0.0
      %850 = vmatpush.msra.mxu0 0.0
      %851 = vmatpush.msra.mxu0 0.0
      %852 = vmatpush.msra.mxu0 0.0
      %853 = vmatpush.msra.mxu0 0.0
      %854 = vmatpush.msra.mxu0 0.0
      %855 = vmatpush.msra.mxu0 %v838
      %856 = vmatmul.f32.gmra.mxu0 %v773
      %v857 = vpop.f32.mrf.mxu0
      %v858 = vadd.f32 %v678, %v857
      %859 = vmatmul.f32.gmra.mxu0 %v775
      %v860 = vpop.f32.mrf.mxu0
      %v861 = vadd.f32 %v681, %v860
      %862 = vmatmul.f32.gmra.mxu0 %v777
      %v863 = vpop.f32.mrf.mxu0
      %v864 = vadd.f32 %v684, %v863
      %865 = vmatmul.f32.gmra.mxu0 %v779
      %v866 = vpop.f32.mrf.mxu0
      %v867 = vadd.f32 %v687, %v866
      %868 = vmatmul.f32.gmra.mxu0 %v781
      %v869 = vpop.f32.mrf.mxu0
      %v870 = vadd.f32 %v690, %v869
      %871 = vmatmul.f32.gmra.mxu0 %v783
      %v872 = vpop.f32.mrf.mxu0
      %v873 = vadd.f32 %v693, %v872
      %874 = vmatmul.f32.gmra.mxu0 %v785
      %v875 = vpop.f32.mrf.mxu0
      %v876 = vadd.f32 %v696, %v875
      %877 = vmatmul.f32.gmra.mxu0 %v787
      %v878 = vpop.f32.mrf.mxu0
      %v879 = vadd.f32 %v699, %v878
      %880 = vmatmul.f32.gmra.mxu0 %v789
      %v881 = vpop.f32.mrf.mxu0
      %v882 = vadd.f32 %v702, %v881
      %883 = vmatmul.f32.gmra.mxu0 %v791
      %v884 = vpop.f32.mrf.mxu0
      %v885 = vadd.f32 %v705, %v884
      %886 = vmatmul.f32.gmra.mxu0 %v793
      %v887 = vpop.f32.mrf.mxu0
      %v888 = vadd.f32 %v708, %v887
      %889 = vmatmul.f32.gmra.mxu0 %v795
      %v890 = vpop.f32.mrf.mxu0
      %v891 = vadd.f32 %v711, %v890
      %892 = vmatmul.f32.gmra.mxu0 %v797
      %v893 = vpop.f32.mrf.mxu0
      %v894 = vadd.f32 %v714, %v893
      %895 = vmatmul.f32.gmra.mxu0 %v799
      %v896 = vpop.f32.mrf.mxu0
      %v897 = vadd.f32 %v717, %v896
      %898 = vmatmul.f32.gmra.mxu0 %v801
      %v899 = vpop.f32.mrf.mxu0
      %v900 = vadd.f32 %v720, %v899
      %901 = vmatmul.f32.gmra.mxu0 %v803
      %v902 = vpop.f32.mrf.mxu0
      %v903 = vadd.f32 %v723, %v902
      %904 = vmatmul.f32.gmra.mxu0 %v805
      %v905 = vpop.f32.mrf.mxu0
      %v906 = vadd.f32 %v726, %v905
      %907 = vmatmul.f32.gmra.mxu0 %v807
      %v908 = vpop.f32.mrf.mxu0
      %v909 = vadd.f32 %v729, %v908
      %910 = vmatmul.f32.gmra.mxu0 %v809
      %v911 = vpop.f32.mrf.mxu0
      %v912 = vadd.f32 %v732, %v911
      %913 = vmatmul.f32.gmra.mxu0 %v811
      %v914 = vpop.f32.mrf.mxu0
      %v915 = vadd.f32 %v735, %v914
      %916 = vmatmul.f32.gmra.mxu0 %v813
      %v917 = vpop.f32.mrf.mxu0
      %v918 = vadd.f32 %v738, %v917
      %919 = vmatmul.f32.gmra.mxu0 %v815
      %v920 = vpop.f32.mrf.mxu0
      %v921 = vadd.f32 %v741, %v920
      %922 = vmatmul.f32.gmra.mxu0 %v817
      %v923 = vpop.f32.mrf.mxu0
      %v924 = vadd.f32 %v744, %v923
      %925 = vmatmul.f32.gmra.mxu0 %v819
      %v926 = vpop.f32.mrf.mxu0
      %v927 = vadd.f32 %v747, %v926
      %928 = vmatmul.f32.gmra.mxu0 %v821
      %v929 = vpop.f32.mrf.mxu0
      %v930 = vadd.f32 %v750, %v929
      %931 = vmatmul.f32.gmra.mxu0 %v823
      %v932 = vpop.f32.mrf.mxu0
      %v933 = vadd.f32 %v753, %v932
      %934 = vmatmul.f32.gmra.mxu0 %v825
      %v935 = vpop.f32.mrf.mxu0
      %v936 = vadd.f32 %v756, %v935
      %937 = vmatmul.f32.gmra.mxu0 %v827
      %v938 = vpop.f32.mrf.mxu0
      %v939 = vadd.f32 %v759, %v938
      %940 = vmatmul.f32.gmra.mxu0 %v829
      %v941 = vpop.f32.mrf.mxu0
      %v942 = vadd.f32 %v762, %v941
      %943 = vmatmul.f32.gmra.mxu0 %v831
      %v944 = vpop.f32.mrf.mxu0
      %v945 = vadd.f32 %v765, %v944
      %946 = vmatmul.f32.gmra.mxu0 %v833
      %v947 = vpop.f32.mrf.mxu0
      %v948 = vadd.f32 %v768, %v947
      %949 = vmatmul.f32.gmra.mxu0 %v835
      %v950 = vpop.f32.mrf.mxu0
      %v951 = vadd.f32 %v771, %v950
      %952 = vdwg.mxu0
      %vm953 = vcmask 1045504
      %v954 = vrot.slane %v400, 2
      %v955 = vrot.slane %v401, 2
      %v956 = vsel %vm953, %v954, %v955
      %v957 = vrot.slane %v402, 2
      %v958 = vsel %vm953, %v955, %v957
      %v959 = vrot.slane %v403, 2
      %v960 = vrot.slane %v404, 2
      %v961 = vsel %vm953, %v959, %v960
      %v962 = vrot.slane %v405, 2
      %v963 = vsel %vm953, %v960, %v962
      %v964 = vrot.slane %v406, 2
      %v965 = vrot.slane %v407, 2
      %v966 = vsel %vm953, %v964, %v965
      %v967 = vrot.slane %v408, 2
      %v968 = vsel %vm953, %v965, %v967
      %v969 = vrot.slane %v409, 2
      %v970 = vrot.slane %v410, 2
      %v971 = vsel %vm953, %v969, %v970
      %v972 = vrot.slane %v411, 2
      %v973 = vsel %vm953, %v970, %v972
      %v974 = vrot.slane %v412, 2
      %v975 = vrot.slane %v413, 2
      %v976 = vsel %vm953, %v974, %v975
      %v977 = vrot.slane %v414, 2
      %v978 = vsel %vm953, %v975, %v977
      %v979 = vrot.slane %v415, 2
      %v980 = vrot.slane %v416, 2
      %v981 = vsel %vm953, %v979, %v980
      %v982 = vrot.slane %v417, 2
      %v983 = vsel %vm953, %v980, %v982
      %v984 = vrot.slane %v418, 2
      %v985 = vrot.slane %v419, 2
      %v986 = vsel %vm953, %v984, %v985
      %v987 = vrot.slane %v420, 2
      %v988 = vsel %vm953, %v985, %v987
      %v989 = vrot.slane %v421, 2
      %v990 = vrot.slane %v422, 2
      %v991 = vsel %vm953, %v989, %v990
      %v992 = vrot.slane %v423, 2
      %v993 = vsel %vm953, %v990, %v992
      %v994 = vrot.slane %v424, 2
      %v995 = vrot.slane %v425, 2
      %v996 = vsel %vm953, %v994, %v995
      %v997 = vrot.slane %v426, 2
      %v998 = vsel %vm953, %v995, %v997
      %v999 = vrot.slane %v427, 2
      %v1000 = vrot.slane %v428, 2
      %v1001 = vsel %vm953, %v999, %v1000
      %v1002 = vrot.slane %v429, 2
      %v1003 = vsel %vm953, %v1000, %v1002
      %v1004 = vrot.slane %v430, 2
      %v1005 = vrot.slane %v431, 2
      %v1006 = vsel %vm953, %v1004, %v1005
      %v1007 = vrot.slane %v432, 2
      %v1008 = vsel %vm953, %v1005, %v1007
      %v1009 = vrot.slane %v433, 2
      %v1010 = vrot.slane %v434, 2
      %v1011 = vsel %vm953, %v1009, %v1010
      %v1012 = vrot.slane %v435, 2
      %v1013 = vsel %vm953, %v1010, %v1012
      %v1014 = vrot.slane %v436, 2
      %v1015 = vrot.slane %v437, 2
      %v1016 = vsel %vm953, %v1014, %v1015
      %v1017 = vrot.slane %v438, 2
      %v1018 = vsel %vm953, %v1015, %v1017
      %v1019 = vrot.slane %v439, 2
      %v1020 = vrot.slane %v440, 2
      %v1021 = vsel %vm953, %v1019, %v1020
      %v1022 = vrot.slane %v441, 2
      %v1023 = vsel %vm953, %v1020, %v1022
      %v1024 = vrot.slane %v442, 2
      %v1025 = vrot.slane %v443, 2
      %v1026 = vsel %vm953, %v1024, %v1025
      %v1027 = vrot.slane %v444, 2
      %v1028 = vsel %vm953, %v1025, %v1027
      %v1029 = vrot.slane %v445, 2
      %v1030 = vrot.slane %v446, 2
      %v1031 = vsel %vm953, %v1029, %v1030
      %v1032 = vrot.slane %v447, 2
      %v1033 = vsel %vm953, %v1030, %v1032
      %v1034 = vsel %vm311, %v956, 0
      %v1036 = vsel %vm311, %v958, 0
      %v1038 = vsel %vm311, %v961, 0
      %v1040 = vsel %vm311, %v963, 0
      %v1042 = vsel %vm311, %v966, 0
      %v1044 = vsel %vm311, %v968, 0
      %v1046 = vsel %vm311, %v971, 0
      %v1048 = vsel %vm311, %v973, 0
      %v1050 = vsel %vm311, %v976, 0
      %v1052 = vsel %vm311, %v978, 0
      %v1054 = vsel %vm311, %v981, 0
      %v1056 = vsel %vm311, %v983, 0
      %v1058 = vsel %vm311, %v986, 0
      %v1060 = vsel %vm311, %v988, 0
      %v1062 = vsel %vm311, %v991, 0
      %v1064 = vsel %vm311, %v993, 0
      %v1066 = vsel %vm311, %v996, 0
      %v1068 = vsel %vm311, %v998, 0
      %v1070 = vsel %vm311, %v1001, 0
      %v1072 = vsel %vm311, %v1003, 0
      %v1074 = vsel %vm311, %v1006, 0
      %v1076 = vsel %vm311, %v1008, 0
      %v1078 = vsel %vm311, %v1011, 0
      %v1080 = vsel %vm311, %v1013, 0
      %v1082 = vsel %vm311, %v1016, 0
      %v1084 = vsel %vm311, %v1018, 0
      %v1086 = vsel %vm311, %v1021, 0
      %v1088 = vsel %vm311, %v1023, 0
      %v1090 = vsel %vm311, %v1026, 0
      %v1092 = vsel %vm311, %v1028, 0
      %v1094 = vsel %vm311, %v1031, 0
      %v1096 = vsel %vm311, %v1033, 0
      %v1099 = vsel %vm656, %v456, 0
      %1101 = vmatpush.msra.mxu0 0.0
      %1102 = vmatpush.msra.mxu0 0.0
      %1103 = vmatpush.msra.mxu0 0.0
      %1104 = vmatpush.msra.mxu0 0.0
      %1105 = vmatpush.msra.mxu0 0.0
      %1106 = vmatpush.msra.mxu0 0.0
      %1107 = vmatpush.msra.mxu0 0.0
      %1108 = vmatpush.msra.mxu0 0.0
      %1109 = vmatpush.msra.mxu0 0.0
      %1110 = vmatpush.msra.mxu0 0.0
      %1111 = vmatpush.msra.mxu0 0.0
      %1112 = vmatpush.msra.mxu0 0.0
      %1113 = vmatpush.msra.mxu0 0.0
      %1114 = vmatpush.msra.mxu0 0.0
      %1115 = vmatpush.msra.mxu0 0.0
      %1116 = vmatpush.msra.mxu0 %v1099
      %1117 = vmatmul.f32.gmra.mxu0 %v1034
      %v1118 = vpop.f32.mrf.mxu0
      %v1119 = vadd.f32 0.0, %v1118
      %1120 = vmatmul.f32.gmra.mxu0 %v1036
      %v1121 = vpop.f32.mrf.mxu0
      %v1122 = vadd.f32 0.0, %v1121
      %1123 = vmatmul.f32.gmra.mxu0 %v1038
      %v1124 = vpop.f32.mrf.mxu0
      %v1125 = vadd.f32 0.0, %v1124
      %1126 = vmatmul.f32.gmra.mxu0 %v1040
      %v1127 = vpop.f32.mrf.mxu0
      %v1128 = vadd.f32 0.0, %v1127
      %1129 = vmatmul.f32.gmra.mxu0 %v1042
      %v1130 = vpop.f32.mrf.mxu0
      %v1131 = vadd.f32 0.0, %v1130
      %1132 = vmatmul.f32.gmra.mxu0 %v1044
      %v1133 = vpop.f32.mrf.mxu0
      %v1134 = vadd.f32 0.0, %v1133
      %1135 = vmatmul.f32.gmra.mxu0 %v1046
      %v1136 = vpop.f32.mrf.mxu0
      %v1137 = vadd.f32 0.0, %v1136
      %1138 = vmatmul.f32.gmra.mxu0 %v1048
      %v1139 = vpop.f32.mrf.mxu0
      %v1140 = vadd.f32 0.0, %v1139
      %1141 = vmatmul.f32.gmra.mxu0 %v1050
      %v1142 = vpop.f32.mrf.mxu0
      %v1143 = vadd.f32 0.0, %v1142
      %1144 = vmatmul.f32.gmra.mxu0 %v1052
      %v1145 = vpop.f32.mrf.mxu0
      %v1146 = vadd.f32 0.0, %v1145
      %1147 = vmatmul.f32.gmra.mxu0 %v1054
      %v1148 = vpop.f32.mrf.mxu0
      %v1149 = vadd.f32 0.0, %v1148
      %1150 = vmatmul.f32.gmra.mxu0 %v1056
      %v1151 = vpop.f32.mrf.mxu0
      %v1152 = vadd.f32 0.0, %v1151
      %1153 = vmatmul.f32.gmra.mxu0 %v1058
      %v1154 = vpop.f32.mrf.mxu0
      %v1155 = vadd.f32 0.0, %v1154
      %1156 = vmatmul.f32.gmra.mxu0 %v1060
      %v1157 = vpop.f32.mrf.mxu0
      %v1158 = vadd.f32 0.0, %v1157
      %1159 = vmatmul.f32.gmra.mxu0 %v1062
      %v1160 = vpop.f32.mrf.mxu0
      %v1161 = vadd.f32 0.0, %v1160
      %1162 = vmatmul.f32.gmra.mxu0 %v1064
      %v1163 = vpop.f32.mrf.mxu0
      %v1164 = vadd.f32 0.0, %v1163
      %1165 = vmatmul.f32.gmra.mxu0 %v1066
      %v1166 = vpop.f32.mrf.mxu0
      %v1167 = vadd.f32 0.0, %v1166
      %1168 = vmatmul.f32.gmra.mxu0 %v1068
      %v1169 = vpop.f32.mrf.mxu0
      %v1170 = vadd.f32 0.0, %v1169
      %1171 = vmatmul.f32.gmra.mxu0 %v1070
      %v1172 = vpop.f32.mrf.mxu0
      %v1173 = vadd.f32 0.0, %v1172
      %1174 = vmatmul.f32.gmra.mxu0 %v1072
      %v1175 = vpop.f32.mrf.mxu0
      %v1176 = vadd.f32 0.0, %v1175
      %1177 = vmatmul.f32.gmra.mxu0 %v1074
      %v1178 = vpop.f32.mrf.mxu0
      %v1179 = vadd.f32 0.0, %v1178
      %1180 = vmatmul.f32.gmra.mxu0 %v1076
      %v1181 = vpop.f32.mrf.mxu0
      %v1182 = vadd.f32 0.0, %v1181
      %1183 = vmatmul.f32.gmra.mxu0 %v1078
      %v1184 = vpop.f32.mrf.mxu0
      %v1185 = vadd.f32 0.0, %v1184
      %1186 = vmatmul.f32.gmra.mxu0 %v1080
      %v1187 = vpop.f32.mrf.mxu0
      %v1188 = vadd.f32 0.0, %v1187
      %1189 = vmatmul.f32.gmra.mxu0 %v1082
      %v1190 = vpop.f32.mrf.mxu0
      %v1191 = vadd.f32 0.0, %v1190
      %1192 = vmatmul.f32.gmra.mxu0 %v1084
      %v1193 = vpop.f32.mrf.mxu0
      %v1194 = vadd.f32 0.0, %v1193
      %1195 = vmatmul.f32.gmra.mxu0 %v1086
      %v1196 = vpop.f32.mrf.mxu0
      %v1197 = vadd.f32 0.0, %v1196
      %1198 = vmatmul.f32.gmra.mxu0 %v1088
      %v1199 = vpop.f32.mrf.mxu0
      %v1200 = vadd.f32 0.0, %v1199
      %1201 = vmatmul.f32.gmra.mxu0 %v1090
      %v1202 = vpop.f32.mrf.mxu0
      %v1203 = vadd.f32 0.0, %v1202
      %1204 = vmatmul.f32.gmra.mxu0 %v1092
      %v1205 = vpop.f32.mrf.mxu0
      %v1206 = vadd.f32 0.0, %v1205
      %1207 = vmatmul.f32.gmra.mxu0 %v1094
      %v1208 = vpop.f32.mrf.mxu0
      %v1209 = vadd.f32 0.0, %v1208
      %1210 = vmatmul.f32.gmra.mxu0 %v1096
      %v1211 = vpop.f32.mrf.mxu0
      %v1212 = vadd.f32 0.0, %v1211
      %1213 = vdwg.mxu0
      %v1214 = vadd.f32 %v858, %v1119
      %v1215 = vadd.f32 %v861, %v1122
      %v1216 = vadd.f32 %v864, %v1125
      %v1217 = vadd.f32 %v867, %v1128
      %v1218 = vadd.f32 %v870, %v1131
      %v1219 = vadd.f32 %v873, %v1134
      %v1220 = vadd.f32 %v876, %v1137
      %v1221 = vadd.f32 %v879, %v1140
      %v1222 = vadd.f32 %v882, %v1143
      %v1223 = vadd.f32 %v885, %v1146
      %v1224 = vadd.f32 %v888, %v1149
      %v1225 = vadd.f32 %v891, %v1152
      %v1226 = vadd.f32 %v894, %v1155
      %v1227 = vadd.f32 %v897, %v1158
      %v1228 = vadd.f32 %v900, %v1161
      %v1229 = vadd.f32 %v903, %v1164
      %v1230 = vadd.f32 %v906, %v1167
      %v1231 = vadd.f32 %v909, %v1170
      %v1232 = vadd.f32 %v912, %v1173
      %v1233 = vadd.f32 %v915, %v1176
      %v1234 = vadd.f32 %v918, %v1179
      %v1235 = vadd.f32 %v921, %v1182
      %v1236 = vadd.f32 %v924, %v1185
      %v1237 = vadd.f32 %v927, %v1188
      %v1238 = vadd.f32 %v930, %v1191
      %v1239 = vadd.f32 %v933, %v1194
      %v1240 = vadd.f32 %v936, %v1197
      %v1241 = vadd.f32 %v939, %v1200
      %v1242 = vadd.f32 %v942, %v1203
      %v1243 = vadd.f32 %v945, %v1206
      %v1244 = vadd.f32 %v948, %v1209
      %v1245 = vadd.f32 %v951, %v1212
      %v1247 = vsel %vm311, %v448, 0
      %v1250 = vsel %vm311, %v449, 0
      %v1253 = vsel %vm656, %v457, 0
      %1255 = vmatpush.msra.mxu0 0.0
      %1256 = vmatpush.msra.mxu0 0.0
      %1257 = vmatpush.msra.mxu0 0.0
      %1258 = vmatpush.msra.mxu0 0.0
      %1259 = vmatpush.msra.mxu0 0.0
      %1260 = vmatpush.msra.mxu0 0.0
      %1261 = vmatpush.msra.mxu0 0.0
      %1262 = vmatpush.msra.mxu0 0.0
      %1263 = vmatpush.msra.mxu0 0.0
      %1264 = vmatpush.msra.mxu0 0.0
      %1265 = vmatpush.msra.mxu0 0.0
      %1266 = vmatpush.msra.mxu0 0.0
      %1267 = vmatpush.msra.mxu0 0.0
      %1268 = vmatpush.msra.mxu0 0.0
      %1269 = vmatpush.msra.mxu0 0.0
      %1270 = vmatpush.msra.mxu0 %v1253
      %1271 = vmatmul.f32.gmra.mxu0 %v777
      %v1272 = vpop.f32.mrf.mxu0
      %v1273 = vadd.f32 0.0, %v1272
      %1274 = vmatmul.f32.gmra.mxu0 %v779
      %v1275 = vpop.f32.mrf.mxu0
      %v1276 = vadd.f32 0.0, %v1275
      %1277 = vmatmul.f32.gmra.mxu0 %v781
      %v1278 = vpop.f32.mrf.mxu0
      %v1279 = vadd.f32 0.0, %v1278
      %1280 = vmatmul.f32.gmra.mxu0 %v783
      %v1281 = vpop.f32.mrf.mxu0
      %v1282 = vadd.f32 0.0, %v1281
      %1283 = vmatmul.f32.gmra.mxu0 %v785
      %v1284 = vpop.f32.mrf.mxu0
      %v1285 = vadd.f32 0.0, %v1284
      %1286 = vmatmul.f32.gmra.mxu0 %v787
      %v1287 = vpop.f32.mrf.mxu0
      %v1288 = vadd.f32 0.0, %v1287
      %1289 = vmatmul.f32.gmra.mxu0 %v789
      %v1290 = vpop.f32.mrf.mxu0
      %v1291 = vadd.f32 0.0, %v1290
      %1292 = vmatmul.f32.gmra.mxu0 %v791
      %v1293 = vpop.f32.mrf.mxu0
      %v1294 = vadd.f32 0.0, %v1293
      %1295 = vmatmul.f32.gmra.mxu0 %v793
      %v1296 = vpop.f32.mrf.mxu0
      %v1297 = vadd.f32 0.0, %v1296
      %1298 = vmatmul.f32.gmra.mxu0 %v795
      %v1299 = vpop.f32.mrf.mxu0
      %v1300 = vadd.f32 0.0, %v1299
      %1301 = vmatmul.f32.gmra.mxu0 %v797
      %v1302 = vpop.f32.mrf.mxu0
      %v1303 = vadd.f32 0.0, %v1302
      %1304 = vmatmul.f32.gmra.mxu0 %v799
      %v1305 = vpop.f32.mrf.mxu0
      %v1306 = vadd.f32 0.0, %v1305
      %1307 = vmatmul.f32.gmra.mxu0 %v801
      %v1308 = vpop.f32.mrf.mxu0
      %v1309 = vadd.f32 0.0, %v1308
      %1310 = vmatmul.f32.gmra.mxu0 %v803
      %v1311 = vpop.f32.mrf.mxu0
      %v1312 = vadd.f32 0.0, %v1311
      %1313 = vmatmul.f32.gmra.mxu0 %v805
      %v1314 = vpop.f32.mrf.mxu0
      %v1315 = vadd.f32 0.0, %v1314
      %1316 = vmatmul.f32.gmra.mxu0 %v807
      %v1317 = vpop.f32.mrf.mxu0
      %v1318 = vadd.f32 0.0, %v1317
      %1319 = vmatmul.f32.gmra.mxu0 %v809
      %v1320 = vpop.f32.mrf.mxu0
      %v1321 = vadd.f32 0.0, %v1320
      %1322 = vmatmul.f32.gmra.mxu0 %v811
      %v1323 = vpop.f32.mrf.mxu0
      %v1324 = vadd.f32 0.0, %v1323
      %1325 = vmatmul.f32.gmra.mxu0 %v813
      %v1326 = vpop.f32.mrf.mxu0
      %v1327 = vadd.f32 0.0, %v1326
      %1328 = vmatmul.f32.gmra.mxu0 %v815
      %v1329 = vpop.f32.mrf.mxu0
      %v1330 = vadd.f32 0.0, %v1329
      %1331 = vmatmul.f32.gmra.mxu0 %v817
      %v1332 = vpop.f32.mrf.mxu0
      %v1333 = vadd.f32 0.0, %v1332
      %1334 = vmatmul.f32.gmra.mxu0 %v819
      %v1335 = vpop.f32.mrf.mxu0
      %v1336 = vadd.f32 0.0, %v1335
      %1337 = vmatmul.f32.gmra.mxu0 %v821
      %v1338 = vpop.f32.mrf.mxu0
      %v1339 = vadd.f32 0.0, %v1338
      %1340 = vmatmul.f32.gmra.mxu0 %v823
      %v1341 = vpop.f32.mrf.mxu0
      %v1342 = vadd.f32 0.0, %v1341
      %1343 = vmatmul.f32.gmra.mxu0 %v825
      %v1344 = vpop.f32.mrf.mxu0
      %v1345 = vadd.f32 0.0, %v1344
      %1346 = vmatmul.f32.gmra.mxu0 %v827
      %v1347 = vpop.f32.mrf.mxu0
      %v1348 = vadd.f32 0.0, %v1347
      %1349 = vmatmul.f32.gmra.mxu0 %v829
      %v1350 = vpop.f32.mrf.mxu0
      %v1351 = vadd.f32 0.0, %v1350
      %1352 = vmatmul.f32.gmra.mxu0 %v831
      %v1353 = vpop.f32.mrf.mxu0
      %v1354 = vadd.f32 0.0, %v1353
      %1355 = vmatmul.f32.gmra.mxu0 %v833
      %v1356 = vpop.f32.mrf.mxu0
      %v1357 = vadd.f32 0.0, %v1356
      %1358 = vmatmul.f32.gmra.mxu0 %v835
      %v1359 = vpop.f32.mrf.mxu0
      %v1360 = vadd.f32 0.0, %v1359
      %1361 = vmatmul.f32.gmra.mxu0 %v1247
      %v1362 = vpop.f32.mrf.mxu0
      %v1363 = vadd.f32 0.0, %v1362
      %1364 = vmatmul.f32.gmra.mxu0 %v1250
      %v1365 = vpop.f32.mrf.mxu0
      %v1366 = vadd.f32 0.0, %v1365
      %1367 = vdwg.mxu0
      %v1368 = vadd.f32 %v1214, %v1273
      %v1369 = vadd.f32 %v1215, %v1276
      %v1370 = vadd.f32 %v1216, %v1279
      %v1371 = vadd.f32 %v1217, %v1282
      %v1372 = vadd.f32 %v1218, %v1285
      %v1373 = vadd.f32 %v1219, %v1288
      %v1374 = vadd.f32 %v1220, %v1291
      %v1375 = vadd.f32 %v1221, %v1294
      %v1376 = vadd.f32 %v1222, %v1297
      %v1377 = vadd.f32 %v1223, %v1300
      %v1378 = vadd.f32 %v1224, %v1303
      %v1379 = vadd.f32 %v1225, %v1306
      %v1380 = vadd.f32 %v1226, %v1309
      %v1381 = vadd.f32 %v1227, %v1312
      %v1382 = vadd.f32 %v1228, %v1315
      %v1383 = vadd.f32 %v1229, %v1318
      %v1384 = vadd.f32 %v1230, %v1321
      %v1385 = vadd.f32 %v1231, %v1324
      %v1386 = vadd.f32 %v1232, %v1327
      %v1387 = vadd.f32 %v1233, %v1330
      %v1388 = vadd.f32 %v1234, %v1333
      %v1389 = vadd.f32 %v1235, %v1336
      %v1390 = vadd.f32 %v1236, %v1339
      %v1391 = vadd.f32 %v1237, %v1342
      %v1392 = vadd.f32 %v1238, %v1345
      %v1393 = vadd.f32 %v1239, %v1348
      %v1394 = vadd.f32 %v1240, %v1351
      %v1395 = vadd.f32 %v1241, %v1354
      %v1396 = vadd.f32 %v1242, %v1357
      %v1397 = vadd.f32 %v1243, %v1360
      %v1398 = vadd.f32 %v1244, %v1363
      %v1399 = vadd.f32 %v1245, %v1366
      %v1401 = vrot.slane %v448, 1
      %v1402 = vrot.slane %v449, 1
      %v1403 = vsel %vm511, %v1401, %v1402
      %v1404 = vrot.slane %v450, 1
      %v1405 = vsel %vm511, %v1402, %v1404
      %v1406 = vsel %vm311, %v1403, 0
      %v1408 = vsel %vm311, %v1405, 0
      %v1411 = vsel %vm656, %v458, 0
      %1413 = vmatpush.msra.mxu0 0.0
      %1414 = vmatpush.msra.mxu0 0.0
      %1415 = vmatpush.msra.mxu0 0.0
      %1416 = vmatpush.msra.mxu0 0.0
      %1417 = vmatpush.msra.mxu0 0.0
      %1418 = vmatpush.msra.mxu0 0.0
      %1419 = vmatpush.msra.mxu0 0.0
      %1420 = vmatpush.msra.mxu0 0.0
      %1421 = vmatpush.msra.mxu0 0.0
      %1422 = vmatpush.msra.mxu0 0.0
      %1423 = vmatpush.msra.mxu0 0.0
      %1424 = vmatpush.msra.mxu0 0.0
      %1425 = vmatpush.msra.mxu0 0.0
      %1426 = vmatpush.msra.mxu0 0.0
      %1427 = vmatpush.msra.mxu0 0.0
      %1428 = vmatpush.msra.mxu0 %v1411
      %1429 = vmatmul.f32.gmra.mxu0 %v596
      %v1430 = vpop.f32.mrf.mxu0
      %v1431 = vadd.f32 0.0, %v1430
      %1432 = vmatmul.f32.gmra.mxu0 %v598
      %v1433 = vpop.f32.mrf.mxu0
      %v1434 = vadd.f32 0.0, %v1433
      %1435 = vmatmul.f32.gmra.mxu0 %v600
      %v1436 = vpop.f32.mrf.mxu0
      %v1437 = vadd.f32 0.0, %v1436
      %1438 = vmatmul.f32.gmra.mxu0 %v602
      %v1439 = vpop.f32.mrf.mxu0
      %v1440 = vadd.f32 0.0, %v1439
      %1441 = vmatmul.f32.gmra.mxu0 %v604
      %v1442 = vpop.f32.mrf.mxu0
      %v1443 = vadd.f32 0.0, %v1442
      %1444 = vmatmul.f32.gmra.mxu0 %v606
      %v1445 = vpop.f32.mrf.mxu0
      %v1446 = vadd.f32 0.0, %v1445
      %1447 = vmatmul.f32.gmra.mxu0 %v608
      %v1448 = vpop.f32.mrf.mxu0
      %v1449 = vadd.f32 0.0, %v1448
      %1450 = vmatmul.f32.gmra.mxu0 %v610
      %v1451 = vpop.f32.mrf.mxu0
      %v1452 = vadd.f32 0.0, %v1451
      %1453 = vmatmul.f32.gmra.mxu0 %v612
      %v1454 = vpop.f32.mrf.mxu0
      %v1455 = vadd.f32 0.0, %v1454
      %1456 = vmatmul.f32.gmra.mxu0 %v614
      %v1457 = vpop.f32.mrf.mxu0
      %v1458 = vadd.f32 0.0, %v1457
      %1459 = vmatmul.f32.gmra.mxu0 %v616
      %v1460 = vpop.f32.mrf.mxu0
      %v1461 = vadd.f32 0.0, %v1460
      %1462 = vmatmul.f32.gmra.mxu0 %v618
      %v1463 = vpop.f32.mrf.mxu0
      %v1464 = vadd.f32 0.0, %v1463
      %1465 = vmatmul.f32.gmra.mxu0 %v620
      %v1466 = vpop.f32.mrf.mxu0
      %v1467 = vadd.f32 0.0, %v1466
      %1468 = vmatmul.f32.gmra.mxu0 %v622
      %v1469 = vpop.f32.mrf.mxu0
      %v1470 = vadd.f32 0.0, %v1469
      %1471 = vmatmul.f32.gmra.mxu0 %v624
      %v1472 = vpop.f32.mrf.mxu0
      %v1473 = vadd.f32 0.0, %v1472
      %1474 = vmatmul.f32.gmra.mxu0 %v626
      %v1475 = vpop.f32.mrf.mxu0
      %v1476 = vadd.f32 0.0, %v1475
      %1477 = vmatmul.f32.gmra.mxu0 %v628
      %v1478 = vpop.f32.mrf.mxu0
      %v1479 = vadd.f32 0.0, %v1478
      %1480 = vmatmul.f32.gmra.mxu0 %v630
      %v1481 = vpop.f32.mrf.mxu0
      %v1482 = vadd.f32 0.0, %v1481
      %1483 = vmatmul.f32.gmra.mxu0 %v632
      %v1484 = vpop.f32.mrf.mxu0
      %v1485 = vadd.f32 0.0, %v1484
      %1486 = vmatmul.f32.gmra.mxu0 %v634
      %v1487 = vpop.f32.mrf.mxu0
      %v1488 = vadd.f32 0.0, %v1487
      %1489 = vmatmul.f32.gmra.mxu0 %v636
      %v1490 = vpop.f32.mrf.mxu0
      %v1491 = vadd.f32 0.0, %v1490
      %1492 = vmatmul.f32.gmra.mxu0 %v638
      %v1493 = vpop.f32.mrf.mxu0
      %v1494 = vadd.f32 0.0, %v1493
      %1495 = vmatmul.f32.gmra.mxu0 %v640
      %v1496 = vpop.f32.mrf.mxu0
      %v1497 = vadd.f32 0.0, %v1496
      %1498 = vmatmul.f32.gmra.mxu0 %v642
      %v1499 = vpop.f32.mrf.mxu0
      %v1500 = vadd.f32 0.0, %v1499
      %1501 = vmatmul.f32.gmra.mxu0 %v644
      %v1502 = vpop.f32.mrf.mxu0
      %v1503 = vadd.f32 0.0, %v1502
      %1504 = vmatmul.f32.gmra.mxu0 %v646
      %v1505 = vpop.f32.mrf.mxu0
      %v1506 = vadd.f32 0.0, %v1505
      %1507 = vmatmul.f32.gmra.mxu0 %v648
      %v1508 = vpop.f32.mrf.mxu0
      %v1509 = vadd.f32 0.0, %v1508
      %1510 = vmatmul.f32.gmra.mxu0 %v650
      %v1511 = vpop.f32.mrf.mxu0
      %v1512 = vadd.f32 0.0, %v1511
      %1513 = vmatmul.f32.gmra.mxu0 %v652
      %v1514 = vpop.f32.mrf.mxu0
      %v1515 = vadd.f32 0.0, %v1514
      %1516 = vmatmul.f32.gmra.mxu0 %v654
      %v1517 = vpop.f32.mrf.mxu0
      %v1518 = vadd.f32 0.0, %v1517
      %1519 = vmatmul.f32.gmra.mxu0 %v1406
      %v1520 = vpop.f32.mrf.mxu0
      %v1521 = vadd.f32 0.0, %v1520
      %1522 = vmatmul.f32.gmra.mxu0 %v1408
      %v1523 = vpop.f32.mrf.mxu0
      %v1524 = vadd.f32 0.0, %v1523
      %1525 = vdwg.mxu0
      %v1526 = vadd.f32 %v1368, %v1431
      %v1527 = vadd.f32 %v1369, %v1434
      %v1528 = vadd.f32 %v1370, %v1437
      %v1529 = vadd.f32 %v1371, %v1440
      %v1530 = vadd.f32 %v1372, %v1443
      %v1531 = vadd.f32 %v1373, %v1446
      %v1532 = vadd.f32 %v1374, %v1449
      %v1533 = vadd.f32 %v1375, %v1452
      %v1534 = vadd.f32 %v1376, %v1455
      %v1535 = vadd.f32 %v1377, %v1458
      %v1536 = vadd.f32 %v1378, %v1461
      %v1537 = vadd.f32 %v1379, %v1464
      %v1538 = vadd.f32 %v1380, %v1467
      %v1539 = vadd.f32 %v1381, %v1470
      %v1540 = vadd.f32 %v1382, %v1473
      %v1541 = vadd.f32 %v1383, %v1476
      %v1542 = vadd.f32 %v1384, %v1479
      %v1543 = vadd.f32 %v1385, %v1482
      %v1544 = vadd.f32 %v1386, %v1485
      %v1545 = vadd.f32 %v1387, %v1488
      %v1546 = vadd.f32 %v1388, %v1491
      %v1547 = vadd.f32 %v1389, %v1494
      %v1548 = vadd.f32 %v1390, %v1497
      %v1549 = vadd.f32 %v1391, %v1500
      %v1550 = vadd.f32 %v1392, %v1503
      %v1551 = vadd.f32 %v1393, %v1506
      %v1552 = vadd.f32 %v1394, %v1509
      %v1553 = vadd.f32 %v1395, %v1512
      %v1554 = vadd.f32 %v1396, %v1515
      %v1555 = vadd.f32 %v1397, %v1518
      %v1556 = vadd.f32 %v1398, %v1521
      %v1557 = vadd.f32 %v1399, %v1524
      %v1558 = vrot.slane %v448, 2
      %v1559 = vrot.slane %v449, 2
      %v1560 = vsel %vm953, %v1558, %v1559
      %v1561 = vrot.slane %v450, 2
      %v1562 = vsel %vm953, %v1559, %v1561
      %v1563 = vsel %vm311, %v1560, 0
      %v1565 = vsel %vm311, %v1562, 0
      %v1568 = vsel %vm656, %v459, 0
      %1570 = vmatpush.msra.mxu0 0.0
      %1571 = vmatpush.msra.mxu0 0.0
      %1572 = vmatpush.msra.mxu0 0.0
      %1573 = vmatpush.msra.mxu0 0.0
      %1574 = vmatpush.msra.mxu0 0.0
      %1575 = vmatpush.msra.mxu0 0.0
      %1576 = vmatpush.msra.mxu0 0.0
      %1577 = vmatpush.msra.mxu0 0.0
      %1578 = vmatpush.msra.mxu0 0.0
      %1579 = vmatpush.msra.mxu0 0.0
      %1580 = vmatpush.msra.mxu0 0.0
      %1581 = vmatpush.msra.mxu0 0.0
      %1582 = vmatpush.msra.mxu0 0.0
      %1583 = vmatpush.msra.mxu0 0.0
      %1584 = vmatpush.msra.mxu0 0.0
      %1585 = vmatpush.msra.mxu0 %v1568
      %1586 = vmatmul.f32.gmra.mxu0 %v1038
      %v1587 = vpop.f32.mrf.mxu0
      %v1588 = vadd.f32 0.0, %v1587
      %1589 = vmatmul.f32.gmra.mxu0 %v1040
      %v1590 = vpop.f32.mrf.mxu0
      %v1591 = vadd.f32 0.0, %v1590
      %1592 = vmatmul.f32.gmra.mxu0 %v1042
      %v1593 = vpop.f32.mrf.mxu0
      %v1594 = vadd.f32 0.0, %v1593
      %1595 = vmatmul.f32.gmra.mxu0 %v1044
      %v1596 = vpop.f32.mrf.mxu0
      %v1597 = vadd.f32 0.0, %v1596
      %1598 = vmatmul.f32.gmra.mxu0 %v1046
      %v1599 = vpop.f32.mrf.mxu0
      %v1600 = vadd.f32 0.0, %v1599
      %1601 = vmatmul.f32.gmra.mxu0 %v1048
      %v1602 = vpop.f32.mrf.mxu0
      %v1603 = vadd.f32 0.0, %v1602
      %1604 = vmatmul.f32.gmra.mxu0 %v1050
      %v1605 = vpop.f32.mrf.mxu0
      %v1606 = vadd.f32 0.0, %v1605
      %1607 = vmatmul.f32.gmra.mxu0 %v1052
      %v1608 = vpop.f32.mrf.mxu0
      %v1609 = vadd.f32 0.0, %v1608
      %1610 = vmatmul.f32.gmra.mxu0 %v1054
      %v1611 = vpop.f32.mrf.mxu0
      %v1612 = vadd.f32 0.0, %v1611
      %1613 = vmatmul.f32.gmra.mxu0 %v1056
      %v1614 = vpop.f32.mrf.mxu0
      %v1615 = vadd.f32 0.0, %v1614
      %1616 = vmatmul.f32.gmra.mxu0 %v1058
      %v1617 = vpop.f32.mrf.mxu0
      %v1618 = vadd.f32 0.0, %v1617
      %1619 = vmatmul.f32.gmra.mxu0 %v1060
      %v1620 = vpop.f32.mrf.mxu0
      %v1621 = vadd.f32 0.0, %v1620
      %1622 = vmatmul.f32.gmra.mxu0 %v1062
      %v1623 = vpop.f32.mrf.mxu0
      %v1624 = vadd.f32 0.0, %v1623
      %1625 = vmatmul.f32.gmra.mxu0 %v1064
      %v1626 = vpop.f32.mrf.mxu0
      %v1627 = vadd.f32 0.0, %v1626
      %1628 = vmatmul.f32.gmra.mxu0 %v1066
      %v1629 = vpop.f32.mrf.mxu0
      %v1630 = vadd.f32 0.0, %v1629
      %1631 = vmatmul.f32.gmra.mxu0 %v1068
      %v1632 = vpop.f32.mrf.mxu0
      %v1633 = vadd.f32 0.0, %v1632
      %1634 = vmatmul.f32.gmra.mxu0 %v1070
      %v1635 = vpop.f32.mrf.mxu0
      %v1636 = vadd.f32 0.0, %v1635
      %1637 = vmatmul.f32.gmra.mxu0 %v1072
      %v1638 = vpop.f32.mrf.mxu0
      %v1639 = vadd.f32 0.0, %v1638
      %1640 = vmatmul.f32.gmra.mxu0 %v1074
      %v1641 = vpop.f32.mrf.mxu0
      %v1642 = vadd.f32 0.0, %v1641
      %1643 = vmatmul.f32.gmra.mxu0 %v1076
      %v1644 = vpop.f32.mrf.mxu0
      %v1645 = vadd.f32 0.0, %v1644
      %1646 = vmatmul.f32.gmra.mxu0 %v1078
      %v1647 = vpop.f32.mrf.mxu0
      %v1648 = vadd.f32 0.0, %v1647
      %1649 = vmatmul.f32.gmra.mxu0 %v1080
      %v1650 = vpop.f32.mrf.mxu0
      %v1651 = vadd.f32 0.0, %v1650
      %1652 = vmatmul.f32.gmra.mxu0 %v1082
      %v1653 = vpop.f32.mrf.mxu0
      %v1654 = vadd.f32 0.0, %v1653
      %1655 = vmatmul.f32.gmra.mxu0 %v1084
      %v1656 = vpop.f32.mrf.mxu0
      %v1657 = vadd.f32 0.0, %v1656
      %1658 = vmatmul.f32.gmra.mxu0 %v1086
      %v1659 = vpop.f32.mrf.mxu0
      %v1660 = vadd.f32 0.0, %v1659
      %1661 = vmatmul.f32.gmra.mxu0 %v1088
      %v1662 = vpop.f32.mrf.mxu0
      %v1663 = vadd.f32 0.0, %v1662
      %1664 = vmatmul.f32.gmra.mxu0 %v1090
      %v1665 = vpop.f32.mrf.mxu0
      %v1666 = vadd.f32 0.0, %v1665
      %1667 = vmatmul.f32.gmra.mxu0 %v1092
      %v1668 = vpop.f32.mrf.mxu0
      %v1669 = vadd.f32 0.0, %v1668
      %1670 = vmatmul.f32.gmra.mxu0 %v1094
      %v1671 = vpop.f32.mrf.mxu0
      %v1672 = vadd.f32 0.0, %v1671
      %1673 = vmatmul.f32.gmra.mxu0 %v1096
      %v1674 = vpop.f32.mrf.mxu0
      %v1675 = vadd.f32 0.0, %v1674
      %1676 = vmatmul.f32.gmra.mxu0 %v1563
      %v1677 = vpop.f32.mrf.mxu0
      %v1678 = vadd.f32 0.0, %v1677
      %1679 = vmatmul.f32.gmra.mxu0 %v1565
      %v1680 = vpop.f32.mrf.mxu0
      %v1681 = vadd.f32 0.0, %v1680
      %1682 = vdwg.mxu0
      %v1683 = vadd.f32 %v1526, %v1588
      %v1684 = vadd.f32 %v1527, %v1591
      %v1685 = vadd.f32 %v1528, %v1594
      %v1686 = vadd.f32 %v1529, %v1597
      %v1687 = vadd.f32 %v1530, %v1600
      %v1688 = vadd.f32 %v1531, %v1603
      %v1689 = vadd.f32 %v1532, %v1606
      %v1690 = vadd.f32 %v1533, %v1609
      %v1691 = vadd.f32 %v1534, %v1612
      %v1692 = vadd.f32 %v1535, %v1615
      %v1693 = vadd.f32 %v1536, %v1618
      %v1694 = vadd.f32 %v1537, %v1621
      %v1695 = vadd.f32 %v1538, %v1624
      %v1696 = vadd.f32 %v1539, %v1627
      %v1697 = vadd.f32 %v1540, %v1630
      %v1698 = vadd.f32 %v1541, %v1633
      %v1699 = vadd.f32 %v1542, %v1636
      %v1700 = vadd.f32 %v1543, %v1639
      %v1701 = vadd.f32 %v1544, %v1642
      %v1702 = vadd.f32 %v1545, %v1645
      %v1703 = vadd.f32 %v1546, %v1648
      %v1704 = vadd.f32 %v1547, %v1651
      %v1705 = vadd.f32 %v1548, %v1654
      %v1706 = vadd.f32 %v1549, %v1657
      %v1707 = vadd.f32 %v1550, %v1660
      %v1708 = vadd.f32 %v1551, %v1663
      %v1709 = vadd.f32 %v1552, %v1666
      %v1710 = vadd.f32 %v1553, %v1669
      %v1711 = vadd.f32 %v1554, %v1672
      %v1712 = vadd.f32 %v1555, %v1675
      %v1713 = vadd.f32 %v1556, %v1678
      %v1714 = vadd.f32 %v1557, %v1681
      %v1716 = vsel %vm311, %v451, 0
      %v1719 = vsel %vm311, %v452, 0
      %v1722 = vsel %vm656, %v460, 0
      %1724 = vmatpush.msra.mxu0 0.0
      %1725 = vmatpush.msra.mxu0 0.0
      %1726 = vmatpush.msra.mxu0 0.0
      %1727 = vmatpush.msra.mxu0 0.0
      %1728 = vmatpush.msra.mxu0 0.0
      %1729 = vmatpush.msra.mxu0 0.0
      %1730 = vmatpush.msra.mxu0 0.0
      %1731 = vmatpush.msra.mxu0 0.0
      %1732 = vmatpush.msra.mxu0 0.0
      %1733 = vmatpush.msra.mxu0 0.0
      %1734 = vmatpush.msra.mxu0 0.0
      %1735 = vmatpush.msra.mxu0 0.0
      %1736 = vmatpush.msra.mxu0 0.0
      %1737 = vmatpush.msra.mxu0 0.0
      %1738 = vmatpush.msra.mxu0 0.0
      %1739 = vmatpush.msra.mxu0 %v1722
      %1740 = vmatmul.f32.gmra.mxu0 %v781
      %v1741 = vpop.f32.mrf.mxu0
      %v1742 = vadd.f32 0.0, %v1741
      %1743 = vmatmul.f32.gmra.mxu0 %v783
      %v1744 = vpop.f32.mrf.mxu0
      %v1745 = vadd.f32 0.0, %v1744
      %1746 = vmatmul.f32.gmra.mxu0 %v785
      %v1747 = vpop.f32.mrf.mxu0
      %v1748 = vadd.f32 0.0, %v1747
      %1749 = vmatmul.f32.gmra.mxu0 %v787
      %v1750 = vpop.f32.mrf.mxu0
      %v1751 = vadd.f32 0.0, %v1750
      %1752 = vmatmul.f32.gmra.mxu0 %v789
      %v1753 = vpop.f32.mrf.mxu0
      %v1754 = vadd.f32 0.0, %v1753
      %1755 = vmatmul.f32.gmra.mxu0 %v791
      %v1756 = vpop.f32.mrf.mxu0
      %v1757 = vadd.f32 0.0, %v1756
      %1758 = vmatmul.f32.gmra.mxu0 %v793
      %v1759 = vpop.f32.mrf.mxu0
      %v1760 = vadd.f32 0.0, %v1759
      %1761 = vmatmul.f32.gmra.mxu0 %v795
      %v1762 = vpop.f32.mrf.mxu0
      %v1763 = vadd.f32 0.0, %v1762
      %1764 = vmatmul.f32.gmra.mxu0 %v797
      %v1765 = vpop.f32.mrf.mxu0
      %v1766 = vadd.f32 0.0, %v1765
      %1767 = vmatmul.f32.gmra.mxu0 %v799
      %v1768 = vpop.f32.mrf.mxu0
      %v1769 = vadd.f32 0.0, %v1768
      %1770 = vmatmul.f32.gmra.mxu0 %v801
      %v1771 = vpop.f32.mrf.mxu0
      %v1772 = vadd.f32 0.0, %v1771
      %1773 = vmatmul.f32.gmra.mxu0 %v803
      %v1774 = vpop.f32.mrf.mxu0
      %v1775 = vadd.f32 0.0, %v1774
      %1776 = vmatmul.f32.gmra.mxu0 %v805
      %v1777 = vpop.f32.mrf.mxu0
      %v1778 = vadd.f32 0.0, %v1777
      %1779 = vmatmul.f32.gmra.mxu0 %v807
      %v1780 = vpop.f32.mrf.mxu0
      %v1781 = vadd.f32 0.0, %v1780
      %1782 = vmatmul.f32.gmra.mxu0 %v809
      %v1783 = vpop.f32.mrf.mxu0
      %v1784 = vadd.f32 0.0, %v1783
      %1785 = vmatmul.f32.gmra.mxu0 %v811
      %v1786 = vpop.f32.mrf.mxu0
      %v1787 = vadd.f32 0.0, %v1786
      %1788 = vmatmul.f32.gmra.mxu0 %v813
      %v1789 = vpop.f32.mrf.mxu0
      %v1790 = vadd.f32 0.0, %v1789
      %1791 = vmatmul.f32.gmra.mxu0 %v815
      %v1792 = vpop.f32.mrf.mxu0
      %v1793 = vadd.f32 0.0, %v1792
      %1794 = vmatmul.f32.gmra.mxu0 %v817
      %v1795 = vpop.f32.mrf.mxu0
      %v1796 = vadd.f32 0.0, %v1795
      %1797 = vmatmul.f32.gmra.mxu0 %v819
      %v1798 = vpop.f32.mrf.mxu0
      %v1799 = vadd.f32 0.0, %v1798
      %1800 = vmatmul.f32.gmra.mxu0 %v821
      %v1801 = vpop.f32.mrf.mxu0
      %v1802 = vadd.f32 0.0, %v1801
      %1803 = vmatmul.f32.gmra.mxu0 %v823
      %v1804 = vpop.f32.mrf.mxu0
      %v1805 = vadd.f32 0.0, %v1804
      %1806 = vmatmul.f32.gmra.mxu0 %v825
      %v1807 = vpop.f32.mrf.mxu0
      %v1808 = vadd.f32 0.0, %v1807
      %1809 = vmatmul.f32.gmra.mxu0 %v827
      %v1810 = vpop.f32.mrf.mxu0
      %v1811 = vadd.f32 0.0, %v1810
      %1812 = vmatmul.f32.gmra.mxu0 %v829
      %v1813 = vpop.f32.mrf.mxu0
      %v1814 = vadd.f32 0.0, %v1813
      %1815 = vmatmul.f32.gmra.mxu0 %v831
      %v1816 = vpop.f32.mrf.mxu0
      %v1817 = vadd.f32 0.0, %v1816
      %1818 = vmatmul.f32.gmra.mxu0 %v833
      %v1819 = vpop.f32.mrf.mxu0
      %v1820 = vadd.f32 0.0, %v1819
      %1821 = vmatmul.f32.gmra.mxu0 %v835
      %v1822 = vpop.f32.mrf.mxu0
      %v1823 = vadd.f32 0.0, %v1822
      %1824 = vmatmul.f32.gmra.mxu0 %v1247
      %v1825 = vpop.f32.mrf.mxu0
      %v1826 = vadd.f32 0.0, %v1825
      %1827 = vmatmul.f32.gmra.mxu0 %v1250
      %v1828 = vpop.f32.mrf.mxu0
      %v1829 = vadd.f32 0.0, %v1828
      %1830 = vmatmul.f32.gmra.mxu0 %v1716
      %v1831 = vpop.f32.mrf.mxu0
      %v1832 = vadd.f32 0.0, %v1831
      %1833 = vmatmul.f32.gmra.mxu0 %v1719
      %v1834 = vpop.f32.mrf.mxu0
      %v1835 = vadd.f32 0.0, %v1834
      %1836 = vdwg.mxu0
      %v1837 = vadd.f32 %v1683, %v1742
      %v1838 = vadd.f32 %v1684, %v1745
      %v1839 = vadd.f32 %v1685, %v1748
      %v1840 = vadd.f32 %v1686, %v1751
      %v1841 = vadd.f32 %v1687, %v1754
      %v1842 = vadd.f32 %v1688, %v1757
      %v1843 = vadd.f32 %v1689, %v1760
      %v1844 = vadd.f32 %v1690, %v1763
      %v1845 = vadd.f32 %v1691, %v1766
      %v1846 = vadd.f32 %v1692, %v1769
      %v1847 = vadd.f32 %v1693, %v1772
      %v1848 = vadd.f32 %v1694, %v1775
      %v1849 = vadd.f32 %v1695, %v1778
      %v1850 = vadd.f32 %v1696, %v1781
      %v1851 = vadd.f32 %v1697, %v1784
      %v1852 = vadd.f32 %v1698, %v1787
      %v1853 = vadd.f32 %v1699, %v1790
      %v1854 = vadd.f32 %v1700, %v1793
      %v1855 = vadd.f32 %v1701, %v1796
      %v1856 = vadd.f32 %v1702, %v1799
      %v1857 = vadd.f32 %v1703, %v1802
      %v1858 = vadd.f32 %v1704, %v1805
      %v1859 = vadd.f32 %v1705, %v1808
      %v1860 = vadd.f32 %v1706, %v1811
      %v1861 = vadd.f32 %v1707, %v1814
      %v1862 = vadd.f32 %v1708, %v1817
      %v1863 = vadd.f32 %v1709, %v1820
      %v1864 = vadd.f32 %v1710, %v1823
      %v1865 = vadd.f32 %v1711, %v1826
      %v1866 = vadd.f32 %v1712, %v1829
      %v1867 = vadd.f32 %v1713, %v1832
      %v1868 = vadd.f32 %v1714, %v1835
      %v1870 = vrot.slane %v451, 1
      %v1871 = vrot.slane %v452, 1
      %v1872 = vsel %vm511, %v1870, %v1871
      %v1873 = vrot.slane %v453, 1
      %v1874 = vsel %vm511, %v1871, %v1873
      %v1875 = vsel %vm311, %v1872, 0
      %v1877 = vsel %vm311, %v1874, 0
      %v1880 = vsel %vm656, %v461, 0
      %1882 = vmatpush.msra.mxu0 0.0
      %1883 = vmatpush.msra.mxu0 0.0
      %1884 = vmatpush.msra.mxu0 0.0
      %1885 = vmatpush.msra.mxu0 0.0
      %1886 = vmatpush.msra.mxu0 0.0
      %1887 = vmatpush.msra.mxu0 0.0
      %1888 = vmatpush.msra.mxu0 0.0
      %1889 = vmatpush.msra.mxu0 0.0
      %1890 = vmatpush.msra.mxu0 0.0
      %1891 = vmatpush.msra.mxu0 0.0
      %1892 = vmatpush.msra.mxu0 0.0
      %1893 = vmatpush.msra.mxu0 0.0
      %1894 = vmatpush.msra.mxu0 0.0
      %1895 = vmatpush.msra.mxu0 0.0
      %1896 = vmatpush.msra.mxu0 0.0
      %1897 = vmatpush.msra.mxu0 %v1880
      %1898 = vmatmul.f32.gmra.mxu0 %v600
      %v1899 = vpop.f32.mrf.mxu0
      %v1900 = vadd.f32 0.0, %v1899
      %1901 = vmatmul.f32.gmra.mxu0 %v602
      %v1902 = vpop.f32.mrf.mxu0
      %v1903 = vadd.f32 0.0, %v1902
      %1904 = vmatmul.f32.gmra.mxu0 %v604
      %v1905 = vpop.f32.mrf.mxu0
      %v1906 = vadd.f32 0.0, %v1905
      %1907 = vmatmul.f32.gmra.mxu0 %v606
      %v1908 = vpop.f32.mrf.mxu0
      %v1909 = vadd.f32 0.0, %v1908
      %1910 = vmatmul.f32.gmra.mxu0 %v608
      %v1911 = vpop.f32.mrf.mxu0
      %v1912 = vadd.f32 0.0, %v1911
      %1913 = vmatmul.f32.gmra.mxu0 %v610
      %v1914 = vpop.f32.mrf.mxu0
      %v1915 = vadd.f32 0.0, %v1914
      %1916 = vmatmul.f32.gmra.mxu0 %v612
      %v1917 = vpop.f32.mrf.mxu0
      %v1918 = vadd.f32 0.0, %v1917
      %1919 = vmatmul.f32.gmra.mxu0 %v614
      %v1920 = vpop.f32.mrf.mxu0
      %v1921 = vadd.f32 0.0, %v1920
      %1922 = vmatmul.f32.gmra.mxu0 %v616
      %v1923 = vpop.f32.mrf.mxu0
      %v1924 = vadd.f32 0.0, %v1923
      %1925 = vmatmul.f32.gmra.mxu0 %v618
      %v1926 = vpop.f32.mrf.mxu0
      %v1927 = vadd.f32 0.0, %v1926
      %1928 = vmatmul.f32.gmra.mxu0 %v620
      %v1929 = vpop.f32.mrf.mxu0
      %v1930 = vadd.f32 0.0, %v1929
      %1931 = vmatmul.f32.gmra.mxu0 %v622
      %v1932 = vpop.f32.mrf.mxu0
      %v1933 = vadd.f32 0.0, %v1932
      %1934 = vmatmul.f32.gmra.mxu0 %v624
      %v1935 = vpop.f32.mrf.mxu0
      %v1936 = vadd.f32 0.0, %v1935
      %1937 = vmatmul.f32.gmra.mxu0 %v626
      %v1938 = vpop.f32.mrf.mxu0
      %v1939 = vadd.f32 0.0, %v1938
      %1940 = vmatmul.f32.gmra.mxu0 %v628
      %v1941 = vpop.f32.mrf.mxu0
      %v1942 = vadd.f32 0.0, %v1941
      %1943 = vmatmul.f32.gmra.mxu0 %v630
      %v1944 = vpop.f32.mrf.mxu0
      %v1945 = vadd.f32 0.0, %v1944
      %1946 = vmatmul.f32.gmra.mxu0 %v632
      %v1947 = vpop.f32.mrf.mxu0
      %v1948 = vadd.f32 0.0, %v1947
      %1949 = vmatmul.f32.gmra.mxu0 %v634
      %v1950 = vpop.f32.mrf.mxu0
      %v1951 = vadd.f32 0.0, %v1950
      %1952 = vmatmul.f32.gmra.mxu0 %v636
      %v1953 = vpop.f32.mrf.mxu0
      %v1954 = vadd.f32 0.0, %v1953
      %1955 = vmatmul.f32.gmra.mxu0 %v638
      %v1956 = vpop.f32.mrf.mxu0
      %v1957 = vadd.f32 0.0, %v1956
      %1958 = vmatmul.f32.gmra.mxu0 %v640
      %v1959 = vpop.f32.mrf.mxu0
      %v1960 = vadd.f32 0.0, %v1959
      %1961 = vmatmul.f32.gmra.mxu0 %v642
      %v1962 = vpop.f32.mrf.mxu0
      %v1963 = vadd.f32 0.0, %v1962
      %1964 = vmatmul.f32.gmra.mxu0 %v644
      %v1965 = vpop.f32.mrf.mxu0
      %v1966 = vadd.f32 0.0, %v1965
      %1967 = vmatmul.f32.gmra.mxu0 %v646
      %v1968 = vpop.f32.mrf.mxu0
      %v1969 = vadd.f32 0.0, %v1968
      %1970 = vmatmul.f32.gmra.mxu0 %v648
      %v1971 = vpop.f32.mrf.mxu0
      %v1972 = vadd.f32 0.0, %v1971
      %1973 = vmatmul.f32.gmra.mxu0 %v650
      %v1974 = vpop.f32.mrf.mxu0
      %v1975 = vadd.f32 0.0, %v1974
      %1976 = vmatmul.f32.gmra.mxu0 %v652
      %v1977 = vpop.f32.mrf.mxu0
      %v1978 = vadd.f32 0.0, %v1977
      %1979 = vmatmul.f32.gmra.mxu0 %v654
      %v1980 = vpop.f32.mrf.mxu0
      %v1981 = vadd.f32 0.0, %v1980
      %1982 = vmatmul.f32.gmra.mxu0 %v1406
      %v1983 = vpop.f32.mrf.mxu0
      %v1984 = vadd.f32 0.0, %v1983
      %1985 = vmatmul.f32.gmra.mxu0 %v1408
      %v1986 = vpop.f32.mrf.mxu0
      %v1987 = vadd.f32 0.0, %v1986
      %1988 = vmatmul.f32.gmra.mxu0 %v1875
      %v1989 = vpop.f32.mrf.mxu0
      %v1990 = vadd.f32 0.0, %v1989
      %1991 = vmatmul.f32.gmra.mxu0 %v1877
      %v1992 = vpop.f32.mrf.mxu0
      %v1993 = vadd.f32 0.0, %v1992
      %1994 = vdwg.mxu0
      %v1995 = vadd.f32 %v1837, %v1900
      %v1996 = vadd.f32 %v1838, %v1903
      %v1997 = vadd.f32 %v1839, %v1906
      %v1998 = vadd.f32 %v1840, %v1909
      %v1999 = vadd.f32 %v1841, %v1912
      %v2000 = vadd.f32 %v1842, %v1915
      %v2001 = vadd.f32 %v1843, %v1918
      %v2002 = vadd.f32 %v1844, %v1921
      %v2003 = vadd.f32 %v1845, %v1924
      %v2004 = vadd.f32 %v1846, %v1927
      %v2005 = vadd.f32 %v1847, %v1930
      %v2006 = vadd.f32 %v1848, %v1933
      %v2007 = vadd.f32 %v1849, %v1936
      %v2008 = vadd.f32 %v1850, %v1939
      %v2009 = vadd.f32 %v1851, %v1942
      %v2010 = vadd.f32 %v1852, %v1945
      %v2011 = vadd.f32 %v1853, %v1948
      %v2012 = vadd.f32 %v1854, %v1951
      %v2013 = vadd.f32 %v1855, %v1954
      %v2014 = vadd.f32 %v1856, %v1957
      %v2015 = vadd.f32 %v1857, %v1960
      %v2016 = vadd.f32 %v1858, %v1963
      %v2017 = vadd.f32 %v1859, %v1966
      %v2018 = vadd.f32 %v1860, %v1969
      %v2019 = vadd.f32 %v1861, %v1972
      %v2020 = vadd.f32 %v1862, %v1975
      %v2021 = vadd.f32 %v1863, %v1978
      %v2022 = vadd.f32 %v1864, %v1981
      %v2023 = vadd.f32 %v1865, %v1984
      %v2024 = vadd.f32 %v1866, %v1987
      %v2025 = vadd.f32 %v1867, %v1990
      %v2026 = vadd.f32 %v1868, %v1993
      %v2027 = vrot.slane %v451, 2
      %v2028 = vrot.slane %v452, 2
      %v2029 = vsel %vm953, %v2027, %v2028
      %v2030 = vrot.slane %v453, 2
      %v2031 = vsel %vm953, %v2028, %v2030
      %v2032 = vsel %vm311, %v2029, 0
      %v2034 = vsel %vm311, %v2031, 0
      %v2037 = vsel %vm656, %v462, 0
      %2039 = vmatpush.msra.mxu0 0.0
      %2040 = vmatpush.msra.mxu0 0.0
      %2041 = vmatpush.msra.mxu0 0.0
      %2042 = vmatpush.msra.mxu0 0.0
      %2043 = vmatpush.msra.mxu0 0.0
      %2044 = vmatpush.msra.mxu0 0.0
      %2045 = vmatpush.msra.mxu0 0.0
      %2046 = vmatpush.msra.mxu0 0.0
      %2047 = vmatpush.msra.mxu0 0.0
      %2048 = vmatpush.msra.mxu0 0.0
      %2049 = vmatpush.msra.mxu0 0.0
      %2050 = vmatpush.msra.mxu0 0.0
      %2051 = vmatpush.msra.mxu0 0.0
      %2052 = vmatpush.msra.mxu0 0.0
      %2053 = vmatpush.msra.mxu0 0.0
      %2054 = vmatpush.msra.mxu0 %v2037
      %2055 = vmatmul.f32.gmra.mxu0 %v1042
      %v2056 = vpop.f32.mrf.mxu0
      %v2057 = vadd.f32 0.0, %v2056
      %2058 = vmatmul.f32.gmra.mxu0 %v1044
      %v2059 = vpop.f32.mrf.mxu0
      %v2060 = vadd.f32 0.0, %v2059
      %2061 = vmatmul.f32.gmra.mxu0 %v1046
      %v2062 = vpop.f32.mrf.mxu0
      %v2063 = vadd.f32 0.0, %v2062
      %2064 = vmatmul.f32.gmra.mxu0 %v1048
      %v2065 = vpop.f32.mrf.mxu0
      %v2066 = vadd.f32 0.0, %v2065
      %2067 = vmatmul.f32.gmra.mxu0 %v1050
      %v2068 = vpop.f32.mrf.mxu0
      %v2069 = vadd.f32 0.0, %v2068
      %2070 = vmatmul.f32.gmra.mxu0 %v1052
      %v2071 = vpop.f32.mrf.mxu0
      %v2072 = vadd.f32 0.0, %v2071
      %2073 = vmatmul.f32.gmra.mxu0 %v1054
      %v2074 = vpop.f32.mrf.mxu0
      %v2075 = vadd.f32 0.0, %v2074
      %2076 = vmatmul.f32.gmra.mxu0 %v1056
      %v2077 = vpop.f32.mrf.mxu0
      %v2078 = vadd.f32 0.0, %v2077
      %2079 = vmatmul.f32.gmra.mxu0 %v1058
      %v2080 = vpop.f32.mrf.mxu0
      %v2081 = vadd.f32 0.0, %v2080
      %2082 = vmatmul.f32.gmra.mxu0 %v1060
      %v2083 = vpop.f32.mrf.mxu0
      %v2084 = vadd.f32 0.0, %v2083
      %2085 = vmatmul.f32.gmra.mxu0 %v1062
      %v2086 = vpop.f32.mrf.mxu0
      %v2087 = vadd.f32 0.0, %v2086
      %2088 = vmatmul.f32.gmra.mxu0 %v1064
      %v2089 = vpop.f32.mrf.mxu0
      %v2090 = vadd.f32 0.0, %v2089
      %2091 = vmatmul.f32.gmra.mxu0 %v1066
      %v2092 = vpop.f32.mrf.mxu0
      %v2093 = vadd.f32 0.0, %v2092
      %2094 = vmatmul.f32.gmra.mxu0 %v1068
      %v2095 = vpop.f32.mrf.mxu0
      %v2096 = vadd.f32 0.0, %v2095
      %2097 = vmatmul.f32.gmra.mxu0 %v1070
      %v2098 = vpop.f32.mrf.mxu0
      %v2099 = vadd.f32 0.0, %v2098
      %2100 = vmatmul.f32.gmra.mxu0 %v1072
      %v2101 = vpop.f32.mrf.mxu0
      %v2102 = vadd.f32 0.0, %v2101
      %2103 = vmatmul.f32.gmra.mxu0 %v1074
      %v2104 = vpop.f32.mrf.mxu0
      %v2105 = vadd.f32 0.0, %v2104
      %2106 = vmatmul.f32.gmra.mxu0 %v1076
      %v2107 = vpop.f32.mrf.mxu0
      %v2108 = vadd.f32 0.0, %v2107
      %2109 = vmatmul.f32.gmra.mxu0 %v1078
      %v2110 = vpop.f32.mrf.mxu0
      %v2111 = vadd.f32 0.0, %v2110
      %2112 = vmatmul.f32.gmra.mxu0 %v1080
      %v2113 = vpop.f32.mrf.mxu0
      %v2114 = vadd.f32 0.0, %v2113
      %2115 = vmatmul.f32.gmra.mxu0 %v1082
      %v2116 = vpop.f32.mrf.mxu0
      %v2117 = vadd.f32 0.0, %v2116
      %2118 = vmatmul.f32.gmra.mxu0 %v1084
      %v2119 = vpop.f32.mrf.mxu0
      %v2120 = vadd.f32 0.0, %v2119
      %2121 = vmatmul.f32.gmra.mxu0 %v1086
      %v2122 = vpop.f32.mrf.mxu0
      %v2123 = vadd.f32 0.0, %v2122
      %2124 = vmatmul.f32.gmra.mxu0 %v1088
      %v2125 = vpop.f32.mrf.mxu0
      %v2126 = vadd.f32 0.0, %v2125
      %2127 = vmatmul.f32.gmra.mxu0 %v1090
      %v2128 = vpop.f32.mrf.mxu0
      %v2129 = vadd.f32 0.0, %v2128
      %2130 = vmatmul.f32.gmra.mxu0 %v1092
      %v2131 = vpop.f32.mrf.mxu0
      %v2132 = vadd.f32 0.0, %v2131
      %2133 = vmatmul.f32.gmra.mxu0 %v1094
      %v2134 = vpop.f32.mrf.mxu0
      %v2135 = vadd.f32 0.0, %v2134
      %2136 = vmatmul.f32.gmra.mxu0 %v1096
      %v2137 = vpop.f32.mrf.mxu0
      %v2138 = vadd.f32 0.0, %v2137
      %2139 = vmatmul.f32.gmra.mxu0 %v1563
      %v2140 = vpop.f32.mrf.mxu0
      %v2141 = vadd.f32 0.0, %v2140
      %2142 = vmatmul.f32.gmra.mxu0 %v1565
      %v2143 = vpop.f32.mrf.mxu0
      %v2144 = vadd.f32 0.0, %v2143
      %2145 = vmatmul.f32.gmra.mxu0 %v2032
      %v2146 = vpop.f32.mrf.mxu0
      %v2147 = vadd.f32 0.0, %v2146
      %2148 = vmatmul.f32.gmra.mxu0 %v2034
      %v2149 = vpop.f32.mrf.mxu0
      %v2150 = vadd.f32 0.0, %v2149
      %2151 = vdwg.mxu0
      %v2152 = vadd.f32 %v1995, %v2057
      %v2153 = vadd.f32 %v1996, %v2060
      %v2154 = vadd.f32 %v1997, %v2063
      %v2155 = vadd.f32 %v1998, %v2066
      %v2156 = vadd.f32 %v1999, %v2069
      %v2157 = vadd.f32 %v2000, %v2072
      %v2158 = vadd.f32 %v2001, %v2075
      %v2159 = vadd.f32 %v2002, %v2078
      %v2160 = vadd.f32 %v2003, %v2081
      %v2161 = vadd.f32 %v2004, %v2084
      %v2162 = vadd.f32 %v2005, %v2087
      %v2163 = vadd.f32 %v2006, %v2090
      %v2164 = vadd.f32 %v2007, %v2093
      %v2165 = vadd.f32 %v2008, %v2096
      %v2166 = vadd.f32 %v2009, %v2099
      %v2167 = vadd.f32 %v2010, %v2102
      %v2168 = vadd.f32 %v2011, %v2105
      %v2169 = vadd.f32 %v2012, %v2108
      %v2170 = vadd.f32 %v2013, %v2111
      %v2171 = vadd.f32 %v2014, %v2114
      %v2172 = vadd.f32 %v2015, %v2117
      %v2173 = vadd.f32 %v2016, %v2120
      %v2174 = vadd.f32 %v2017, %v2123
      %v2175 = vadd.f32 %v2018, %v2126
      %v2176 = vadd.f32 %v2019, %v2129
      %v2177 = vadd.f32 %v2020, %v2132
      %v2178 = vadd.f32 %v2021, %v2135
      %v2179 = vadd.f32 %v2022, %v2138
      %v2180 = vadd.f32 %v2023, %v2141
      %v2181 = vadd.f32 %v2024, %v2144
      %v2182 = vadd.f32 %v2025, %v2147
      %v2183 = vadd.f32 %v2026, %v2150
      %v2184 = vld [vmem:[%s3] sm:$0x1]
      %v2186 = vperm.slane %v2184, 0
      %v2188 = vmul.f32 %v2152, %v2186
      %v2189 = vmul.f32 %v2153, %v2186
      %v2190 = vmul.f32 %v2154, %v2186
      %v2191 = vmul.f32 %v2155, %v2186
      %v2192 = vmul.f32 %v2156, %v2186
      %v2193 = vmul.f32 %v2157, %v2186
      %v2194 = vmul.f32 %v2158, %v2186
      %v2195 = vmul.f32 %v2159, %v2186
      %v2196 = vmul.f32 %v2160, %v2186
      %v2197 = vmul.f32 %v2161, %v2186
      %v2198 = vmul.f32 %v2162, %v2186
      %v2199 = vmul.f32 %v2163, %v2186
      %v2200 = vmul.f32 %v2164, %v2186
      %v2201 = vmul.f32 %v2165, %v2186
      %v2202 = vmul.f32 %v2166, %v2186
      %v2203 = vmul.f32 %v2167, %v2186
      %v2204 = vmul.f32 %v2168, %v2186
      %v2205 = vmul.f32 %v2169, %v2186
      %v2206 = vmul.f32 %v2170, %v2186
      %v2207 = vmul.f32 %v2171, %v2186
      %v2208 = vmul.f32 %v2172, %v2186
      %v2209 = vmul.f32 %v2173, %v2186
      %v2210 = vmul.f32 %v2174, %v2186
      %v2211 = vmul.f32 %v2175, %v2186
      %v2212 = vmul.f32 %v2176, %v2186
      %v2213 = vmul.f32 %v2177, %v2186
      %v2214 = vmul.f32 %v2178, %v2186
      %v2215 = vmul.f32 %v2179, %v2186
      %v2216 = vmul.f32 %v2180, %v2186
      %v2217 = vmul.f32 %v2181, %v2186
      %v2218 = vmul.f32 %v2182, %v2186
      %v2219 = vmul.f32 %v2183, %v2186
      %v2220 = vld [vmem:[%s4] sm:$0x1]
      %v2222 = vperm.slane %v2220, 0
      %v2224 = vadd.f32 %v2188, %v2222
      %v2225 = vadd.f32 %v2189, %v2222
      %v2226 = vadd.f32 %v2190, %v2222
      %v2227 = vadd.f32 %v2191, %v2222
      %v2228 = vadd.f32 %v2192, %v2222
      %v2229 = vadd.f32 %v2193, %v2222
      %v2230 = vadd.f32 %v2194, %v2222
      %v2231 = vadd.f32 %v2195, %v2222
      %v2232 = vadd.f32 %v2196, %v2222
      %v2233 = vadd.f32 %v2197, %v2222
      %v2234 = vadd.f32 %v2198, %v2222
      %v2235 = vadd.f32 %v2199, %v2222
      %v2236 = vadd.f32 %v2200, %v2222
      %v2237 = vadd.f32 %v2201, %v2222
      %v2238 = vadd.f32 %v2202, %v2222
      %v2239 = vadd.f32 %v2203, %v2222
      %v2240 = vadd.f32 %v2204, %v2222
      %v2241 = vadd.f32 %v2205, %v2222
      %v2242 = vadd.f32 %v2206, %v2222
      %v2243 = vadd.f32 %v2207, %v2222
      %v2244 = vadd.f32 %v2208, %v2222
      %v2245 = vadd.f32 %v2209, %v2222
      %v2246 = vadd.f32 %v2210, %v2222
      %v2247 = vadd.f32 %v2211, %v2222
      %v2248 = vadd.f32 %v2212, %v2222
      %v2249 = vadd.f32 %v2213, %v2222
      %v2250 = vadd.f32 %v2214, %v2222
      %v2251 = vadd.f32 %v2215, %v2222
      %v2252 = vadd.f32 %v2216, %v2222
      %v2253 = vadd.f32 %v2217, %v2222
      %v2254 = vadd.f32 %v2218, %v2222
      %v2255 = vadd.f32 %v2219, %v2222
      %v2256 = vmax.f32 %v2224, 0.0
      %v2257 = vmax.f32 %v2225, 0.0
      %v2258 = vmax.f32 %v2226, 0.0
      %v2259 = vmax.f32 %v2227, 0.0
      %v2260 = vmax.f32 %v2228, 0.0
      %v2261 = vmax.f32 %v2229, 0.0
      %v2262 = vmax.f32 %v2230, 0.0
      %v2263 = vmax.f32 %v2231, 0.0
      %v2264 = vmax.f32 %v2232, 0.0
      %v2265 = vmax.f32 %v2233, 0.0
      %v2266 = vmax.f32 %v2234, 0.0
      %v2267 = vmax.f32 %v2235, 0.0
      %v2268 = vmax.f32 %v2236, 0.0
      %v2269 = vmax.f32 %v2237, 0.0
      %v2270 = vmax.f32 %v2238, 0.0
      %v2271 = vmax.f32 %v2239, 0.0
      %v2272 = vmax.f32 %v2240, 0.0
      %v2273 = vmax.f32 %v2241, 0.0
      %v2274 = vmax.f32 %v2242, 0.0
      %v2275 = vmax.f32 %v2243, 0.0
      %v2276 = vmax.f32 %v2244, 0.0
      %v2277 = vmax.f32 %v2245, 0.0
      %v2278 = vmax.f32 %v2246, 0.0
      %v2279 = vmax.f32 %v2247, 0.0
      %v2280 = vmax.f32 %v2248, 0.0
      %v2281 = vmax.f32 %v2249, 0.0
      %v2282 = vmax.f32 %v2250, 0.0
      %v2283 = vmax.f32 %v2251, 0.0
      %v2284 = vmax.f32 %v2252, 0.0
      %v2285 = vmax.f32 %v2253, 0.0
      %v2286 = vmax.f32 %v2254, 0.0
      %v2287 = vmax.f32 %v2255, 0.0
      %2288 = vst.msk [vmem:[%s367 + $0x1] sm:$0xff] %vm311, %v2256
      %2289 = vst.msk [vmem:[%s367 + $0x9] sm:$0xff] %vm311, %v2257
      %2290 = vst.msk [vmem:[%s367 + $0x19] sm:$0xff] %vm311, %v2258
      %2291 = vst.msk [vmem:[%s367 + $0x21] sm:$0xff] %vm311, %v2259
      %2292 = vst.msk [vmem:[%s367 + $0x31] sm:$0xff] %vm311, %v2260
      %2293 = vst.msk [vmem:[%s367 + $0x39] sm:$0xff] %vm311, %v2261
      %2294 = vst.msk [vmem:[%s367 + $0x49] sm:$0xff] %vm311, %v2262
      %2295 = vst.msk [vmem:[%s367 + $0x51] sm:$0xff] %vm311, %v2263
      %2296 = vst.msk [vmem:[%s367 + $0x61] sm:$0xff] %vm311, %v2264
      %2297 = vst.msk [vmem:[%s367 + $0x69] sm:$0xff] %vm311, %v2265
      %2298 = vst.msk [vmem:[%s367 + $0x79] sm:$0xff] %vm311, %v2266
      %2299 = vst.msk [vmem:[%s367 + $0x81] sm:$0xff] %vm311, %v2267
      %2300 = vst.msk [vmem:[%s367 + $0x91] sm:$0xff] %vm311, %v2268
      %2301 = vst.msk [vmem:[%s367 + $0x99] sm:$0xff] %vm311, %v2269
      %2302 = vst.msk [vmem:[%s367 + $0xa9] sm:$0xff] %vm311, %v2270
      %2303 = vst.msk [vmem:[%s367 + $0xb1] sm:$0xff] %vm311, %v2271
      %2304 = vst.msk [vmem:[%s367 + $0xc1] sm:$0xff] %vm311, %v2272
      %2305 = vst.msk [vmem:[%s367 + $0xc9] sm:$0xff] %vm311, %v2273
      %2306 = vst.msk [vmem:[%s367 + $0xd9] sm:$0xff] %vm311, %v2274
      %2307 = vst.msk [vmem:[%s367 + $0xe1] sm:$0xff] %vm311, %v2275
      %2308 = vst.msk [vmem:[%s367 + $0xf1] sm:$0xff] %vm311, %v2276
      %2309 = vst.msk [vmem:[%s367 + $0xf9] sm:$0xff] %vm311, %v2277
      %2310 = vst.msk [vmem:[%s367 + $0x109] sm:$0xff] %vm311, %v2278
      %2311 = vst.msk [vmem:[%s367 + $0x111] sm:$0xff] %vm311, %v2279
      %2312 = vst.msk [vmem:[%s367 + $0x121] sm:$0xff] %vm311, %v2280
      %2313 = vst.msk [vmem:[%s367 + $0x129] sm:$0xff] %vm311, %v2281
      %2314 = vst.msk [vmem:[%s367 + $0x139] sm:$0xff] %vm311, %v2282
      %2315 = vst.msk [vmem:[%s367 + $0x141] sm:$0xff] %vm311, %v2283
      %2316 = vst.msk [vmem:[%s367 + $0x151] sm:$0xff] %vm311, %v2284
      %2317 = vst.msk [vmem:[%s367 + $0x159] sm:$0xff] %vm311, %v2285
      %2318 = vst.msk [vmem:[%s367 + $0x169] sm:$0xff] %vm311, %v2286
      %2319 = vst.msk [vmem:[%s367 + $0x171] sm:$0xff] %vm311, %v2287
      %v2320 = vld [vmem:[#allocation2] sm:$0xff]
      %v2321 = vld [vmem:[#allocation2 + $0x8] sm:$0xff]
      %v2322 = vld [vmem:[#allocation2 + $0x10] sm:$0x3]
      %v2323 = vld [vmem:[#allocation2 + $0x18] sm:$0xff]
      %v2324 = vld [vmem:[#allocation2 + $0x20] sm:$0xff]
      %v2325 = vld [vmem:[#allocation2 + $0x28] sm:$0x3]
      %v2326 = vld [vmem:[#allocation2 + $0x30] sm:$0xff]
      %v2327 = vld [vmem:[#allocation2 + $0x38] sm:$0xff]
      %v2328 = vld [vmem:[#allocation2 + $0x40] sm:$0x3]
      %v2329 = vld [vmem:[#allocation2 + $0x48] sm:$0xff]
      %v2330 = vld [vmem:[#allocation2 + $0x50] sm:$0xff]
      %v2331 = vld [vmem:[#allocation2 + $0x58] sm:$0x3]
      %v2332 = vld [vmem:[#allocation2 + $0x60] sm:$0xff]
      %v2333 = vld [vmem:[#allocation2 + $0x68] sm:$0xff]
      %v2334 = vld [vmem:[#allocation2 + $0x70] sm:$0x3]
      %v2335 = vld [vmem:[#allocation2 + $0x78] sm:$0xff]
      %v2336 = vld [vmem:[#allocation2 + $0x80] sm:$0xff]
      %v2337 = vld [vmem:[#allocation2 + $0x88] sm:$0x3]
      %v2338 = vld [vmem:[#allocation2 + $0x90] sm:$0xff]
      %v2339 = vld [vmem:[#allocation2 + $0x98] sm:$0xff]
      %v2340 = vld [vmem:[#allocation2 + $0xa0] sm:$0x3]
      %v2341 = vld [vmem:[#allocation2 + $0xa8] sm:$0xff]
      %v2342 = vld [vmem:[#allocation2 + $0xb0] sm:$0xff]
      %v2343 = vld [vmem:[#allocation2 + $0xb8] sm:$0x3]
      %v2344 = vld [vmem:[#allocation2 + $0xc0] sm:$0xff]
      %v2345 = vld [vmem:[#allocation2 + $0xc8] sm:$0xff]
      %v2346 = vld [vmem:[#allocation2 + $0xd0] sm:$0x3]
      %v2347 = vld [vmem:[#allocation2 + $0xd8] sm:$0xff]
      %v2348 = vld [vmem:[#allocation2 + $0xe0] sm:$0xff]
      %v2349 = vld [vmem:[#allocation2 + $0xe8] sm:$0x3]
      %v2350 = vld [vmem:[#allocation2 + $0xf0] sm:$0xff]
      %v2351 = vld [vmem:[#allocation2 + $0xf8] sm:$0xff]
      %v2352 = vld [vmem:[#allocation2 + $0x100] sm:$0x3]
      %v2353 = vld [vmem:[#allocation2 + $0x108] sm:$0xff]
      %v2354 = vld [vmem:[#allocation2 + $0x110] sm:$0xff]
      %v2355 = vld [vmem:[#allocation2 + $0x118] sm:$0x3]
      %v2356 = vld [vmem:[#allocation2 + $0x120] sm:$0xff]
      %v2357 = vld [vmem:[#allocation2 + $0x128] sm:$0xff]
      %v2358 = vld [vmem:[#allocation2 + $0x130] sm:$0x3]
      %v2359 = vld [vmem:[#allocation2 + $0x138] sm:$0xff]
      %v2360 = vld [vmem:[#allocation2 + $0x140] sm:$0xff]
      %v2361 = vld [vmem:[#allocation2 + $0x148] sm:$0x3]
      %v2362 = vld [vmem:[#allocation2 + $0x150] sm:$0xff]
      %v2363 = vld [vmem:[#allocation2 + $0x158] sm:$0xff]
      %v2364 = vld [vmem:[#allocation2 + $0x160] sm:$0x3]
      %v2365 = vld [vmem:[#allocation2 + $0x168] sm:$0xff]
      %v2366 = vld [vmem:[#allocation2 + $0x170] sm:$0xff]
      %v2367 = vld [vmem:[#allocation2 + $0x178] sm:$0x3]
      %v2368 = vld [vmem:[#allocation2 + $0x180] sm:$0xff]
      %v2369 = vld [vmem:[#allocation2 + $0x188] sm:$0xff]
      %v2370 = vld [vmem:[#allocation2 + $0x190] sm:$0x3]
      %v2371 = vld [vmem:[#allocation2 + $0x198] sm:$0xff]
      %v2372 = vld [vmem:[#allocation2 + $0x1a0] sm:$0xff]
      %v2373 = vld [vmem:[#allocation2 + $0x1a8] sm:$0x3]
      %v2374 = vld [vmem:[%s2] sm:$0xf]
      %v2375 = vld [vmem:[%s2 + $0x4] sm:$0xf]
      %v2376 = vld [vmem:[%s2 + $0x8] sm:$0xf]
      %v2377 = vld [vmem:[%s2 + $0xc] sm:$0xf]
      %v2378 = vld [vmem:[%s2 + $0x10] sm:$0xf]
      %v2379 = vld [vmem:[%s2 + $0x14] sm:$0xf]
      %v2380 = vld [vmem:[%s2 + $0x18] sm:$0xf]
      %v2381 = vld [vmem:[%s2 + $0x1c] sm:$0xf]
      %v2382 = vld [vmem:[%s2 + $0x20] sm:$0xf]
      %v2431 = vrot.slane %v2320, 1
      %v2432 = vrot.slane %v2321, 1
      %v2433 = vsel %vm511, %v2431, %v2432
      %v2434 = vrot.slane %v2322, 1
      %v2435 = vsel %vm511, %v2432, %v2434
      %v2436 = vrot.slane %v2323, 1
      %v2437 = vrot.slane %v2324, 1
      %v2438 = vsel %vm511, %v2436, %v2437
      %v2439 = vrot.slane %v2325, 1
      %v2440 = vsel %vm511, %v2437, %v2439
      %v2441 = vrot.slane %v2326, 1
      %v2442 = vrot.slane %v2327, 1
      %v2443 = vsel %vm511, %v2441, %v2442
      %v2444 = vrot.slane %v2328, 1
      %v2445 = vsel %vm511, %v2442, %v2444
      %v2446 = vrot.slane %v2329, 1
      %v2447 = vrot.slane %v2330, 1
      %v2448 = vsel %vm511, %v2446, %v2447
      %v2449 = vrot.slane %v2331, 1
      %v2450 = vsel %vm511, %v2447, %v2449
      %v2451 = vrot.slane %v2332, 1
      %v2452 = vrot.slane %v2333, 1
      %v2453 = vsel %vm511, %v2451, %v2452
      %v2454 = vrot.slane %v2334, 1
      %v2455 = vsel %vm511, %v2452, %v2454
      %v2456 = vrot.slane %v2335, 1
      %v2457 = vrot.slane %v2336, 1
      %v2458 = vsel %vm511, %v2456, %v2457
      %v2459 = vrot.slane %v2337, 1
      %v2460 = vsel %vm511, %v2457, %v2459
      %v2461 = vrot.slane %v2338, 1
      %v2462 = vrot.slane %v2339, 1
      %v2463 = vsel %vm511, %v2461, %v2462
      %v2464 = vrot.slane %v2340, 1
      %v2465 = vsel %vm511, %v2462, %v2464
      %v2466 = vrot.slane %v2341, 1
      %v2467 = vrot.slane %v2342, 1
      %v2468 = vsel %vm511, %v2466, %v2467
      %v2469 = vrot.slane %v2343, 1
      %v2470 = vsel %vm511, %v2467, %v2469
      %v2471 = vrot.slane %v2344, 1
      %v2472 = vrot.slane %v2345, 1
      %v2473 = vsel %vm511, %v2471, %v2472
      %v2474 = vrot.slane %v2346, 1
      %v2475 = vsel %vm511, %v2472, %v2474
      %v2476 = vrot.slane %v2347, 1
      %v2477 = vrot.slane %v2348, 1
      %v2478 = vsel %vm511, %v2476, %v2477
      %v2479 = vrot.slane %v2349, 1
      %v2480 = vsel %vm511, %v2477, %v2479
      %v2481 = vrot.slane %v2350, 1
      %v2482 = vrot.slane %v2351, 1
      %v2483 = vsel %vm511, %v2481, %v2482
      %v2484 = vrot.slane %v2352, 1
      %v2485 = vsel %vm511, %v2482, %v2484
      %v2486 = vrot.slane %v2353, 1
      %v2487 = vrot.slane %v2354, 1
      %v2488 = vsel %vm511, %v2486, %v2487
      %v2489 = vrot.slane %v2355, 1
      %v2490 = vsel %vm511, %v2487, %v2489
      %v2491 = vrot.slane %v2356, 1
      %v2492 = vrot.slane %v2357, 1
      %v2493 = vsel %vm511, %v2491, %v2492
      %v2494 = vrot.slane %v2358, 1
      %v2495 = vsel %vm511, %v2492, %v2494
      %v2496 = vrot.slane %v2359, 1
      %v2497 = vrot.slane %v2360, 1
      %v2498 = vsel %vm511, %v2496, %v2497
      %v2499 = vrot.slane %v2361, 1
      %v2500 = vsel %vm511, %v2497, %v2499
      %v2501 = vrot.slane %v2362, 1
      %v2502 = vrot.slane %v2363, 1
      %v2503 = vsel %vm511, %v2501, %v2502
      %v2504 = vrot.slane %v2364, 1
      %v2505 = vsel %vm511, %v2502, %v2504
      %v2506 = vrot.slane %v2365, 1
      %v2507 = vrot.slane %v2366, 1
      %v2508 = vsel %vm511, %v2506, %v2507
      %v2509 = vrot.slane %v2367, 1
      %v2510 = vsel %vm511, %v2507, %v2509
      %v2511 = vsel %vm311, %v2433, 0
      %v2513 = vsel %vm311, %v2435, 0
      %v2515 = vsel %vm311, %v2438, 0
      %v2517 = vsel %vm311, %v2440, 0
      %v2519 = vsel %vm311, %v2443, 0
      %v2521 = vsel %vm311, %v2445, 0
      %v2523 = vsel %vm311, %v2448, 0
      %v2525 = vsel %vm311, %v2450, 0
      %v2527 = vsel %vm311, %v2453, 0
      %v2529 = vsel %vm311, %v2455, 0
      %v2531 = vsel %vm311, %v2458, 0
      %v2533 = vsel %vm311, %v2460, 0
      %v2535 = vsel %vm311, %v2463, 0
      %v2537 = vsel %vm311, %v2465, 0
      %v2539 = vsel %vm311, %v2468, 0
      %v2541 = vsel %vm311, %v2470, 0
      %v2543 = vsel %vm311, %v2473, 0
      %v2545 = vsel %vm311, %v2475, 0
      %v2547 = vsel %vm311, %v2478, 0
      %v2549 = vsel %vm311, %v2480, 0
      %v2551 = vsel %vm311, %v2483, 0
      %v2553 = vsel %vm311, %v2485, 0
      %v2555 = vsel %vm311, %v2488, 0
      %v2557 = vsel %vm311, %v2490, 0
      %v2559 = vsel %vm311, %v2493, 0
      %v2561 = vsel %vm311, %v2495, 0
      %v2563 = vsel %vm311, %v2498, 0
      %v2565 = vsel %vm311, %v2500, 0
      %v2567 = vsel %vm311, %v2503, 0
      %v2569 = vsel %vm311, %v2505, 0
      %v2571 = vsel %vm311, %v2508, 0
      %v2573 = vsel %vm311, %v2510, 0
      %v2576 = vsel %vm656, %v2375, 0
      %2578 = vmatpush.msra.mxu0 0.0
      %2579 = vmatpush.msra.mxu0 0.0
      %2580 = vmatpush.msra.mxu0 0.0
      %2581 = vmatpush.msra.mxu0 0.0
      %2582 = vmatpush.msra.mxu0 0.0
      %2583 = vmatpush.msra.mxu0 0.0
      %2584 = vmatpush.msra.mxu0 0.0
      %2585 = vmatpush.msra.mxu0 0.0
      %2586 = vmatpush.msra.mxu0 0.0
      %2587 = vmatpush.msra.mxu0 0.0
      %2588 = vmatpush.msra.mxu0 0.0
      %2589 = vmatpush.msra.mxu0 0.0
      %2590 = vmatpush.msra.mxu0 0.0
      %2591 = vmatpush.msra.mxu0 0.0
      %2592 = vmatpush.msra.mxu0 0.0
      %2593 = vmatpush.msra.mxu0 %v2576
      %2594 = vmatmul.f32.gmra.mxu0 %v2511
      %v2595 = vpop.f32.mrf.mxu0
      %v2596 = vadd.f32 0.0, %v2595
      %2597 = vmatmul.f32.gmra.mxu0 %v2513
      %v2598 = vpop.f32.mrf.mxu0
      %v2599 = vadd.f32 0.0, %v2598
      %2600 = vmatmul.f32.gmra.mxu0 %v2515
      %v2601 = vpop.f32.mrf.mxu0
      %v2602 = vadd.f32 0.0, %v2601
      %2603 = vmatmul.f32.gmra.mxu0 %v2517
      %v2604 = vpop.f32.mrf.mxu0
      %v2605 = vadd.f32 0.0, %v2604
      %2606 = vmatmul.f32.gmra.mxu0 %v2519
      %v2607 = vpop.f32.mrf.mxu0
      %v2608 = vadd.f32 0.0, %v2607
      %2609 = vmatmul.f32.gmra.mxu0 %v2521
      %v2610 = vpop.f32.mrf.mxu0
      %v2611 = vadd.f32 0.0, %v2610
      %2612 = vmatmul.f32.gmra.mxu0 %v2523
      %v2613 = vpop.f32.mrf.mxu0
      %v2614 = vadd.f32 0.0, %v2613
      %2615 = vmatmul.f32.gmra.mxu0 %v2525
      %v2616 = vpop.f32.mrf.mxu0
      %v2617 = vadd.f32 0.0, %v2616
      %2618 = vmatmul.f32.gmra.mxu0 %v2527
      %v2619 = vpop.f32.mrf.mxu0
      %v2620 = vadd.f32 0.0, %v2619
      %2621 = vmatmul.f32.gmra.mxu0 %v2529
      %v2622 = vpop.f32.mrf.mxu0
      %v2623 = vadd.f32 0.0, %v2622
      %2624 = vmatmul.f32.gmra.mxu0 %v2531
      %v2625 = vpop.f32.mrf.mxu0
      %v2626 = vadd.f32 0.0, %v2625
      %2627 = vmatmul.f32.gmra.mxu0 %v2533
      %v2628 = vpop.f32.mrf.mxu0
      %v2629 = vadd.f32 0.0, %v2628
      %2630 = vmatmul.f32.gmra.mxu0 %v2535
      %v2631 = vpop.f32.mrf.mxu0
      %v2632 = vadd.f32 0.0, %v2631
      %2633 = vmatmul.f32.gmra.mxu0 %v2537
      %v2634 = vpop.f32.mrf.mxu0
      %v2635 = vadd.f32 0.0, %v2634
      %2636 = vmatmul.f32.gmra.mxu0 %v2539
      %v2637 = vpop.f32.mrf.mxu0
      %v2638 = vadd.f32 0.0, %v2637
      %2639 = vmatmul.f32.gmra.mxu0 %v2541
      %v2640 = vpop.f32.mrf.mxu0
      %v2641 = vadd.f32 0.0, %v2640
      %2642 = vmatmul.f32.gmra.mxu0 %v2543
      %v2643 = vpop.f32.mrf.mxu0
      %v2644 = vadd.f32 0.0, %v2643
      %2645 = vmatmul.f32.gmra.mxu0 %v2545
      %v2646 = vpop.f32.mrf.mxu0
      %v2647 = vadd.f32 0.0, %v2646
      %2648 = vmatmul.f32.gmra.mxu0 %v2547
      %v2649 = vpop.f32.mrf.mxu0
      %v2650 = vadd.f32 0.0, %v2649
      %2651 = vmatmul.f32.gmra.mxu0 %v2549
      %v2652 = vpop.f32.mrf.mxu0
      %v2653 = vadd.f32 0.0, %v2652
      %2654 = vmatmul.f32.gmra.mxu0 %v2551
      %v2655 = vpop.f32.mrf.mxu0
      %v2656 = vadd.f32 0.0, %v2655
      %2657 = vmatmul.f32.gmra.mxu0 %v2553
      %v2658 = vpop.f32.mrf.mxu0
      %v2659 = vadd.f32 0.0, %v2658
      %2660 = vmatmul.f32.gmra.mxu0 %v2555
      %v2661 = vpop.f32.mrf.mxu0
      %v2662 = vadd.f32 0.0, %v2661
      %2663 = vmatmul.f32.gmra.mxu0 %v2557
      %v2664 = vpop.f32.mrf.mxu0
      %v2665 = vadd.f32 0.0, %v2664
      %2666 = vmatmul.f32.gmra.mxu0 %v2559
      %v2667 = vpop.f32.mrf.mxu0
      %v2668 = vadd.f32 0.0, %v2667
      %2669 = vmatmul.f32.gmra.mxu0 %v2561
      %v2670 = vpop.f32.mrf.mxu0
      %v2671 = vadd.f32 0.0, %v2670
      %2672 = vmatmul.f32.gmra.mxu0 %v2563
      %v2673 = vpop.f32.mrf.mxu0
      %v2674 = vadd.f32 0.0, %v2673
      %2675 = vmatmul.f32.gmra.mxu0 %v2565
      %v2676 = vpop.f32.mrf.mxu0
      %v2677 = vadd.f32 0.0, %v2676
      %2678 = vmatmul.f32.gmra.mxu0 %v2567
      %v2679 = vpop.f32.mrf.mxu0
      %v2680 = vadd.f32 0.0, %v2679
      %2681 = vmatmul.f32.gmra.mxu0 %v2569
      %v2682 = vpop.f32.mrf.mxu0
      %v2683 = vadd.f32 0.0, %v2682
      %2684 = vmatmul.f32.gmra.mxu0 %v2571
      %v2685 = vpop.f32.mrf.mxu0
      %v2686 = vadd.f32 0.0, %v2685
      %2687 = vmatmul.f32.gmra.mxu0 %v2573
      %v2688 = vpop.f32.mrf.mxu0
      %v2689 = vadd.f32 0.0, %v2688
      %2690 = vdwg.mxu0
      %v2691 = vsel %vm311, %v2320, 0
      %v2693 = vsel %vm311, %v2321, 0
      %v2695 = vsel %vm311, %v2323, 0
      %v2697 = vsel %vm311, %v2324, 0
      %v2699 = vsel %vm311, %v2326, 0
      %v2701 = vsel %vm311, %v2327, 0
      %v2703 = vsel %vm311, %v2329, 0
      %v2705 = vsel %vm311, %v2330, 0
      %v2707 = vsel %vm311, %v2332, 0
      %v2709 = vsel %vm311, %v2333, 0
      %v2711 = vsel %vm311, %v2335, 0
      %v2713 = vsel %vm311, %v2336, 0
      %v2715 = vsel %vm311, %v2338, 0
      %v2717 = vsel %vm311, %v2339, 0
      %v2719 = vsel %vm311, %v2341, 0
      %v2721 = vsel %vm311, %v2342, 0
      %v2723 = vsel %vm311, %v2344, 0
      %v2725 = vsel %vm311, %v2345, 0
      %v2727 = vsel %vm311, %v2347, 0
      %v2729 = vsel %vm311, %v2348, 0
      %v2731 = vsel %vm311, %v2350, 0
      %v2733 = vsel %vm311, %v2351, 0
      %v2735 = vsel %vm311, %v2353, 0
      %v2737 = vsel %vm311, %v2354, 0
      %v2739 = vsel %vm311, %v2356, 0
      %v2741 = vsel %vm311, %v2357, 0
      %v2743 = vsel %vm311, %v2359, 0
      %v2745 = vsel %vm311, %v2360, 0
      %v2747 = vsel %vm311, %v2362, 0
      %v2749 = vsel %vm311, %v2363, 0
      %v2751 = vsel %vm311, %v2365, 0
      %v2753 = vsel %vm311, %v2366, 0
      %v2756 = vsel %vm656, %v2374, 0
      %2758 = vmatpush.msra.mxu0 0.0
      %2759 = vmatpush.msra.mxu0 0.0
      %2760 = vmatpush.msra.mxu0 0.0
      %2761 = vmatpush.msra.mxu0 0.0
      %2762 = vmatpush.msra.mxu0 0.0
      %2763 = vmatpush.msra.mxu0 0.0
      %2764 = vmatpush.msra.mxu0 0.0
      %2765 = vmatpush.msra.mxu0 0.0
      %2766 = vmatpush.msra.mxu0 0.0
      %2767 = vmatpush.msra.mxu0 0.0
      %2768 = vmatpush.msra.mxu0 0.0
      %2769 = vmatpush.msra.mxu0 0.0
      %2770 = vmatpush.msra.mxu0 0.0
      %2771 = vmatpush.msra.mxu0 0.0
      %2772 = vmatpush.msra.mxu0 0.0
      %2773 = vmatpush.msra.mxu0 %v2756
      %2774 = vmatmul.f32.gmra.mxu0 %v2691
      %v2775 = vpop.f32.mrf.mxu0
      %v2776 = vadd.f32 %v2596, %v2775
      %2777 = vmatmul.f32.gmra.mxu0 %v2693
      %v2778 = vpop.f32.mrf.mxu0
      %v2779 = vadd.f32 %v2599, %v2778
      %2780 = vmatmul.f32.gmra.mxu0 %v2695
      %v2781 = vpop.f32.mrf.mxu0
      %v2782 = vadd.f32 %v2602, %v2781
      %2783 = vmatmul.f32.gmra.mxu0 %v2697
      %v2784 = vpop.f32.mrf.mxu0
      %v2785 = vadd.f32 %v2605, %v2784
      %2786 = vmatmul.f32.gmra.mxu0 %v2699
      %v2787 = vpop.f32.mrf.mxu0
      %v2788 = vadd.f32 %v2608, %v2787
      %2789 = vmatmul.f32.gmra.mxu0 %v2701
      %v2790 = vpop.f32.mrf.mxu0
      %v2791 = vadd.f32 %v2611, %v2790
      %2792 = vmatmul.f32.gmra.mxu0 %v2703
      %v2793 = vpop.f32.mrf.mxu0
      %v2794 = vadd.f32 %v2614, %v2793
      %2795 = vmatmul.f32.gmra.mxu0 %v2705
      %v2796 = vpop.f32.mrf.mxu0
      %v2797 = vadd.f32 %v2617, %v2796
      %2798 = vmatmul.f32.gmra.mxu0 %v2707
      %v2799 = vpop.f32.mrf.mxu0
      %v2800 = vadd.f32 %v2620, %v2799
      %2801 = vmatmul.f32.gmra.mxu0 %v2709
      %v2802 = vpop.f32.mrf.mxu0
      %v2803 = vadd.f32 %v2623, %v2802
      %2804 = vmatmul.f32.gmra.mxu0 %v2711
      %v2805 = vpop.f32.mrf.mxu0
      %v2806 = vadd.f32 %v2626, %v2805
      %2807 = vmatmul.f32.gmra.mxu0 %v2713
      %v2808 = vpop.f32.mrf.mxu0
      %v2809 = vadd.f32 %v2629, %v2808
      %2810 = vmatmul.f32.gmra.mxu0 %v2715
      %v2811 = vpop.f32.mrf.mxu0
      %v2812 = vadd.f32 %v2632, %v2811
      %2813 = vmatmul.f32.gmra.mxu0 %v2717
      %v2814 = vpop.f32.mrf.mxu0
      %v2815 = vadd.f32 %v2635, %v2814
      %2816 = vmatmul.f32.gmra.mxu0 %v2719
      %v2817 = vpop.f32.mrf.mxu0
      %v2818 = vadd.f32 %v2638, %v2817
      %2819 = vmatmul.f32.gmra.mxu0 %v2721
      %v2820 = vpop.f32.mrf.mxu0
      %v2821 = vadd.f32 %v2641, %v2820
      %2822 = vmatmul.f32.gmra.mxu0 %v2723
      %v2823 = vpop.f32.mrf.mxu0
      %v2824 = vadd.f32 %v2644, %v2823
      %2825 = vmatmul.f32.gmra.mxu0 %v2725
      %v2826 = vpop.f32.mrf.mxu0
      %v2827 = vadd.f32 %v2647, %v2826
      %2828 = vmatmul.f32.gmra.mxu0 %v2727
      %v2829 = vpop.f32.mrf.mxu0
      %v2830 = vadd.f32 %v2650, %v2829
      %2831 = vmatmul.f32.gmra.mxu0 %v2729
      %v2832 = vpop.f32.mrf.mxu0
      %v2833 = vadd.f32 %v2653, %v2832
      %2834 = vmatmul.f32.gmra.mxu0 %v2731
      %v2835 = vpop.f32.mrf.mxu0
      %v2836 = vadd.f32 %v2656, %v2835
      %2837 = vmatmul.f32.gmra.mxu0 %v2733
      %v2838 = vpop.f32.mrf.mxu0
      %v2839 = vadd.f32 %v2659, %v2838
      %2840 = vmatmul.f32.gmra.mxu0 %v2735
      %v2841 = vpop.f32.mrf.mxu0
      %v2842 = vadd.f32 %v2662, %v2841
      %2843 = vmatmul.f32.gmra.mxu0 %v2737
      %v2844 = vpop.f32.mrf.mxu0
      %v2845 = vadd.f32 %v2665, %v2844
      %2846 = vmatmul.f32.gmra.mxu0 %v2739
      %v2847 = vpop.f32.mrf.mxu0
      %v2848 = vadd.f32 %v2668, %v2847
      %2849 = vmatmul.f32.gmra.mxu0 %v2741
      %v2850 = vpop.f32.mrf.mxu0
      %v2851 = vadd.f32 %v2671, %v2850
      %2852 = vmatmul.f32.gmra.mxu0 %v2743
      %v2853 = vpop.f32.mrf.mxu0
      %v2854 = vadd.f32 %v2674, %v2853
      %2855 = vmatmul.f32.gmra.mxu0 %v2745
      %v2856 = vpop.f32.mrf.mxu0
      %v2857 = vadd.f32 %v2677, %v2856
      %2858 = vmatmul.f32.gmra.mxu0 %v2747
      %v2859 = vpop.f32.mrf.mxu0
      %v2860 = vadd.f32 %v2680, %v2859
      %2861 = vmatmul.f32.gmra.mxu0 %v2749
      %v2862 = vpop.f32.mrf.mxu0
      %v2863 = vadd.f32 %v2683, %v2862
      %2864 = vmatmul.f32.gmra.mxu0 %v2751
      %v2865 = vpop.f32.mrf.mxu0
      %v2866 = vadd.f32 %v2686, %v2865
      %2867 = vmatmul.f32.gmra.mxu0 %v2753
      %v2868 = vpop.f32.mrf.mxu0
      %v2869 = vadd.f32 %v2689, %v2868
      %2870 = vdwg.mxu0
      %v2871 = vrot.slane %v2320, 2
      %v2872 = vrot.slane %v2321, 2
      %v2873 = vsel %vm953, %v2871, %v2872
      %v2874 = vrot.slane %v2322, 2
      %v2875 = vsel %vm953, %v2872, %v2874
      %v2876 = vrot.slane %v2323, 2
      %v2877 = vrot.slane %v2324, 2
      %v2878 = vsel %vm953, %v2876, %v2877
      %v2879 = vrot.slane %v2325, 2
      %v2880 = vsel %vm953, %v2877, %v2879
      %v2881 = vrot.slane %v2326, 2
      %v2882 = vrot.slane %v2327, 2
      %v2883 = vsel %vm953, %v2881, %v2882
      %v2884 = vrot.slane %v2328, 2
      %v2885 = vsel %vm953, %v2882, %v2884
      %v2886 = vrot.slane %v2329, 2
      %v2887 = vrot.slane %v2330, 2
      %v2888 = vsel %vm953, %v2886, %v2887
      %v2889 = vrot.slane %v2331, 2
      %v2890 = vsel %vm953, %v2887, %v2889
      %v2891 = vrot.slane %v2332, 2
      %v2892 = vrot.slane %v2333, 2
      %v2893 = vsel %vm953, %v2891, %v2892
      %v2894 = vrot.slane %v2334, 2
      %v2895 = vsel %vm953, %v2892, %v2894
      %v2896 = vrot.slane %v2335, 2
      %v2897 = vrot.slane %v2336, 2
      %v2898 = vsel %vm953, %v2896, %v2897
      %v2899 = vrot.slane %v2337, 2
      %v2900 = vsel %vm953, %v2897, %v2899
      %v2901 = vrot.slane %v2338, 2
      %v2902 = vrot.slane %v2339, 2
      %v2903 = vsel %vm953, %v2901, %v2902
      %v2904 = vrot.slane %v2340, 2
      %v2905 = vsel %vm953, %v2902, %v2904
      %v2906 = vrot.slane %v2341, 2
      %v2907 = vrot.slane %v2342, 2
      %v2908 = vsel %vm953, %v2906, %v2907
      %v2909 = vrot.slane %v2343, 2
      %v2910 = vsel %vm953, %v2907, %v2909
      %v2911 = vrot.slane %v2344, 2
      %v2912 = vrot.slane %v2345, 2
      %v2913 = vsel %vm953, %v2911, %v2912
      %v2914 = vrot.slane %v2346, 2
      %v2915 = vsel %vm953, %v2912, %v2914
      %v2916 = vrot.slane %v2347, 2
      %v2917 = vrot.slane %v2348, 2
      %v2918 = vsel %vm953, %v2916, %v2917
      %v2919 = vrot.slane %v2349, 2
      %v2920 = vsel %vm953, %v2917, %v2919
      %v2921 = vrot.slane %v2350, 2
      %v2922 = vrot.slane %v2351, 2
      %v2923 = vsel %vm953, %v2921, %v2922
      %v2924 = vrot.slane %v2352, 2
      %v2925 = vsel %vm953, %v2922, %v2924
      %v2926 = vrot.slane %v2353, 2
      %v2927 = vrot.slane %v2354, 2
      %v2928 = vsel %vm953, %v2926, %v2927
      %v2929 = vrot.slane %v2355, 2
      %v2930 = vsel %vm953, %v2927, %v2929
      %v2931 = vrot.slane %v2356, 2
      %v2932 = vrot.slane %v2357, 2
      %v2933 = vsel %vm953, %v2931, %v2932
      %v2934 = vrot.slane %v2358, 2
      %v2935 = vsel %vm953, %v2932, %v2934
      %v2936 = vrot.slane %v2359, 2
      %v2937 = vrot.slane %v2360, 2
      %v2938 = vsel %vm953, %v2936, %v2937
      %v2939 = vrot.slane %v2361, 2
      %v2940 = vsel %vm953, %v2937, %v2939
      %v2941 = vrot.slane %v2362, 2
      %v2942 = vrot.slane %v2363, 2
      %v2943 = vsel %vm953, %v2941, %v2942
      %v2944 = vrot.slane %v2364, 2
      %v2945 = vsel %vm953, %v2942, %v2944
      %v2946 = vrot.slane %v2365, 2
      %v2947 = vrot.slane %v2366, 2
      %v2948 = vsel %vm953, %v2946, %v2947
      %v2949 = vrot.slane %v2367, 2
      %v2950 = vsel %vm953, %v2947, %v2949
      %v2951 = vsel %vm311, %v2873, 0
      %v2953 = vsel %vm311, %v2875, 0
      %v2955 = vsel %vm311, %v2878, 0
      %v2957 = vsel %vm311, %v2880, 0
      %v2959 = vsel %vm311, %v2883, 0
      %v2961 = vsel %vm311, %v2885, 0
      %v2963 = vsel %vm311, %v2888, 0
      %v2965 = vsel %vm311, %v2890, 0
      %v2967 = vsel %vm311, %v2893, 0
      %v2969 = vsel %vm311, %v2895, 0
      %v2971 = vsel %vm311, %v2898, 0
      %v2973 = vsel %vm311, %v2900, 0
      %v2975 = vsel %vm311, %v2903, 0
      %v2977 = vsel %vm311, %v2905, 0
      %v2979 = vsel %vm311, %v2908, 0
      %v2981 = vsel %vm311, %v2910, 0
      %v2983 = vsel %vm311, %v2913, 0
      %v2985 = vsel %vm311, %v2915, 0
      %v2987 = vsel %vm311, %v2918, 0
      %v2989 = vsel %vm311, %v2920, 0
      %v2991 = vsel %vm311, %v2923, 0
      %v2993 = vsel %vm311, %v2925, 0
      %v2995 = vsel %vm311, %v2928, 0
      %v2997 = vsel %vm311, %v2930, 0
      %v2999 = vsel %vm311, %v2933, 0
      %v3001 = vsel %vm311, %v2935, 0
      %v3003 = vsel %vm311, %v2938, 0
      %v3005 = vsel %vm311, %v2940, 0
      %v3007 = vsel %vm311, %v2943, 0
      %v3009 = vsel %vm311, %v2945, 0
      %v3011 = vsel %vm311, %v2948, 0
      %v3013 = vsel %vm311, %v2950, 0
      %v3016 = vsel %vm656, %v2376, 0
      %3018 = vmatpush.msra.mxu0 0.0
      %3019 = vmatpush.msra.mxu0 0.0
      %3020 = vmatpush.msra.mxu0 0.0
      %3021 = vmatpush.msra.mxu0 0.0
      %3022 = vmatpush.msra.mxu0 0.0
      %3023 = vmatpush.msra.mxu0 0.0
      %3024 = vmatpush.msra.mxu0 0.0
      %3025 = vmatpush.msra.mxu0 0.0
      %3026 = vmatpush.msra.mxu0 0.0
      %3027 = vmatpush.msra.mxu0 0.0
      %3028 = vmatpush.msra.mxu0 0.0
      %3029 = vmatpush.msra.mxu0 0.0
      %3030 = vmatpush.msra.mxu0 0.0
      %3031 = vmatpush.msra.mxu0 0.0
      %3032 = vmatpush.msra.mxu0 0.0
      %3033 = vmatpush.msra.mxu0 %v3016
      %3034 = vmatmul.f32.gmra.mxu0 %v2951
      %v3035 = vpop.f32.mrf.mxu0
      %v3036 = vadd.f32 0.0, %v3035
      %3037 = vmatmul.f32.gmra.mxu0 %v2953
      %v3038 = vpop.f32.mrf.mxu0
      %v3039 = vadd.f32 0.0, %v3038
      %3040 = vmatmul.f32.gmra.mxu0 %v2955
      %v3041 = vpop.f32.mrf.mxu0
      %v3042 = vadd.f32 0.0, %v3041
      %3043 = vmatmul.f32.gmra.mxu0 %v2957
      %v3044 = vpop.f32.mrf.mxu0
      %v3045 = vadd.f32 0.0, %v3044
      %3046 = vmatmul.f32.gmra.mxu0 %v2959
      %v3047 = vpop.f32.mrf.mxu0
      %v3048 = vadd.f32 0.0, %v3047
      %3049 = vmatmul.f32.gmra.mxu0 %v2961
      %v3050 = vpop.f32.mrf.mxu0
      %v3051 = vadd.f32 0.0, %v3050
      %3052 = vmatmul.f32.gmra.mxu0 %v2963
      %v3053 = vpop.f32.mrf.mxu0
      %v3054 = vadd.f32 0.0, %v3053
      %3055 = vmatmul.f32.gmra.mxu0 %v2965
      %v3056 = vpop.f32.mrf.mxu0
      %v3057 = vadd.f32 0.0, %v3056
      %3058 = vmatmul.f32.gmra.mxu0 %v2967
      %v3059 = vpop.f32.mrf.mxu0
      %v3060 = vadd.f32 0.0, %v3059
      %3061 = vmatmul.f32.gmra.mxu0 %v2969
      %v3062 = vpop.f32.mrf.mxu0
      %v3063 = vadd.f32 0.0, %v3062
      %3064 = vmatmul.f32.gmra.mxu0 %v2971
      %v3065 = vpop.f32.mrf.mxu0
      %v3066 = vadd.f32 0.0, %v3065
      %3067 = vmatmul.f32.gmra.mxu0 %v2973
      %v3068 = vpop.f32.mrf.mxu0
      %v3069 = vadd.f32 0.0, %v3068
      %3070 = vmatmul.f32.gmra.mxu0 %v2975
      %v3071 = vpop.f32.mrf.mxu0
      %v3072 = vadd.f32 0.0, %v3071
      %3073 = vmatmul.f32.gmra.mxu0 %v2977
      %v3074 = vpop.f32.mrf.mxu0
      %v3075 = vadd.f32 0.0, %v3074
      %3076 = vmatmul.f32.gmra.mxu0 %v2979
      %v3077 = vpop.f32.mrf.mxu0
      %v3078 = vadd.f32 0.0, %v3077
      %3079 = vmatmul.f32.gmra.mxu0 %v2981
      %v3080 = vpop.f32.mrf.mxu0
      %v3081 = vadd.f32 0.0, %v3080
      %3082 = vmatmul.f32.gmra.mxu0 %v2983
      %v3083 = vpop.f32.mrf.mxu0
      %v3084 = vadd.f32 0.0, %v3083
      %3085 = vmatmul.f32.gmra.mxu0 %v2985
      %v3086 = vpop.f32.mrf.mxu0
      %v3087 = vadd.f32 0.0, %v3086
      %3088 = vmatmul.f32.gmra.mxu0 %v2987
      %v3089 = vpop.f32.mrf.mxu0
      %v3090 = vadd.f32 0.0, %v3089
      %3091 = vmatmul.f32.gmra.mxu0 %v2989
      %v3092 = vpop.f32.mrf.mxu0
      %v3093 = vadd.f32 0.0, %v3092
      %3094 = vmatmul.f32.gmra.mxu0 %v2991
      %v3095 = vpop.f32.mrf.mxu0
      %v3096 = vadd.f32 0.0, %v3095
      %3097 = vmatmul.f32.gmra.mxu0 %v2993
      %v3098 = vpop.f32.mrf.mxu0
      %v3099 = vadd.f32 0.0, %v3098
      %3100 = vmatmul.f32.gmra.mxu0 %v2995
      %v3101 = vpop.f32.mrf.mxu0
      %v3102 = vadd.f32 0.0, %v3101
      %3103 = vmatmul.f32.gmra.mxu0 %v2997
      %v3104 = vpop.f32.mrf.mxu0
      %v3105 = vadd.f32 0.0, %v3104
      %3106 = vmatmul.f32.gmra.mxu0 %v2999
      %v3107 = vpop.f32.mrf.mxu0
      %v3108 = vadd.f32 0.0, %v3107
      %3109 = vmatmul.f32.gmra.mxu0 %v3001
      %v3110 = vpop.f32.mrf.mxu0
      %v3111 = vadd.f32 0.0, %v3110
      %3112 = vmatmul.f32.gmra.mxu0 %v3003
      %v3113 = vpop.f32.mrf.mxu0
      %v3114 = vadd.f32 0.0, %v3113
      %3115 = vmatmul.f32.gmra.mxu0 %v3005
      %v3116 = vpop.f32.mrf.mxu0
      %v3117 = vadd.f32 0.0, %v3116
      %3118 = vmatmul.f32.gmra.mxu0 %v3007
      %v3119 = vpop.f32.mrf.mxu0
      %v3120 = vadd.f32 0.0, %v3119
      %3121 = vmatmul.f32.gmra.mxu0 %v3009
      %v3122 = vpop.f32.mrf.mxu0
      %v3123 = vadd.f32 0.0, %v3122
      %3124 = vmatmul.f32.gmra.mxu0 %v3011
      %v3125 = vpop.f32.mrf.mxu0
      %v3126 = vadd.f32 0.0, %v3125
      %3127 = vmatmul.f32.gmra.mxu0 %v3013
      %v3128 = vpop.f32.mrf.mxu0
      %v3129 = vadd.f32 0.0, %v3128
      %3130 = vdwg.mxu0
      %v3131 = vadd.f32 %v2776, %v3036
      %v3132 = vadd.f32 %v2779, %v3039
      %v3133 = vadd.f32 %v2782, %v3042
      %v3134 = vadd.f32 %v2785, %v3045
      %v3135 = vadd.f32 %v2788, %v3048
      %v3136 = vadd.f32 %v2791, %v3051
      %v3137 = vadd.f32 %v2794, %v3054
      %v3138 = vadd.f32 %v2797, %v3057
      %v3139 = vadd.f32 %v2800, %v3060
      %v3140 = vadd.f32 %v2803, %v3063
      %v3141 = vadd.f32 %v2806, %v3066
      %v3142 = vadd.f32 %v2809, %v3069
      %v3143 = vadd.f32 %v2812, %v3072
      %v3144 = vadd.f32 %v2815, %v3075
      %v3145 = vadd.f32 %v2818, %v3078
      %v3146 = vadd.f32 %v2821, %v3081
      %v3147 = vadd.f32 %v2824, %v3084
      %v3148 = vadd.f32 %v2827, %v3087
      %v3149 = vadd.f32 %v2830, %v3090
      %v3150 = vadd.f32 %v2833, %v3093
      %v3151 = vadd.f32 %v2836, %v3096
      %v3152 = vadd.f32 %v2839, %v3099
      %v3153 = vadd.f32 %v2842, %v3102
      %v3154 = vadd.f32 %v2845, %v3105
      %v3155 = vadd.f32 %v2848, %v3108
      %v3156 = vadd.f32 %v2851, %v3111
      %v3157 = vadd.f32 %v2854, %v3114
      %v3158 = vadd.f32 %v2857, %v3117
      %v3159 = vadd.f32 %v2860, %v3120
      %v3160 = vadd.f32 %v2863, %v3123
      %v3161 = vadd.f32 %v2866, %v3126
      %v3162 = vadd.f32 %v2869, %v3129
      %v3164 = vsel %vm311, %v2368, 0
      %v3167 = vsel %vm311, %v2369, 0
      %v3170 = vsel %vm656, %v2377, 0
      %3172 = vmatpush.msra.mxu0 0.0
      %3173 = vmatpush.msra.mxu0 0.0
      %3174 = vmatpush.msra.mxu0 0.0
      %3175 = vmatpush.msra.mxu0 0.0
      %3176 = vmatpush.msra.mxu0 0.0
      %3177 = vmatpush.msra.mxu0 0.0
      %3178 = vmatpush.msra.mxu0 0.0
      %3179 = vmatpush.msra.mxu0 0.0
      %3180 = vmatpush.msra.mxu0 0.0
      %3181 = vmatpush.msra.mxu0 0.0
      %3182 = vmatpush.msra.mxu0 0.0
      %3183 = vmatpush.msra.mxu0 0.0
      %3184 = vmatpush.msra.mxu0 0.0
      %3185 = vmatpush.msra.mxu0 0.0
      %3186 = vmatpush.msra.mxu0 0.0
      %3187 = vmatpush.msra.mxu0 %v3170
      %3188 = vmatmul.f32.gmra.mxu0 %v2695
      %v3189 = vpop.f32.mrf.mxu0
      %v3190 = vadd.f32 0.0, %v3189
      %3191 = vmatmul.f32.gmra.mxu0 %v2697
      %v3192 = vpop.f32.mrf.mxu0
      %v3193 = vadd.f32 0.0, %v3192
      %3194 = vmatmul.f32.gmra.mxu0 %v2699
      %v3195 = vpop.f32.mrf.mxu0
      %v3196 = vadd.f32 0.0, %v3195
      %3197 = vmatmul.f32.gmra.mxu0 %v2701
      %v3198 = vpop.f32.mrf.mxu0
      %v3199 = vadd.f32 0.0, %v3198
      %3200 = vmatmul.f32.gmra.mxu0 %v2703
      %v3201 = vpop.f32.mrf.mxu0
      %v3202 = vadd.f32 0.0, %v3201
      %3203 = vmatmul.f32.gmra.mxu0 %v2705
      %v3204 = vpop.f32.mrf.mxu0
      %v3205 = vadd.f32 0.0, %v3204
      %3206 = vmatmul.f32.gmra.mxu0 %v2707
      %v3207 = vpop.f32.mrf.mxu0
      %v3208 = vadd.f32 0.0, %v3207
      %3209 = vmatmul.f32.gmra.mxu0 %v2709
      %v3210 = vpop.f32.mrf.mxu0
      %v3211 = vadd.f32 0.0, %v3210
      %3212 = vmatmul.f32.gmra.mxu0 %v2711
      %v3213 = vpop.f32.mrf.mxu0
      %v3214 = vadd.f32 0.0, %v3213
      %3215 = vmatmul.f32.gmra.mxu0 %v2713
      %v3216 = vpop.f32.mrf.mxu0
      %v3217 = vadd.f32 0.0, %v3216
      %3218 = vmatmul.f32.gmra.mxu0 %v2715
      %v3219 = vpop.f32.mrf.mxu0
      %v3220 = vadd.f32 0.0, %v3219
      %3221 = vmatmul.f32.gmra.mxu0 %v2717
      %v3222 = vpop.f32.mrf.mxu0
      %v3223 = vadd.f32 0.0, %v3222
      %3224 = vmatmul.f32.gmra.mxu0 %v2719
      %v3225 = vpop.f32.mrf.mxu0
      %v3226 = vadd.f32 0.0, %v3225
      %3227 = vmatmul.f32.gmra.mxu0 %v2721
      %v3228 = vpop.f32.mrf.mxu0
      %v3229 = vadd.f32 0.0, %v3228
      %3230 = vmatmul.f32.gmra.mxu0 %v2723
      %v3231 = vpop.f32.mrf.mxu0
      %v3232 = vadd.f32 0.0, %v3231
      %3233 = vmatmul.f32.gmra.mxu0 %v2725
      %v3234 = vpop.f32.mrf.mxu0
      %v3235 = vadd.f32 0.0, %v3234
      %3236 = vmatmul.f32.gmra.mxu0 %v2727
      %v3237 = vpop.f32.mrf.mxu0
      %v3238 = vadd.f32 0.0, %v3237
      %3239 = vmatmul.f32.gmra.mxu0 %v2729
      %v3240 = vpop.f32.mrf.mxu0
      %v3241 = vadd.f32 0.0, %v3240
      %3242 = vmatmul.f32.gmra.mxu0 %v2731
      %v3243 = vpop.f32.mrf.mxu0
      %v3244 = vadd.f32 0.0, %v3243
      %3245 = vmatmul.f32.gmra.mxu0 %v2733
      %v3246 = vpop.f32.mrf.mxu0
      %v3247 = vadd.f32 0.0, %v3246
      %3248 = vmatmul.f32.gmra.mxu0 %v2735
      %v3249 = vpop.f32.mrf.mxu0
      %v3250 = vadd.f32 0.0, %v3249
      %3251 = vmatmul.f32.gmra.mxu0 %v2737
      %v3252 = vpop.f32.mrf.mxu0
      %v3253 = vadd.f32 0.0, %v3252
      %3254 = vmatmul.f32.gmra.mxu0 %v2739
      %v3255 = vpop.f32.mrf.mxu0
      %v3256 = vadd.f32 0.0, %v3255
      %3257 = vmatmul.f32.gmra.mxu0 %v2741
      %v3258 = vpop.f32.mrf.mxu0
      %v3259 = vadd.f32 0.0, %v3258
      %3260 = vmatmul.f32.gmra.mxu0 %v2743
      %v3261 = vpop.f32.mrf.mxu0
      %v3262 = vadd.f32 0.0, %v3261
      %3263 = vmatmul.f32.gmra.mxu0 %v2745
      %v3264 = vpop.f32.mrf.mxu0
      %v3265 = vadd.f32 0.0, %v3264
      %3266 = vmatmul.f32.gmra.mxu0 %v2747
      %v3267 = vpop.f32.mrf.mxu0
      %v3268 = vadd.f32 0.0, %v3267
      %3269 = vmatmul.f32.gmra.mxu0 %v2749
      %v3270 = vpop.f32.mrf.mxu0
      %v3271 = vadd.f32 0.0, %v3270
      %3272 = vmatmul.f32.gmra.mxu0 %v2751
      %v3273 = vpop.f32.mrf.mxu0
      %v3274 = vadd.f32 0.0, %v3273
      %3275 = vmatmul.f32.gmra.mxu0 %v2753
      %v3276 = vpop.f32.mrf.mxu0
      %v3277 = vadd.f32 0.0, %v3276
      %3278 = vmatmul.f32.gmra.mxu0 %v3164
      %v3279 = vpop.f32.mrf.mxu0
      %v3280 = vadd.f32 0.0, %v3279
      %3281 = vmatmul.f32.gmra.mxu0 %v3167
      %v3282 = vpop.f32.mrf.mxu0
      %v3283 = vadd.f32 0.0, %v3282
      %3284 = vdwg.mxu0
      %v3285 = vadd.f32 %v3131, %v3190
      %v3286 = vadd.f32 %v3132, %v3193
      %v3287 = vadd.f32 %v3133, %v3196
      %v3288 = vadd.f32 %v3134, %v3199
      %v3289 = vadd.f32 %v3135, %v3202
      %v3290 = vadd.f32 %v3136, %v3205
      %v3291 = vadd.f32 %v3137, %v3208
      %v3292 = vadd.f32 %v3138, %v3211
      %v3293 = vadd.f32 %v3139, %v3214
      %v3294 = vadd.f32 %v3140, %v3217
      %v3295 = vadd.f32 %v3141, %v3220
      %v3296 = vadd.f32 %v3142, %v3223
      %v3297 = vadd.f32 %v3143, %v3226
      %v3298 = vadd.f32 %v3144, %v3229
      %v3299 = vadd.f32 %v3145, %v3232
      %v3300 = vadd.f32 %v3146, %v3235
      %v3301 = vadd.f32 %v3147, %v3238
      %v3302 = vadd.f32 %v3148, %v3241
      %v3303 = vadd.f32 %v3149, %v3244
      %v3304 = vadd.f32 %v3150, %v3247
      %v3305 = vadd.f32 %v3151, %v3250
      %v3306 = vadd.f32 %v3152, %v3253
      %v3307 = vadd.f32 %v3153, %v3256
      %v3308 = vadd.f32 %v3154, %v3259
      %v3309 = vadd.f32 %v3155, %v3262
      %v3310 = vadd.f32 %v3156, %v3265
      %v3311 = vadd.f32 %v3157, %v3268
      %v3312 = vadd.f32 %v3158, %v3271
      %v3313 = vadd.f32 %v3159, %v3274
      %v3314 = vadd.f32 %v3160, %v3277
      %v3315 = vadd.f32 %v3161, %v3280
      %v3316 = vadd.f32 %v3162, %v3283
      %v3318 = vrot.slane %v2368, 1
      %v3319 = vrot.slane %v2369, 1
      %v3320 = vsel %vm511, %v3318, %v3319
      %v3321 = vrot.slane %v2370, 1
      %v3322 = vsel %vm511, %v3319, %v3321
      %v3323 = vsel %vm311, %v3320, 0
      %v3325 = vsel %vm311, %v3322, 0
      %v3328 = vsel %vm656, %v2378, 0
      %3330 = vmatpush.msra.mxu0 0.0
      %3331 = vmatpush.msra.mxu0 0.0
      %3332 = vmatpush.msra.mxu0 0.0
      %3333 = vmatpush.msra.mxu0 0.0
      %3334 = vmatpush.msra.mxu0 0.0
      %3335 = vmatpush.msra.mxu0 0.0
      %3336 = vmatpush.msra.mxu0 0.0
      %3337 = vmatpush.msra.mxu0 0.0
      %3338 = vmatpush.msra.mxu0 0.0
      %3339 = vmatpush.msra.mxu0 0.0
      %3340 = vmatpush.msra.mxu0 0.0
      %3341 = vmatpush.msra.mxu0 0.0
      %3342 = vmatpush.msra.mxu0 0.0
      %3343 = vmatpush.msra.mxu0 0.0
      %3344 = vmatpush.msra.mxu0 0.0
      %3345 = vmatpush.msra.mxu0 %v3328
      %3346 = vmatmul.f32.gmra.mxu0 %v2515
      %v3347 = vpop.f32.mrf.mxu0
      %v3348 = vadd.f32 0.0, %v3347
      %3349 = vmatmul.f32.gmra.mxu0 %v2517
      %v3350 = vpop.f32.mrf.mxu0
      %v3351 = vadd.f32 0.0, %v3350
      %3352 = vmatmul.f32.gmra.mxu0 %v2519
      %v3353 = vpop.f32.mrf.mxu0
      %v3354 = vadd.f32 0.0, %v3353
      %3355 = vmatmul.f32.gmra.mxu0 %v2521
      %v3356 = vpop.f32.mrf.mxu0
      %v3357 = vadd.f32 0.0, %v3356
      %3358 = vmatmul.f32.gmra.mxu0 %v2523
      %v3359 = vpop.f32.mrf.mxu0
      %v3360 = vadd.f32 0.0, %v3359
      %3361 = vmatmul.f32.gmra.mxu0 %v2525
      %v3362 = vpop.f32.mrf.mxu0
      %v3363 = vadd.f32 0.0, %v3362
      %3364 = vmatmul.f32.gmra.mxu0 %v2527
      %v3365 = vpop.f32.mrf.mxu0
      %v3366 = vadd.f32 0.0, %v3365
      %3367 = vmatmul.f32.gmra.mxu0 %v2529
      %v3368 = vpop.f32.mrf.mxu0
      %v3369 = vadd.f32 0.0, %v3368
      %3370 = vmatmul.f32.gmra.mxu0 %v2531
      %v3371 = vpop.f32.mrf.mxu0
      %v3372 = vadd.f32 0.0, %v3371
      %3373 = vmatmul.f32.gmra.mxu0 %v2533
      %v3374 = vpop.f32.mrf.mxu0
      %v3375 = vadd.f32 0.0, %v3374
      %3376 = vmatmul.f32.gmra.mxu0 %v2535
      %v3377 = vpop.f32.mrf.mxu0
      %v3378 = vadd.f32 0.0, %v3377
      %3379 = vmatmul.f32.gmra.mxu0 %v2537
      %v3380 = vpop.f32.mrf.mxu0
      %v3381 = vadd.f32 0.0, %v3380
      %3382 = vmatmul.f32.gmra.mxu0 %v2539
      %v3383 = vpop.f32.mrf.mxu0
      %v3384 = vadd.f32 0.0, %v3383
      %3385 = vmatmul.f32.gmra.mxu0 %v2541
      %v3386 = vpop.f32.mrf.mxu0
      %v3387 = vadd.f32 0.0, %v3386
      %3388 = vmatmul.f32.gmra.mxu0 %v2543
      %v3389 = vpop.f32.mrf.mxu0
      %v3390 = vadd.f32 0.0, %v3389
      %3391 = vmatmul.f32.gmra.mxu0 %v2545
      %v3392 = vpop.f32.mrf.mxu0
      %v3393 = vadd.f32 0.0, %v3392
      %3394 = vmatmul.f32.gmra.mxu0 %v2547
      %v3395 = vpop.f32.mrf.mxu0
      %v3396 = vadd.f32 0.0, %v3395
      %3397 = vmatmul.f32.gmra.mxu0 %v2549
      %v3398 = vpop.f32.mrf.mxu0
      %v3399 = vadd.f32 0.0, %v3398
      %3400 = vmatmul.f32.gmra.mxu0 %v2551
      %v3401 = vpop.f32.mrf.mxu0
      %v3402 = vadd.f32 0.0, %v3401
      %3403 = vmatmul.f32.gmra.mxu0 %v2553
      %v3404 = vpop.f32.mrf.mxu0
      %v3405 = vadd.f32 0.0, %v3404
      %3406 = vmatmul.f32.gmra.mxu0 %v2555
      %v3407 = vpop.f32.mrf.mxu0
      %v3408 = vadd.f32 0.0, %v3407
      %3409 = vmatmul.f32.gmra.mxu0 %v2557
      %v3410 = vpop.f32.mrf.mxu0
      %v3411 = vadd.f32 0.0, %v3410
      %3412 = vmatmul.f32.gmra.mxu0 %v2559
      %v3413 = vpop.f32.mrf.mxu0
      %v3414 = vadd.f32 0.0, %v3413
      %3415 = vmatmul.f32.gmra.mxu0 %v2561
      %v3416 = vpop.f32.mrf.mxu0
      %v3417 = vadd.f32 0.0, %v3416
      %3418 = vmatmul.f32.gmra.mxu0 %v2563
      %v3419 = vpop.f32.mrf.mxu0
      %v3420 = vadd.f32 0.0, %v3419
      %3421 = vmatmul.f32.gmra.mxu0 %v2565
      %v3422 = vpop.f32.mrf.mxu0
      %v3423 = vadd.f32 0.0, %v3422
      %3424 = vmatmul.f32.gmra.mxu0 %v2567
      %v3425 = vpop.f32.mrf.mxu0
      %v3426 = vadd.f32 0.0, %v3425
      %3427 = vmatmul.f32.gmra.mxu0 %v2569
      %v3428 = vpop.f32.mrf.mxu0
      %v3429 = vadd.f32 0.0, %v3428
      %3430 = vmatmul.f32.gmra.mxu0 %v2571
      %v3431 = vpop.f32.mrf.mxu0
      %v3432 = vadd.f32 0.0, %v3431
      %3433 = vmatmul.f32.gmra.mxu0 %v2573
      %v3434 = vpop.f32.mrf.mxu0
      %v3435 = vadd.f32 0.0, %v3434
      %3436 = vmatmul.f32.gmra.mxu0 %v3323
      %v3437 = vpop.f32.mrf.mxu0
      %v3438 = vadd.f32 0.0, %v3437
      %3439 = vmatmul.f32.gmra.mxu0 %v3325
      %v3440 = vpop.f32.mrf.mxu0
      %v3441 = vadd.f32 0.0, %v3440
      %3442 = vdwg.mxu0
      %v3443 = vadd.f32 %v3285, %v3348
      %v3444 = vadd.f32 %v3286, %v3351
      %v3445 = vadd.f32 %v3287, %v3354
      %v3446 = vadd.f32 %v3288, %v3357
      %v3447 = vadd.f32 %v3289, %v3360
      %v3448 = vadd.f32 %v3290, %v3363
      %v3449 = vadd.f32 %v3291, %v3366
      %v3450 = vadd.f32 %v3292, %v3369
      %v3451 = vadd.f32 %v3293, %v3372
      %v3452 = vadd.f32 %v3294, %v3375
      %v3453 = vadd.f32 %v3295, %v3378
      %v3454 = vadd.f32 %v3296, %v3381
      %v3455 = vadd.f32 %v3297, %v3384
      %v3456 = vadd.f32 %v3298, %v3387
      %v3457 = vadd.f32 %v3299, %v3390
      %v3458 = vadd.f32 %v3300, %v3393
      %v3459 = vadd.f32 %v3301, %v3396
      %v3460 = vadd.f32 %v3302, %v3399
      %v3461 = vadd.f32 %v3303, %v3402
      %v3462 = vadd.f32 %v3304, %v3405
      %v3463 = vadd.f32 %v3305, %v3408
      %v3464 = vadd.f32 %v3306, %v3411
      %v3465 = vadd.f32 %v3307, %v3414
      %v3466 = vadd.f32 %v3308, %v3417
      %v3467 = vadd.f32 %v3309, %v3420
      %v3468 = vadd.f32 %v3310, %v3423
      %v3469 = vadd.f32 %v3311, %v3426
      %v3470 = vadd.f32 %v3312, %v3429
      %v3471 = vadd.f32 %v3313, %v3432
      %v3472 = vadd.f32 %v3314, %v3435
      %v3473 = vadd.f32 %v3315, %v3438
      %v3474 = vadd.f32 %v3316, %v3441
      %v3475 = vrot.slane %v2368, 2
      %v3476 = vrot.slane %v2369, 2
      %v3477 = vsel %vm953, %v3475, %v3476
      %v3478 = vrot.slane %v2370, 2
      %v3479 = vsel %vm953, %v3476, %v3478
      %v3480 = vsel %vm311, %v3477, 0
      %v3482 = vsel %vm311, %v3479, 0
      %v3485 = vsel %vm656, %v2379, 0
      %3487 = vmatpush.msra.mxu0 0.0
      %3488 = vmatpush.msra.mxu0 0.0
      %3489 = vmatpush.msra.mxu0 0.0
      %3490 = vmatpush.msra.mxu0 0.0
      %3491 = vmatpush.msra.mxu0 0.0
      %3492 = vmatpush.msra.mxu0 0.0
      %3493 = vmatpush.msra.mxu0 0.0
      %3494 = vmatpush.msra.mxu0 0.0
      %3495 = vmatpush.msra.mxu0 0.0
      %3496 = vmatpush.msra.mxu0 0.0
      %3497 = vmatpush.msra.mxu0 0.0
      %3498 = vmatpush.msra.mxu0 0.0
      %3499 = vmatpush.msra.mxu0 0.0
      %3500 = vmatpush.msra.mxu0 0.0
      %3501 = vmatpush.msra.mxu0 0.0
      %3502 = vmatpush.msra.mxu0 %v3485
      %3503 = vmatmul.f32.gmra.mxu0 %v2955
      %v3504 = vpop.f32.mrf.mxu0
      %v3505 = vadd.f32 0.0, %v3504
      %3506 = vmatmul.f32.gmra.mxu0 %v2957
      %v3507 = vpop.f32.mrf.mxu0
      %v3508 = vadd.f32 0.0, %v3507
      %3509 = vmatmul.f32.gmra.mxu0 %v2959
      %v3510 = vpop.f32.mrf.mxu0
      %v3511 = vadd.f32 0.0, %v3510
      %3512 = vmatmul.f32.gmra.mxu0 %v2961
      %v3513 = vpop.f32.mrf.mxu0
      %v3514 = vadd.f32 0.0, %v3513
      %3515 = vmatmul.f32.gmra.mxu0 %v2963
      %v3516 = vpop.f32.mrf.mxu0
      %v3517 = vadd.f32 0.0, %v3516
      %3518 = vmatmul.f32.gmra.mxu0 %v2965
      %v3519 = vpop.f32.mrf.mxu0
      %v3520 = vadd.f32 0.0, %v3519
      %3521 = vmatmul.f32.gmra.mxu0 %v2967
      %v3522 = vpop.f32.mrf.mxu0
      %v3523 = vadd.f32 0.0, %v3522
      %3524 = vmatmul.f32.gmra.mxu0 %v2969
      %v3525 = vpop.f32.mrf.mxu0
      %v3526 = vadd.f32 0.0, %v3525
      %3527 = vmatmul.f32.gmra.mxu0 %v2971
      %v3528 = vpop.f32.mrf.mxu0
      %v3529 = vadd.f32 0.0, %v3528
      %3530 = vmatmul.f32.gmra.mxu0 %v2973
      %v3531 = vpop.f32.mrf.mxu0
      %v3532 = vadd.f32 0.0, %v3531
      %3533 = vmatmul.f32.gmra.mxu0 %v2975
      %v3534 = vpop.f32.mrf.mxu0
      %v3535 = vadd.f32 0.0, %v3534
      %3536 = vmatmul.f32.gmra.mxu0 %v2977
      %v3537 = vpop.f32.mrf.mxu0
      %v3538 = vadd.f32 0.0, %v3537
      %3539 = vmatmul.f32.gmra.mxu0 %v2979
      %v3540 = vpop.f32.mrf.mxu0
      %v3541 = vadd.f32 0.0, %v3540
      %3542 = vmatmul.f32.gmra.mxu0 %v2981
      %v3543 = vpop.f32.mrf.mxu0
      %v3544 = vadd.f32 0.0, %v3543
      %3545 = vmatmul.f32.gmra.mxu0 %v2983
      %v3546 = vpop.f32.mrf.mxu0
      %v3547 = vadd.f32 0.0, %v3546
      %3548 = vmatmul.f32.gmra.mxu0 %v2985
      %v3549 = vpop.f32.mrf.mxu0
      %v3550 = vadd.f32 0.0, %v3549
      %3551 = vmatmul.f32.gmra.mxu0 %v2987
      %v3552 = vpop.f32.mrf.mxu0
      %v3553 = vadd.f32 0.0, %v3552
      %3554 = vmatmul.f32.gmra.mxu0 %v2989
      %v3555 = vpop.f32.mrf.mxu0
      %v3556 = vadd.f32 0.0, %v3555
      %3557 = vmatmul.f32.gmra.mxu0 %v2991
      %v3558 = vpop.f32.mrf.mxu0
      %v3559 = vadd.f32 0.0, %v3558
      %3560 = vmatmul.f32.gmra.mxu0 %v2993
      %v3561 = vpop.f32.mrf.mxu0
      %v3562 = vadd.f32 0.0, %v3561
      %3563 = vmatmul.f32.gmra.mxu0 %v2995
      %v3564 = vpop.f32.mrf.mxu0
      %v3565 = vadd.f32 0.0, %v3564
      %3566 = vmatmul.f32.gmra.mxu0 %v2997
      %v3567 = vpop.f32.mrf.mxu0
      %v3568 = vadd.f32 0.0, %v3567
      %3569 = vmatmul.f32.gmra.mxu0 %v2999
      %v3570 = vpop.f32.mrf.mxu0
      %v3571 = vadd.f32 0.0, %v3570
      %3572 = vmatmul.f32.gmra.mxu0 %v3001
      %v3573 = vpop.f32.mrf.mxu0
      %v3574 = vadd.f32 0.0, %v3573
      %3575 = vmatmul.f32.gmra.mxu0 %v3003
      %v3576 = vpop.f32.mrf.mxu0
      %v3577 = vadd.f32 0.0, %v3576
      %3578 = vmatmul.f32.gmra.mxu0 %v3005
      %v3579 = vpop.f32.mrf.mxu0
      %v3580 = vadd.f32 0.0, %v3579
      %3581 = vmatmul.f32.gmra.mxu0 %v3007
      %v3582 = vpop.f32.mrf.mxu0
      %v3583 = vadd.f32 0.0, %v3582
      %3584 = vmatmul.f32.gmra.mxu0 %v3009
      %v3585 = vpop.f32.mrf.mxu0
      %v3586 = vadd.f32 0.0, %v3585
      %3587 = vmatmul.f32.gmra.mxu0 %v3011
      %v3588 = vpop.f32.mrf.mxu0
      %v3589 = vadd.f32 0.0, %v3588
      %3590 = vmatmul.f32.gmra.mxu0 %v3013
      %v3591 = vpop.f32.mrf.mxu0
      %v3592 = vadd.f32 0.0, %v3591
      %3593 = vmatmul.f32.gmra.mxu0 %v3480
      %v3594 = vpop.f32.mrf.mxu0
      %v3595 = vadd.f32 0.0, %v3594
      %3596 = vmatmul.f32.gmra.mxu0 %v3482
      %v3597 = vpop.f32.mrf.mxu0
      %v3598 = vadd.f32 0.0, %v3597
      %3599 = vdwg.mxu0
      %v3600 = vadd.f32 %v3443, %v3505
      %v3601 = vadd.f32 %v3444, %v3508
      %v3602 = vadd.f32 %v3445, %v3511
      %v3603 = vadd.f32 %v3446, %v3514
      %v3604 = vadd.f32 %v3447, %v3517
      %v3605 = vadd.f32 %v3448, %v3520
      %v3606 = vadd.f32 %v3449, %v3523
      %v3607 = vadd.f32 %v3450, %v3526
      %v3608 = vadd.f32 %v3451, %v3529
      %v3609 = vadd.f32 %v3452, %v3532
      %v3610 = vadd.f32 %v3453, %v3535
      %v3611 = vadd.f32 %v3454, %v3538
      %v3612 = vadd.f32 %v3455, %v3541
      %v3613 = vadd.f32 %v3456, %v3544
      %v3614 = vadd.f32 %v3457, %v3547
      %v3615 = vadd.f32 %v3458, %v3550
      %v3616 = vadd.f32 %v3459, %v3553
      %v3617 = vadd.f32 %v3460, %v3556
      %v3618 = vadd.f32 %v3461, %v3559
      %v3619 = vadd.f32 %v3462, %v3562
      %v3620 = vadd.f32 %v3463, %v3565
      %v3621 = vadd.f32 %v3464, %v3568
      %v3622 = vadd.f32 %v3465, %v3571
      %v3623 = vadd.f32 %v3466, %v3574
      %v3624 = vadd.f32 %v3467, %v3577
      %v3625 = vadd.f32 %v3468, %v3580
      %v3626 = vadd.f32 %v3469, %v3583
      %v3627 = vadd.f32 %v3470, %v3586
      %v3628 = vadd.f32 %v3471, %v3589
      %v3629 = vadd.f32 %v3472, %v3592
      %v3630 = vadd.f32 %v3473, %v3595
      %v3631 = vadd.f32 %v3474, %v3598
      %v3633 = vsel %vm311, %v2371, 0
      %v3636 = vsel %vm311, %v2372, 0
      %v3639 = vsel %vm656, %v2380, 0
      %3641 = vmatpush.msra.mxu0 0.0
      %3642 = vmatpush.msra.mxu0 0.0
      %3643 = vmatpush.msra.mxu0 0.0
      %3644 = vmatpush.msra.mxu0 0.0
      %3645 = vmatpush.msra.mxu0 0.0
      %3646 = vmatpush.msra.mxu0 0.0
      %3647 = vmatpush.msra.mxu0 0.0
      %3648 = vmatpush.msra.mxu0 0.0
      %3649 = vmatpush.msra.mxu0 0.0
      %3650 = vmatpush.msra.mxu0 0.0
      %3651 = vmatpush.msra.mxu0 0.0
      %3652 = vmatpush.msra.mxu0 0.0
      %3653 = vmatpush.msra.mxu0 0.0
      %3654 = vmatpush.msra.mxu0 0.0
      %3655 = vmatpush.msra.mxu0 0.0
      %3656 = vmatpush.msra.mxu0 %v3639
      %3657 = vmatmul.f32.gmra.mxu0 %v2699
      %v3658 = vpop.f32.mrf.mxu0
      %v3659 = vadd.f32 0.0, %v3658
      %3660 = vmatmul.f32.gmra.mxu0 %v2701
      %v3661 = vpop.f32.mrf.mxu0
      %v3662 = vadd.f32 0.0, %v3661
      %3663 = vmatmul.f32.gmra.mxu0 %v2703
      %v3664 = vpop.f32.mrf.mxu0
      %v3665 = vadd.f32 0.0, %v3664
      %3666 = vmatmul.f32.gmra.mxu0 %v2705
      %v3667 = vpop.f32.mrf.mxu0
      %v3668 = vadd.f32 0.0, %v3667
      %3669 = vmatmul.f32.gmra.mxu0 %v2707
      %v3670 = vpop.f32.mrf.mxu0
      %v3671 = vadd.f32 0.0, %v3670
      %3672 = vmatmul.f32.gmra.mxu0 %v2709
      %v3673 = vpop.f32.mrf.mxu0
      %v3674 = vadd.f32 0.0, %v3673
      %3675 = vmatmul.f32.gmra.mxu0 %v2711
      %v3676 = vpop.f32.mrf.mxu0
      %v3677 = vadd.f32 0.0, %v3676
      %3678 = vmatmul.f32.gmra.mxu0 %v2713
      %v3679 = vpop.f32.mrf.mxu0
      %v3680 = vadd.f32 0.0, %v3679
      %3681 = vmatmul.f32.gmra.mxu0 %v2715
      %v3682 = vpop.f32.mrf.mxu0
      %v3683 = vadd.f32 0.0, %v3682
      %3684 = vmatmul.f32.gmra.mxu0 %v2717
      %v3685 = vpop.f32.mrf.mxu0
      %v3686 = vadd.f32 0.0, %v3685
      %3687 = vmatmul.f32.gmra.mxu0 %v2719
      %v3688 = vpop.f32.mrf.mxu0
      %v3689 = vadd.f32 0.0, %v3688
      %3690 = vmatmul.f32.gmra.mxu0 %v2721
      %v3691 = vpop.f32.mrf.mxu0
      %v3692 = vadd.f32 0.0, %v3691
      %3693 = vmatmul.f32.gmra.mxu0 %v2723
      %v3694 = vpop.f32.mrf.mxu0
      %v3695 = vadd.f32 0.0, %v3694
      %3696 = vmatmul.f32.gmra.mxu0 %v2725
      %v3697 = vpop.f32.mrf.mxu0
      %v3698 = vadd.f32 0.0, %v3697
      %3699 = vmatmul.f32.gmra.mxu0 %v2727
      %v3700 = vpop.f32.mrf.mxu0
      %v3701 = vadd.f32 0.0, %v3700
      %3702 = vmatmul.f32.gmra.mxu0 %v2729
      %v3703 = vpop.f32.mrf.mxu0
      %v3704 = vadd.f32 0.0, %v3703
      %3705 = vmatmul.f32.gmra.mxu0 %v2731
      %v3706 = vpop.f32.mrf.mxu0
      %v3707 = vadd.f32 0.0, %v3706
      %3708 = vmatmul.f32.gmra.mxu0 %v2733
      %v3709 = vpop.f32.mrf.mxu0
      %v3710 = vadd.f32 0.0, %v3709
      %3711 = vmatmul.f32.gmra.mxu0 %v2735
      %v3712 = vpop.f32.mrf.mxu0
      %v3713 = vadd.f32 0.0, %v3712
      %3714 = vmatmul.f32.gmra.mxu0 %v2737
      %v3715 = vpop.f32.mrf.mxu0
      %v3716 = vadd.f32 0.0, %v3715
      %3717 = vmatmul.f32.gmra.mxu0 %v2739
      %v3718 = vpop.f32.mrf.mxu0
      %v3719 = vadd.f32 0.0, %v3718
      %3720 = vmatmul.f32.gmra.mxu0 %v2741
      %v3721 = vpop.f32.mrf.mxu0
      %v3722 = vadd.f32 0.0, %v3721
      %3723 = vmatmul.f32.gmra.mxu0 %v2743
      %v3724 = vpop.f32.mrf.mxu0
      %v3725 = vadd.f32 0.0, %v3724
      %3726 = vmatmul.f32.gmra.mxu0 %v2745
      %v3727 = vpop.f32.mrf.mxu0
      %v3728 = vadd.f32 0.0, %v3727
      %3729 = vmatmul.f32.gmra.mxu0 %v2747
      %v3730 = vpop.f32.mrf.mxu0
      %v3731 = vadd.f32 0.0, %v3730
      %3732 = vmatmul.f32.gmra.mxu0 %v2749
      %v3733 = vpop.f32.mrf.mxu0
      %v3734 = vadd.f32 0.0, %v3733
      %3735 = vmatmul.f32.gmra.mxu0 %v2751
      %v3736 = vpop.f32.mrf.mxu0
      %v3737 = vadd.f32 0.0, %v3736
      %3738 = vmatmul.f32.gmra.mxu0 %v2753
      %v3739 = vpop.f32.mrf.mxu0
      %v3740 = vadd.f32 0.0, %v3739
      %3741 = vmatmul.f32.gmra.mxu0 %v3164
      %v3742 = vpop.f32.mrf.mxu0
      %v3743 = vadd.f32 0.0, %v3742
      %3744 = vmatmul.f32.gmra.mxu0 %v3167
      %v3745 = vpop.f32.mrf.mxu0
      %v3746 = vadd.f32 0.0, %v3745
      %3747 = vmatmul.f32.gmra.mxu0 %v3633
      %v3748 = vpop.f32.mrf.mxu0
      %v3749 = vadd.f32 0.0, %v3748
      %3750 = vmatmul.f32.gmra.mxu0 %v3636
      %v3751 = vpop.f32.mrf.mxu0
      %v3752 = vadd.f32 0.0, %v3751
      %3753 = vdwg.mxu0
      %v3754 = vadd.f32 %v3600, %v3659
      %v3755 = vadd.f32 %v3601, %v3662
      %v3756 = vadd.f32 %v3602, %v3665
      %v3757 = vadd.f32 %v3603, %v3668
      %v3758 = vadd.f32 %v3604, %v3671
      %v3759 = vadd.f32 %v3605, %v3674
      %v3760 = vadd.f32 %v3606, %v3677
      %v3761 = vadd.f32 %v3607, %v3680
      %v3762 = vadd.f32 %v3608, %v3683
      %v3763 = vadd.f32 %v3609, %v3686
      %v3764 = vadd.f32 %v3610, %v3689
      %v3765 = vadd.f32 %v3611, %v3692
      %v3766 = vadd.f32 %v3612, %v3695
      %v3767 = vadd.f32 %v3613, %v3698
      %v3768 = vadd.f32 %v3614, %v3701
      %v3769 = vadd.f32 %v3615, %v3704
      %v3770 = vadd.f32 %v3616, %v3707
      %v3771 = vadd.f32 %v3617, %v3710
      %v3772 = vadd.f32 %v3618, %v3713
      %v3773 = vadd.f32 %v3619, %v3716
      %v3774 = vadd.f32 %v3620, %v3719
      %v3775 = vadd.f32 %v3621, %v3722
      %v3776 = vadd.f32 %v3622, %v3725
      %v3777 = vadd.f32 %v3623, %v3728
      %v3778 = vadd.f32 %v3624, %v3731
      %v3779 = vadd.f32 %v3625, %v3734
      %v3780 = vadd.f32 %v3626, %v3737
      %v3781 = vadd.f32 %v3627, %v3740
      %v3782 = vadd.f32 %v3628, %v3743
      %v3783 = vadd.f32 %v3629, %v3746
      %v3784 = vadd.f32 %v3630, %v3749
      %v3785 = vadd.f32 %v3631, %v3752
      %v3787 = vrot.slane %v2371, 1
      %v3788 = vrot.slane %v2372, 1
      %v3789 = vsel %vm511, %v3787, %v3788
      %v3790 = vrot.slane %v2373, 1
      %v3791 = vsel %vm511, %v3788, %v3790
      %v3792 = vsel %vm311, %v3789, 0
      %v3794 = vsel %vm311, %v3791, 0
      %v3797 = vsel %vm656, %v2381, 0
      %3799 = vmatpush.msra.mxu0 0.0
      %3800 = vmatpush.msra.mxu0 0.0
      %3801 = vmatpush.msra.mxu0 0.0
      %3802 = vmatpush.msra.mxu0 0.0
      %3803 = vmatpush.msra.mxu0 0.0
      %3804 = vmatpush.msra.mxu0 0.0
      %3805 = vmatpush.msra.mxu0 0.0
      %3806 = vmatpush.msra.mxu0 0.0
      %3807 = vmatpush.msra.mxu0 0.0
      %3808 = vmatpush.msra.mxu0 0.0
      %3809 = vmatpush.msra.mxu0 0.0
      %3810 = vmatpush.msra.mxu0 0.0
      %3811 = vmatpush.msra.mxu0 0.0
      %3812 = vmatpush.msra.mxu0 0.0
      %3813 = vmatpush.msra.mxu0 0.0
      %3814 = vmatpush.msra.mxu0 %v3797
      %3815 = vmatmul.f32.gmra.mxu0 %v2519
      %v3816 = vpop.f32.mrf.mxu0
      %v3817 = vadd.f32 0.0, %v3816
      %3818 = vmatmul.f32.gmra.mxu0 %v2521
      %v3819 = vpop.f32.mrf.mxu0
      %v3820 = vadd.f32 0.0, %v3819
      %3821 = vmatmul.f32.gmra.mxu0 %v2523
      %v3822 = vpop.f32.mrf.mxu0
      %v3823 = vadd.f32 0.0, %v3822
      %3824 = vmatmul.f32.gmra.mxu0 %v2525
      %v3825 = vpop.f32.mrf.mxu0
      %v3826 = vadd.f32 0.0, %v3825
      %3827 = vmatmul.f32.gmra.mxu0 %v2527
      %v3828 = vpop.f32.mrf.mxu0
      %v3829 = vadd.f32 0.0, %v3828
      %3830 = vmatmul.f32.gmra.mxu0 %v2529
      %v3831 = vpop.f32.mrf.mxu0
      %v3832 = vadd.f32 0.0, %v3831
      %3833 = vmatmul.f32.gmra.mxu0 %v2531
      %v3834 = vpop.f32.mrf.mxu0
      %v3835 = vadd.f32 0.0, %v3834
      %3836 = vmatmul.f32.gmra.mxu0 %v2533
      %v3837 = vpop.f32.mrf.mxu0
      %v3838 = vadd.f32 0.0, %v3837
      %3839 = vmatmul.f32.gmra.mxu0 %v2535
      %v3840 = vpop.f32.mrf.mxu0
      %v3841 = vadd.f32 0.0, %v3840
      %3842 = vmatmul.f32.gmra.mxu0 %v2537
      %v3843 = vpop.f32.mrf.mxu0
      %v3844 = vadd.f32 0.0, %v3843
      %3845 = vmatmul.f32.gmra.mxu0 %v2539
      %v3846 = vpop.f32.mrf.mxu0
      %v3847 = vadd.f32 0.0, %v3846
      %3848 = vmatmul.f32.gmra.mxu0 %v2541
      %v3849 = vpop.f32.mrf.mxu0
      %v3850 = vadd.f32 0.0, %v3849
      %3851 = vmatmul.f32.gmra.mxu0 %v2543
      %v3852 = vpop.f32.mrf.mxu0
      %v3853 = vadd.f32 0.0, %v3852
      %3854 = vmatmul.f32.gmra.mxu0 %v2545
      %v3855 = vpop.f32.mrf.mxu0
      %v3856 = vadd.f32 0.0, %v3855
      %3857 = vmatmul.f32.gmra.mxu0 %v2547
      %v3858 = vpop.f32.mrf.mxu0
      %v3859 = vadd.f32 0.0, %v3858
      %3860 = vmatmul.f32.gmra.mxu0 %v2549
      %v3861 = vpop.f32.mrf.mxu0
      %v3862 = vadd.f32 0.0, %v3861
      %3863 = vmatmul.f32.gmra.mxu0 %v2551
      %v3864 = vpop.f32.mrf.mxu0
      %v3865 = vadd.f32 0.0, %v3864
      %3866 = vmatmul.f32.gmra.mxu0 %v2553
      %v3867 = vpop.f32.mrf.mxu0
      %v3868 = vadd.f32 0.0, %v3867
      %3869 = vmatmul.f32.gmra.mxu0 %v2555
      %v3870 = vpop.f32.mrf.mxu0
      %v3871 = vadd.f32 0.0, %v3870
      %3872 = vmatmul.f32.gmra.mxu0 %v2557
      %v3873 = vpop.f32.mrf.mxu0
      %v3874 = vadd.f32 0.0, %v3873
      %3875 = vmatmul.f32.gmra.mxu0 %v2559
      %v3876 = vpop.f32.mrf.mxu0
      %v3877 = vadd.f32 0.0, %v3876
      %3878 = vmatmul.f32.gmra.mxu0 %v2561
      %v3879 = vpop.f32.mrf.mxu0
      %v3880 = vadd.f32 0.0, %v3879
      %3881 = vmatmul.f32.gmra.mxu0 %v2563
      %v3882 = vpop.f32.mrf.mxu0
      %v3883 = vadd.f32 0.0, %v3882
      %3884 = vmatmul.f32.gmra.mxu0 %v2565
      %v3885 = vpop.f32.mrf.mxu0
      %v3886 = vadd.f32 0.0, %v3885
      %3887 = vmatmul.f32.gmra.mxu0 %v2567
      %v3888 = vpop.f32.mrf.mxu0
      %v3889 = vadd.f32 0.0, %v3888
      %3890 = vmatmul.f32.gmra.mxu0 %v2569
      %v3891 = vpop.f32.mrf.mxu0
      %v3892 = vadd.f32 0.0, %v3891
      %3893 = vmatmul.f32.gmra.mxu0 %v2571
      %v3894 = vpop.f32.mrf.mxu0
      %v3895 = vadd.f32 0.0, %v3894
      %3896 = vmatmul.f32.gmra.mxu0 %v2573
      %v3897 = vpop.f32.mrf.mxu0
      %v3898 = vadd.f32 0.0, %v3897
      %3899 = vmatmul.f32.gmra.mxu0 %v3323
      %v3900 = vpop.f32.mrf.mxu0
      %v3901 = vadd.f32 0.0, %v3900
      %3902 = vmatmul.f32.gmra.mxu0 %v3325
      %v3903 = vpop.f32.mrf.mxu0
      %v3904 = vadd.f32 0.0, %v3903
      %3905 = vmatmul.f32.gmra.mxu0 %v3792
      %v3906 = vpop.f32.mrf.mxu0
      %v3907 = vadd.f32 0.0, %v3906
      %3908 = vmatmul.f32.gmra.mxu0 %v3794
      %v3909 = vpop.f32.mrf.mxu0
      %v3910 = vadd.f32 0.0, %v3909
      %3911 = vdwg.mxu0
      %v3912 = vadd.f32 %v3754, %v3817
      %v3913 = vadd.f32 %v3755, %v3820
      %v3914 = vadd.f32 %v3756, %v3823
      %v3915 = vadd.f32 %v3757, %v3826
      %v3916 = vadd.f32 %v3758, %v3829
      %v3917 = vadd.f32 %v3759, %v3832
      %v3918 = vadd.f32 %v3760, %v3835
      %v3919 = vadd.f32 %v3761, %v3838
      %v3920 = vadd.f32 %v3762, %v3841
      %v3921 = vadd.f32 %v3763, %v3844
      %v3922 = vadd.f32 %v3764, %v3847
      %v3923 = vadd.f32 %v3765, %v3850
      %v3924 = vadd.f32 %v3766, %v3853
      %v3925 = vadd.f32 %v3767, %v3856
      %v3926 = vadd.f32 %v3768, %v3859
      %v3927 = vadd.f32 %v3769, %v3862
      %v3928 = vadd.f32 %v3770, %v3865
      %v3929 = vadd.f32 %v3771, %v3868
      %v3930 = vadd.f32 %v3772, %v3871
      %v3931 = vadd.f32 %v3773, %v3874
      %v3932 = vadd.f32 %v3774, %v3877
      %v3933 = vadd.f32 %v3775, %v3880
      %v3934 = vadd.f32 %v3776, %v3883
      %v3935 = vadd.f32 %v3777, %v3886
      %v3936 = vadd.f32 %v3778, %v3889
      %v3937 = vadd.f32 %v3779, %v3892
      %v3938 = vadd.f32 %v3780, %v3895
      %v3939 = vadd.f32 %v3781, %v3898
      %v3940 = vadd.f32 %v3782, %v3901
      %v3941 = vadd.f32 %v3783, %v3904
      %v3942 = vadd.f32 %v3784, %v3907
      %v3943 = vadd.f32 %v3785, %v3910
      %v3944 = vrot.slane %v2371, 2
      %v3945 = vrot.slane %v2372, 2
      %v3946 = vsel %vm953, %v3944, %v3945
      %v3947 = vrot.slane %v2373, 2
      %v3948 = vsel %vm953, %v3945, %v3947
      %v3949 = vsel %vm311, %v3946, 0
      %v3951 = vsel %vm311, %v3948, 0
      %v3954 = vsel %vm656, %v2382, 0
      %3956 = vmatpush.msra.mxu0 0.0
      %3957 = vmatpush.msra.mxu0 0.0
      %3958 = vmatpush.msra.mxu0 0.0
      %3959 = vmatpush.msra.mxu0 0.0
      %3960 = vmatpush.msra.mxu0 0.0
      %3961 = vmatpush.msra.mxu0 0.0
      %3962 = vmatpush.msra.mxu0 0.0
      %3963 = vmatpush.msra.mxu0 0.0
      %3964 = vmatpush.msra.mxu0 0.0
      %3965 = vmatpush.msra.mxu0 0.0
      %3966 = vmatpush.msra.mxu0 0.0
      %3967 = vmatpush.msra.mxu0 0.0
      %3968 = vmatpush.msra.mxu0 0.0
      %3969 = vmatpush.msra.mxu0 0.0
      %3970 = vmatpush.msra.mxu0 0.0
      %3971 = vmatpush.msra.mxu0 %v3954
      %3972 = vmatmul.f32.gmra.mxu0 %v2959
      %v3973 = vpop.f32.mrf.mxu0
      %v3974 = vadd.f32 0.0, %v3973
      %3975 = vmatmul.f32.gmra.mxu0 %v2961
      %v3976 = vpop.f32.mrf.mxu0
      %v3977 = vadd.f32 0.0, %v3976
      %3978 = vmatmul.f32.gmra.mxu0 %v2963
      %v3979 = vpop.f32.mrf.mxu0
      %v3980 = vadd.f32 0.0, %v3979
      %3981 = vmatmul.f32.gmra.mxu0 %v2965
      %v3982 = vpop.f32.mrf.mxu0
      %v3983 = vadd.f32 0.0, %v3982
      %3984 = vmatmul.f32.gmra.mxu0 %v2967
      %v3985 = vpop.f32.mrf.mxu0
      %v3986 = vadd.f32 0.0, %v3985
      %3987 = vmatmul.f32.gmra.mxu0 %v2969
      %v3988 = vpop.f32.mrf.mxu0
      %v3989 = vadd.f32 0.0, %v3988
      %3990 = vmatmul.f32.gmra.mxu0 %v2971
      %v3991 = vpop.f32.mrf.mxu0
      %v3992 = vadd.f32 0.0, %v3991
      %3993 = vmatmul.f32.gmra.mxu0 %v2973
      %v3994 = vpop.f32.mrf.mxu0
      %v3995 = vadd.f32 0.0, %v3994
      %3996 = vmatmul.f32.gmra.mxu0 %v2975
      %v3997 = vpop.f32.mrf.mxu0
      %v3998 = vadd.f32 0.0, %v3997
      %3999 = vmatmul.f32.gmra.mxu0 %v2977
      %v4000 = vpop.f32.mrf.mxu0
      %v4001 = vadd.f32 0.0, %v4000
      %4002 = vmatmul.f32.gmra.mxu0 %v2979
      %v4003 = vpop.f32.mrf.mxu0
      %v4004 = vadd.f32 0.0, %v4003
      %4005 = vmatmul.f32.gmra.mxu0 %v2981
      %v4006 = vpop.f32.mrf.mxu0
      %v4007 = vadd.f32 0.0, %v4006
      %4008 = vmatmul.f32.gmra.mxu0 %v2983
      %v4009 = vpop.f32.mrf.mxu0
      %v4010 = vadd.f32 0.0, %v4009
      %4011 = vmatmul.f32.gmra.mxu0 %v2985
      %v4012 = vpop.f32.mrf.mxu0
      %v4013 = vadd.f32 0.0, %v4012
      %4014 = vmatmul.f32.gmra.mxu0 %v2987
      %v4015 = vpop.f32.mrf.mxu0
      %v4016 = vadd.f32 0.0, %v4015
      %4017 = vmatmul.f32.gmra.mxu0 %v2989
      %v4018 = vpop.f32.mrf.mxu0
      %v4019 = vadd.f32 0.0, %v4018
      %4020 = vmatmul.f32.gmra.mxu0 %v2991
      %v4021 = vpop.f32.mrf.mxu0
      %v4022 = vadd.f32 0.0, %v4021
      %4023 = vmatmul.f32.gmra.mxu0 %v2993
      %v4024 = vpop.f32.mrf.mxu0
      %v4025 = vadd.f32 0.0, %v4024
      %4026 = vmatmul.f32.gmra.mxu0 %v2995
      %v4027 = vpop.f32.mrf.mxu0
      %v4028 = vadd.f32 0.0, %v4027
      %4029 = vmatmul.f32.gmra.mxu0 %v2997
      %v4030 = vpop.f32.mrf.mxu0
      %v4031 = vadd.f32 0.0, %v4030
      %4032 = vmatmul.f32.gmra.mxu0 %v2999
      %v4033 = vpop.f32.mrf.mxu0
      %v4034 = vadd.f32 0.0, %v4033
      %4035 = vmatmul.f32.gmra.mxu0 %v3001
      %v4036 = vpop.f32.mrf.mxu0
      %v4037 = vadd.f32 0.0, %v4036
      %4038 = vmatmul.f32.gmra.mxu0 %v3003
      %v4039 = vpop.f32.mrf.mxu0
      %v4040 = vadd.f32 0.0, %v4039
      %4041 = vmatmul.f32.gmra.mxu0 %v3005
      %v4042 = vpop.f32.mrf.mxu0
      %v4043 = vadd.f32 0.0, %v4042
      %4044 = vmatmul.f32.gmra.mxu0 %v3007
      %v4045 = vpop.f32.mrf.mxu0
      %v4046 = vadd.f32 0.0, %v4045
      %4047 = vmatmul.f32.gmra.mxu0 %v3009
      %v4048 = vpop.f32.mrf.mxu0
      %v4049 = vadd.f32 0.0, %v4048
      %4050 = vmatmul.f32.gmra.mxu0 %v3011
      %v4051 = vpop.f32.mrf.mxu0
      %v4052 = vadd.f32 0.0, %v4051
      %4053 = vmatmul.f32.gmra.mxu0 %v3013
      %v4054 = vpop.f32.mrf.mxu0
      %v4055 = vadd.f32 0.0, %v4054
      %4056 = vmatmul.f32.gmra.mxu0 %v3480
      %v4057 = vpop.f32.mrf.mxu0
      %v4058 = vadd.f32 0.0, %v4057
      %4059 = vmatmul.f32.gmra.mxu0 %v3482
      %v4060 = vpop.f32.mrf.mxu0
      %v4061 = vadd.f32 0.0, %v4060
      %4062 = vmatmul.f32.gmra.mxu0 %v3949
      %v4063 = vpop.f32.mrf.mxu0
      %v4064 = vadd.f32 0.0, %v4063
      %4065 = vmatmul.f32.gmra.mxu0 %v3951
      %v4066 = vpop.f32.mrf.mxu0
      %v4067 = vadd.f32 0.0, %v4066
      %4068 = vdwg.mxu0
      %v4069 = vadd.f32 %v3912, %v3974
      %v4070 = vadd.f32 %v3913, %v3977
      %v4071 = vadd.f32 %v3914, %v3980
      %v4072 = vadd.f32 %v3915, %v3983
      %v4073 = vadd.f32 %v3916, %v3986
      %v4074 = vadd.f32 %v3917, %v3989
      %v4075 = vadd.f32 %v3918, %v3992
      %v4076 = vadd.f32 %v3919, %v3995
      %v4077 = vadd.f32 %v3920, %v3998
      %v4078 = vadd.f32 %v3921, %v4001
      %v4079 = vadd.f32 %v3922, %v4004
      %v4080 = vadd.f32 %v3923, %v4007
      %v4081 = vadd.f32 %v3924, %v4010
      %v4082 = vadd.f32 %v3925, %v4013
      %v4083 = vadd.f32 %v3926, %v4016
      %v4084 = vadd.f32 %v3927, %v4019
      %v4085 = vadd.f32 %v3928, %v4022
      %v4086 = vadd.f32 %v3929, %v4025
      %v4087 = vadd.f32 %v3930, %v4028
      %v4088 = vadd.f32 %v3931, %v4031
      %v4089 = vadd.f32 %v3932, %v4034
      %v4090 = vadd.f32 %v3933, %v4037
      %v4091 = vadd.f32 %v3934, %v4040
      %v4092 = vadd.f32 %v3935, %v4043
      %v4093 = vadd.f32 %v3936, %v4046
      %v4094 = vadd.f32 %v3937, %v4049
      %v4095 = vadd.f32 %v3938, %v4052
      %v4096 = vadd.f32 %v3939, %v4055
      %v4097 = vadd.f32 %v3940, %v4058
      %v4098 = vadd.f32 %v3941, %v4061
      %v4099 = vadd.f32 %v3942, %v4064
      %v4100 = vadd.f32 %v3943, %v4067
      %v4101 = vld [vmem:[%s5] sm:$0x1]
      %v4103 = vperm.slane %v4101, 0
      %v4105 = vmul.f32 %v4069, %v4103
      %v4106 = vmul.f32 %v4070, %v4103
      %v4107 = vmul.f32 %v4071, %v4103
      %v4108 = vmul.f32 %v4072, %v4103
      %v4109 = vmul.f32 %v4073, %v4103
      %v4110 = vmul.f32 %v4074, %v4103
      %v4111 = vmul.f32 %v4075, %v4103
      %v4112 = vmul.f32 %v4076, %v4103
      %v4113 = vmul.f32 %v4077, %v4103
      %v4114 = vmul.f32 %v4078, %v4103
      %v4115 = vmul.f32 %v4079, %v4103
      %v4116 = vmul.f32 %v4080, %v4103
      %v4117 = vmul.f32 %v4081, %v4103
      %v4118 = vmul.f32 %v4082, %v4103
      %v4119 = vmul.f32 %v4083, %v4103
      %v4120 = vmul.f32 %v4084, %v4103
      %v4121 = vmul.f32 %v4085, %v4103
      %v4122 = vmul.f32 %v4086, %v4103
      %v4123 = vmul.f32 %v4087, %v4103
      %v4124 = vmul.f32 %v4088, %v4103
      %v4125 = vmul.f32 %v4089, %v4103
      %v4126 = vmul.f32 %v4090, %v4103
      %v4127 = vmul.f32 %v4091, %v4103
      %v4128 = vmul.f32 %v4092, %v4103
      %v4129 = vmul.f32 %v4093, %v4103
      %v4130 = vmul.f32 %v4094, %v4103
      %v4131 = vmul.f32 %v4095, %v4103
      %v4132 = vmul.f32 %v4096, %v4103
      %v4133 = vmul.f32 %v4097, %v4103
      %v4134 = vmul.f32 %v4098, %v4103
      %v4135 = vmul.f32 %v4099, %v4103
      %v4136 = vmul.f32 %v4100, %v4103
      %v4137 = vld [vmem:[%s6] sm:$0x1]
      %v4139 = vperm.slane %v4137, 0
      %v4141 = vadd.f32 %v4105, %v4139
      %v4142 = vadd.f32 %v4106, %v4139
      %v4143 = vadd.f32 %v4107, %v4139
      %v4144 = vadd.f32 %v4108, %v4139
      %v4145 = vadd.f32 %v4109, %v4139
      %v4146 = vadd.f32 %v4110, %v4139
      %v4147 = vadd.f32 %v4111, %v4139
      %v4148 = vadd.f32 %v4112, %v4139
      %v4149 = vadd.f32 %v4113, %v4139
      %v4150 = vadd.f32 %v4114, %v4139
      %v4151 = vadd.f32 %v4115, %v4139
      %v4152 = vadd.f32 %v4116, %v4139
      %v4153 = vadd.f32 %v4117, %v4139
      %v4154 = vadd.f32 %v4118, %v4139
      %v4155 = vadd.f32 %v4119, %v4139
      %v4156 = vadd.f32 %v4120, %v4139
      %v4157 = vadd.f32 %v4121, %v4139
      %v4158 = vadd.f32 %v4122, %v4139
      %v4159 = vadd.f32 %v4123, %v4139
      %v4160 = vadd.f32 %v4124, %v4139
      %v4161 = vadd.f32 %v4125, %v4139
      %v4162 = vadd.f32 %v4126, %v4139
      %v4163 = vadd.f32 %v4127, %v4139
      %v4164 = vadd.f32 %v4128, %v4139
      %v4165 = vadd.f32 %v4129, %v4139
      %v4166 = vadd.f32 %v4130, %v4139
      %v4167 = vadd.f32 %v4131, %v4139
      %v4168 = vadd.f32 %v4132, %v4139
      %v4169 = vadd.f32 %v4133, %v4139
      %v4170 = vadd.f32 %v4134, %v4139
      %v4171 = vadd.f32 %v4135, %v4139
      %v4172 = vadd.f32 %v4136, %v4139
      %v4173 = vadd.f32 %v4141, %v279
      %v4174 = vadd.f32 %v4142, %v280
      %v4175 = vadd.f32 %v4143, %v281
      %v4176 = vadd.f32 %v4144, %v282
      %v4177 = vadd.f32 %v4145, %v283
      %v4178 = vadd.f32 %v4146, %v284
      %v4179 = vadd.f32 %v4147, %v285
      %v4180 = vadd.f32 %v4148, %v286
      %v4181 = vadd.f32 %v4149, %v287
      %v4182 = vadd.f32 %v4150, %v288
      %v4183 = vadd.f32 %v4151, %v289
      %v4184 = vadd.f32 %v4152, %v290
      %v4185 = vadd.f32 %v4153, %v291
      %v4186 = vadd.f32 %v4154, %v292
      %v4187 = vadd.f32 %v4155, %v293
      %v4188 = vadd.f32 %v4156, %v294
      %v4189 = vadd.f32 %v4157, %v295
      %v4190 = vadd.f32 %v4158, %v296
      %v4191 = vadd.f32 %v4159, %v297
      %v4192 = vadd.f32 %v4160, %v298
      %v4193 = vadd.f32 %v4161, %v299
      %v4194 = vadd.f32 %v4162, %v300
      %v4195 = vadd.f32 %v4163, %v301
      %v4196 = vadd.f32 %v4164, %v302
      %v4197 = vadd.f32 %v4165, %v303
      %v4198 = vadd.f32 %v4166, %v304
      %v4199 = vadd.f32 %v4167, %v305
      %v4200 = vadd.f32 %v4168, %v306
      %v4201 = vadd.f32 %v4169, %v307
      %v4202 = vadd.f32 %v4170, %v308
      %v4203 = vadd.f32 %v4171, %v309
      %v4204 = vadd.f32 %v4172, %v310
      %4205 = vst.msk [vmem:[%s278] sm:$0xff] %vm311, %v4173
      %4206 = vst.msk [vmem:[%s278 + $0x8] sm:$0xff] %vm311, %v4174
      %4207 = vst.msk [vmem:[%s278 + $0x10] sm:$0xff] %vm311, %v4175
      %4208 = vst.msk [vmem:[%s278 + $0x18] sm:$0xff] %vm311, %v4176
      %4209 = vst.msk [vmem:[%s278 + $0x20] sm:$0xff] %vm311, %v4177
      %4210 = vst.msk [vmem:[%s278 + $0x28] sm:$0xff] %vm311, %v4178
      %4211 = vst.msk [vmem:[%s278 + $0x30] sm:$0xff] %vm311, %v4179
      %4212 = vst.msk [vmem:[%s278 + $0x38] sm:$0xff] %vm311, %v4180
      %4213 = vst.msk [vmem:[%s278 + $0x40] sm:$0xff] %vm311, %v4181
      %4214 = vst.msk [vmem:[%s278 + $0x48] sm:$0xff] %vm311, %v4182
      %4215 = vst.msk [vmem:[%s278 + $0x50] sm:$0xff] %vm311, %v4183
      %4216 = vst.msk [vmem:[%s278 + $0x58] sm:$0xff] %vm311, %v4184
      %4217 = vst.msk [vmem:[%s278 + $0x60] sm:$0xff] %vm311, %v4185
      %4218 = vst.msk [vmem:[%s278 + $0x68] sm:$0xff] %vm311, %v4186
      %4219 = vst.msk [vmem:[%s278 + $0x70] sm:$0xff] %vm311, %v4187
      %4220 = vst.msk [vmem:[%s278 + $0x78] sm:$0xff] %vm311, %v4188
      %4221 = vst.msk [vmem:[%s278 + $0x80] sm:$0xff] %vm311, %v4189
      %4222 = vst.msk [vmem:[%s278 + $0x88] sm:$0xff] %vm311, %v4190
      %4223 = vst.msk [vmem:[%s278 + $0x90] sm:$0xff] %vm311, %v4191
      %4224 = vst.msk [vmem:[%s278 + $0x98] sm:$0xff] %vm311, %v4192
      %4225 = vst.msk [vmem:[%s278 + $0xa0] sm:$0xff] %vm311, %v4193
      %4226 = vst.msk [vmem:[%s278 + $0xa8] sm:$0xff] %vm311, %v4194
      %4227 = vst.msk [vmem:[%s278 + $0xb0] sm:$0xff] %vm311, %v4195
      %4228 = vst.msk [vmem:[%s278 + $0xb8] sm:$0xff] %vm311, %v4196
      %4229 = vst.msk [vmem:[%s278 + $0xc0] sm:$0xff] %vm311, %v4197
      %4230 = vst.msk [vmem:[%s278 + $0xc8] sm:$0xff] %vm311, %v4198
      %4231 = vst.msk [vmem:[%s278 + $0xd0] sm:$0xff] %vm311, %v4199
      %4232 = vst.msk [vmem:[%s278 + $0xd8] sm:$0xff] %vm311, %v4200
      %4233 = vst.msk [vmem:[%s278 + $0xe0] sm:$0xff] %vm311, %v4201
      %4234 = vst.msk [vmem:[%s278 + $0xe8] sm:$0xff] %vm311, %v4202
      %4235 = vst.msk [vmem:[%s278 + $0xf0] sm:$0xff] %vm311, %v4203
      %4236 = vst.msk [vmem:[%s278 + $0xf8] sm:$0xff] %vm311, %v4204
      %p4237 = scmp.lt.s32.totalorder %s18, 1
      %s4238 = scalar_select %p4237, %s18, 1
      %s4239 = smul.addr %s4238, 32
      %s4240 = smul.addr %s4239, 8
      %s4241 = scalar_lea.vmem %s7, %s4240
      // Predicated region
      $region49: #{tpu_custom_call.1} parent=47 // pred_check
        %p4242 = pneg %p188
      $region50: #{tpu_custom_call.1} parent=47 // pred_check_branch
        %4244 = sbr.rel (%p4242) target = $region52
      $region51: #{tpu_custom_call.1} parent=47 // pred_region
        _
      $region52: #{tpu_custom_call.1} parent=47 // pred_fallthru
        _
    $region48: #{tpu_custom_call.1} parent=5 // pred_fallthru
      _
    %p4245 = scmp.le.s32.totalorder 2, %s13
    // Predicated region
    $region53: #{tpu_custom_call.1} parent=5 // pred_check
      %p4246 = pneg %p4245
    $region54: #{tpu_custom_call.1} parent=5 // pred_check_branch
      %4248 = sbr.rel (%p4246) target = $region56
    $region55: #{tpu_custom_call.1} parent=5 // pred_region
      %s4249 = ssub.s32 %s13, 2
      // Predicated region
      $region57: #{tpu_custom_call.1} parent=55 // pred_check
        %p4250 = pneg %p194
      $region58: #{tpu_custom_call.1} parent=55 // pred_check_branch
        %4252 = sbr.rel (%p4250) target = $region60
      $region59: #{tpu_custom_call.1} parent=55 // pred_region
        %p4253 = scmp.lt.s32.totalorder %s19, 1
        %s4254 = scalar_select %p4253, %s19, 1
        %s4255 = smul.addr %s4254, 32
        %s4256 = smul.addr %s4255, 8
        %s4257 = scalar_lea.vmem %s7, %s4256
      $region60: #{tpu_custom_call.1} parent=55 // pred_fallthru
        _
    $region56: #{tpu_custom_call.1} parent=5 // pred_fallthru
      _
  $region6: #{tpu_custom_call.1} parent=0 // loop_footer
    %s17 = sadd.s32 1, %s13
  $region7: #{tpu_custom_call.1} parent=0 // loop_footer_branch
    %12 = sbr.rel target = $region3
  $region8: #{tpu_custom_call.1} parent=0 // loop_exit
    _

</llo_original>
